<compile_context>
chip_gen: v7x
topology: tpu7x:2x2x1
jax: 0.10.0
libtpu: 0.0.40
codegen_flags: <defaults>
</compile_context>

<pallas_src>
import jax
import jax.numpy as jnp
import numpy as np
from jax.experimental import pallas as pl
from jax.experimental.pallas import tpu as pltpu  # noqa: F401  (kept for TPU backend)


def _round_up(x, m):
    return (x + m - 1) // m * m


# Spatial positions of the 2x2x2 volume, d-major (matches the row-major
# flatten of a channels-last (B, D, H, W, C) tensor).
_POS = [(d, h, w) for d in range(2) for h in range(2) for w in range(2)]


# ------------------------- weight pre-layout (once) -------------------------

def _conv3x3_as_big_matmul(w):
    """(Cout, Cin, 3, 3, 3) conv weight -> (8*Cin, 8*Cout) block matrix.

    Valid for a 2x2x2 volume with padding=1: output position (do,ho,wo) reads
    input position (di,hi,wi) through kernel tap (di-do+1, hi-ho+1, wi-wo+1),
    and every (input, output) position pair is in range.
    """
    rows = []
    for (di, hi, wi) in _POS:                      # input-position row blocks
        cols = []
        for (do, ho, wo) in _POS:                  # output-position col blocks
            tap = w[:, :, di - do + 1, hi - ho + 1, wi - wo + 1]  # (Cout, Cin)
            cols.append(jnp.transpose(tap))                       # (Cin, Cout)
        rows.append(jnp.concatenate(cols, axis=1))
    return jnp.concatenate(rows, axis=0)


def _depthwise_tap_table(w):
    """(C, 1, 3, 3, 3) depthwise weight -> (64, C) table, row = po*8 + pi."""
    rows = []
    for (do, ho, wo) in _POS:
        for (di, hi, wi) in _POS:
            rows.append(w[:, 0, di - do + 1, hi - ho + 1, wi - wo + 1])  # (C,)
    return jnp.stack(rows, axis=0)


def prepare_params(p, num_classes):
    """PyTorch-layout params -> kernel-ready layouts (computed once)."""
    ncp = _round_up(num_classes, 128)
    fc_wt = jnp.transpose(p["fc_w"])                              # (128, nc)
    return {
        "w1": _conv3x3_as_big_matmul(p["conv1_w"]).astype(jnp.bfloat16),
        "b1": jnp.tile(p["conv1_b"], 8).reshape(1, -1).astype(jnp.float32),
        "w2": _conv3x3_as_big_matmul(p["conv2_w"]).astype(jnp.bfloat16),
        "b2": jnp.tile(p["conv2_b"], 8).reshape(1, -1).astype(jnp.float32),
        "wdw": _depthwise_tap_table(p["conv3dw_w"]).astype(jnp.float32),
        "bdw": p["conv3dw_b"].reshape(1, -1).astype(jnp.float32),
        "wpw": jnp.transpose(p["conv3pw_w"][:, :, 0, 0, 0]).astype(jnp.bfloat16),
        "bpw": p["conv3pw_b"].reshape(1, -1).astype(jnp.float32),
        "wfc": jnp.zeros((128, ncp), jnp.bfloat16)
                  .at[:, :num_classes].set(fc_wt.astype(jnp.bfloat16)),
        "bfc": jnp.zeros((1, ncp), jnp.float32)
                  .at[0, :num_classes].set(p["fc_b"]),
    }


# ------------------------------ fused kernel --------------------------------

def _fused_forward_kernel(x_ref, w1_ref, b1_ref, w2_ref, b2_ref,
                          wdw_ref, bdw_ref, wpw_ref, bpw_ref,
                          wfc_ref, bfc_ref, out_ref):
    f32 = jnp.float32
    bf16 = jnp.bfloat16
    c = 128

    # conv1 (Cin -> 64, k=3, pad=1) + ReLU, as one MXU matmul.
    y1 = jnp.dot(x_ref[...], w1_ref[...], preferred_element_type=f32)
    y1 = jnp.maximum(y1 + b1_ref[...], 0.0)                      # (Bp, 512)

    # conv2 (64 -> 128, k=3, pad=1) + ReLU, as one MXU matmul.
    y2 = jnp.dot(y1.astype(bf16), w2_ref[...], preferred_element_type=f32)
    y2 = jnp.maximum(y2 + b2_ref[...], 0.0)                      # (Bp, 1024)

    # conv3: depthwise 3x3x3 (VPU FMAs, f32) -> pointwise 1x1x1 (MXU) -> ReLU,
    # with the 2x2x2 max-pool fused as a running max over output positions.
    wdw = wdw_ref[...]                                           # (64, 128) f32
    bdw = bdw_ref[...]                                           # (1, 128)
    wpw = wpw_ref[...]                                           # (128, 128) bf16
    bpw = bpw_ref[...]                                           # (1, 128)
    pooled = None
    for po in range(8):
        r = po * 8
        acc = y2[:, 0:c] * wdw[r:r + 1, :]
        for pi in range(1, 8):
            acc = acc + y2[:, pi * c:(pi + 1) * c] * wdw[r + pi:r + pi + 1, :]
        acc = acc + bdw                                          # (Bp, 128)
        z = jnp.dot(acc.astype(bf16), wpw, preferred_element_type=f32)
        z = jnp.maximum(z + bpw, 0.0)
        pooled = z if po == 0 else jnp.maximum(pooled, z)

    # fc: (Bp, 128) @ (128, Ncp) + b   (Ncp is 128-lane padded)
    out = jnp.dot(pooled.astype(bf16), wfc_ref[...], preferred_element_type=f32)
    out_ref[...] = out + bfc_ref[...]


def forward(x_ncdhw, kp, *, num_classes):
    b, cin, d, h, w = x_ncdhw.shape
    assert (d, h, w) == (2, 2, 2), "Linear(128, nc) requires 2x2x2 spatial in"
    # channels-last, positions folded into the lane axis: (B, 8*Cin)
    x = jnp.transpose(x_ncdhw, (0, 2, 3, 4, 1)).reshape(b, 8 * cin)
    bp = _round_up(b, 8)
    x = jnp.pad(x, ((0, bp - b), (0, 0))).astype(jnp.bfloat16)
    ncp = kp["wfc"].shape[1]
    out = pl.pallas_call(
        _fused_forward_kernel,
        out_shape=jax.ShapeDtypeStruct((bp, ncp), jnp.float32),
    )(x, kp["w1"], kp["b1"], kp["w2"], kp["b2"],
      kp["wdw"], kp["bdw"], kp["wpw"], kp["bpw"], kp["wfc"], kp["bfc"])
    return out[:b, :num_classes]


# --------------------------- reference (pure JAX) ---------------------------

def _conv3d_ref(x, w, b, pad, groups=1):
    y = jax.lax.conv_general_dilated(
        x, w, window_strides=(1, 1, 1),
        padding=((pad, pad),) * 3,
        dimension_numbers=("NCDHW", "OIDHW", "NCDHW"),
        feature_group_count=groups,
        precision=jax.lax.Precision.HIGHEST)
    return y + b[None, :, None, None, None]


def reference_forward(x, p):
    y = jnp.maximum(_conv3d_ref(x, p["conv1_w"], p["conv1_b"], 1), 0.0)
    y = jnp.maximum(_conv3d_ref(y, p["conv2_w"], p["conv2_b"], 1), 0.0)
    y = _conv3d_ref(y, p["conv3dw_w"], p["conv3dw_b"], 1, groups=128)
    y = jnp.maximum(_conv3d_ref(y, p["conv3pw_w"], p["conv3pw_b"], 0), 0.0)
    y = jax.lax.reduce_window(y, -jnp.inf, jax.lax.max,
                              (1, 1, 2, 2, 2), (1, 1, 2, 2, 2), "VALID")
    y = y.reshape(y.shape[0], -1)
    return y @ p["fc_w"].T + p["fc_b"]


# --------------------------------- params -----------------------------------

def init_params(key, in_channels, num_classes):
    ks = jax.random.split(key, 10)

    def init(k, shape, fan_in):
        return (jax.random.normal(k, shape, jnp.float32)
                / np.sqrt(float(fan_in))).astype(jnp.float32)

    return {
        "conv1_w": init(ks[0], (64, in_channels, 3, 3, 3), in_channels * 27),
        "conv1_b": init(ks[1], (64,), in_channels * 27),
        "conv2_w": init(ks[2], (128, 64, 3, 3, 3), 64 * 27),
        "conv2_b": init(ks[3], (128,), 64 * 27),
        "conv3dw_w": init(ks[4], (128, 1, 3, 3, 3), 27),
        "conv3dw_b": init(ks[5], (128,), 27),
        "conv3pw_w": init(ks[6], (128, 128, 1, 1, 1), 128),
        "conv3pw_b": init(ks[7], (128,), 128),
        "fc_w": init(ks[8], (num_classes, 128), 128),
        "fc_b": init(ks[9], (num_classes,), 128),
    }


# ----------------------------------- main ------------------------------------

if __name__ == "__main__":
    key = jax.random.PRNGKey(0)
    k_x, k_p = jax.random.split(key)

    batch, in_channels, num_classes = 2, 4, 10
    x = jax.random.normal(k_x, (batch, in_channels, 2, 2, 2), jnp.float32)
    params = init_params(k_p, in_channels, num_classes)

    # Kernel-ready weight layouts are built ONCE, outside the hot forward path.
    kparams = prepare_params(params, num_classes)

    fwd = jax.jit(forward, static_argnames=("num_classes",))
    out = jax.block_until_ready(fwd(x, kparams, num_classes=num_classes))

    ref = jax.block_until_ready(reference_forward(x, params))
    np.testing.assert_allclose(np.asarray(out), np.asarray(ref),
                               rtol=5e-2, atol=5e-2)
    assert out.shape == (batch, num_classes)

    print("KERNEL_OK")
</pallas_src>

<mosaic_0001>
module attributes {stable_mosaic.version = 11 : i64} {
  func.func @_fused_forward_kernel(%arg0: memref<8x32xbf16, #tpu.memory_space<vmem>>, %arg1: memref<32x512xbf16, #tpu.memory_space<vmem>>, %arg2: memref<1x512xf32, #tpu.memory_space<vmem>>, %arg3: memref<512x1024xbf16, #tpu.memory_space<vmem>>, %arg4: memref<1x1024xf32, #tpu.memory_space<vmem>>, %arg5: memref<64x128xf32, #tpu.memory_space<vmem>>, %arg6: memref<1x128xf32, #tpu.memory_space<vmem>>, %arg7: memref<128x128xbf16, #tpu.memory_space<vmem>>, %arg8: memref<1x128xf32, #tpu.memory_space<vmem>>, %arg9: memref<128x128xbf16, #tpu.memory_space<vmem>>, %arg10: memref<1x128xf32, #tpu.memory_space<vmem>>, %arg11: memref<8x128xf32, #tpu.memory_space<vmem>>) attributes {dimension_semantics = [], scalar_prefetch = 0 : i64, scratch_operands = 0 : i64, tpu.core_type = #tpu.core_type<tc>} {
    %c0 = arith.constant 0 : index
    %c0_0 = arith.constant 0 : index
    %0 = vector.load %arg0[%c0, %c0_0] : memref<8x32xbf16, #tpu.memory_space<vmem>>, vector<8x32xbf16>
    %c0_1 = arith.constant 0 : index
    %c0_2 = arith.constant 0 : index
    %1 = vector.load %arg1[%c0_1, %c0_2] : memref<32x512xbf16, #tpu.memory_space<vmem>>, vector<32x512xbf16>
    %cst = arith.constant dense<0.000000e+00> : vector<8x512xf32>
    %2 = tpu.matmul %0, %1, %cst {dimension_numbers = #tpu.dot_dimension_numbers<[1], [0], [0], [1], [0, 0, 1, 1], [], []>} : vector<8x32xbf16>, vector<32x512xbf16>, vector<8x512xf32> -> vector<8x512xf32>
    %c0_3 = arith.constant 0 : index
    %c0_4 = arith.constant 0 : index
    %3 = vector.load %arg2[%c0_3, %c0_4] : memref<1x512xf32, #tpu.memory_space<vmem>>, vector<1x512xf32>
    %4 = vector.broadcast %3 : vector<1x512xf32> to vector<8x512xf32>
    %5 = arith.addf %2, %4 : vector<8x512xf32>
    %cst_5 = arith.constant 0.000000e+00 : f32
    %6 = vector.broadcast %cst_5 : f32 to vector<8x512xf32>
    %7 = arith.maximumf %5, %6 : vector<8x512xf32>
    %8 = arith.truncf %7 : vector<8x512xf32> to vector<8x512xbf16>
    %c0_6 = arith.constant 0 : index
    %c0_7 = arith.constant 0 : index
    %9 = vector.load %arg3[%c0_6, %c0_7] : memref<512x1024xbf16, #tpu.memory_space<vmem>>, vector<512x1024xbf16>
    %cst_8 = arith.constant dense<0.000000e+00> : vector<8x1024xf32>
    %10 = tpu.matmul %8, %9, %cst_8 {dimension_numbers = #tpu.dot_dimension_numbers<[1], [0], [0], [1], [0, 0, 1, 1], [], []>} : vector<8x512xbf16>, vector<512x1024xbf16>, vector<8x1024xf32> -> vector<8x1024xf32>
    %c0_9 = arith.constant 0 : index
    %c0_10 = arith.constant 0 : index
    %11 = vector.load %arg4[%c0_9, %c0_10] : memref<1x1024xf32, #tpu.memory_space<vmem>>, vector<1x1024xf32>
    %12 = vector.broadcast %11 : vector<1x1024xf32> to vector<8x1024xf32>
    %13 = arith.addf %10, %12 : vector<8x1024xf32>
    %cst_11 = arith.constant 0.000000e+00 : f32
    %14 = vector.broadcast %cst_11 : f32 to vector<8x1024xf32>
    %15 = arith.maximumf %13, %14 : vector<8x1024xf32>
    %c0_12 = arith.constant 0 : index
    %c0_13 = arith.constant 0 : index
    %16 = vector.load %arg5[%c0_12, %c0_13] : memref<64x128xf32, #tpu.memory_space<vmem>>, vector<64x128xf32>
    %c0_14 = arith.constant 0 : index
    %c0_15 = arith.constant 0 : index
    %17 = vector.load %arg6[%c0_14, %c0_15] : memref<1x128xf32, #tpu.memory_space<vmem>>, vector<1x128xf32>
    %c0_16 = arith.constant 0 : index
    %c0_17 = arith.constant 0 : index
    %18 = vector.load %arg7[%c0_16, %c0_17] : memref<128x128xbf16, #tpu.memory_space<vmem>>, vector<128x128xbf16>
    %c0_18 = arith.constant 0 : index
    %c0_19 = arith.constant 0 : index
    %19 = vector.load %arg8[%c0_18, %c0_19] : memref<1x128xf32, #tpu.memory_space<vmem>>, vector<1x128xf32>
    %20 = vector.extract_strided_slice %15 {offsets = [0, 0], sizes = [8, 128], strides = [1, 1]} : vector<8x1024xf32> to vector<8x128xf32>
    %21 = vector.extract_strided_slice %16 {offsets = [0, 0], sizes = [1, 128], strides = [1, 1]} : vector<64x128xf32> to vector<1x128xf32>
    %22 = vector.broadcast %21 : vector<1x128xf32> to vector<8x128xf32>
    %23 = arith.mulf %20, %22 : vector<8x128xf32>
    %24 = vector.extract_strided_slice %15 {offsets = [0, 128], sizes = [8, 128], strides = [1, 1]} : vector<8x1024xf32> to vector<8x128xf32>
    %25 = vector.extract_strided_slice %16 {offsets = [1, 0], sizes = [1, 128], strides = [1, 1]} : vector<64x128xf32> to vector<1x128xf32>
    %26 = vector.broadcast %25 : vector<1x128xf32> to vector<8x128xf32>
    %27 = arith.mulf %24, %26 : vector<8x128xf32>
    %28 = arith.addf %23, %27 : vector<8x128xf32>
    %29 = vector.extract_strided_slice %15 {offsets = [0, 256], sizes = [8, 128], strides = [1, 1]} : vector<8x1024xf32> to vector<8x128xf32>
    %30 = vector.extract_strided_slice %16 {offsets = [2, 0], sizes = [1, 128], strides = [1, 1]} : vector<64x128xf32> to vector<1x128xf32>
    %31 = vector.broadcast %30 : vector<1x128xf32> to vector<8x128xf32>
    %32 = arith.mulf %29, %31 : vector<8x128xf32>
    %33 = arith.addf %28, %32 : vector<8x128xf32>
    %34 = vector.extract_strided_slice %15 {offsets = [0, 384], sizes = [8, 128], strides = [1, 1]} : vector<8x1024xf32> to vector<8x128xf32>
    %35 = vector.extract_strided_slice %16 {offsets = [3, 0], sizes = [1, 128], strides = [1, 1]} : vector<64x128xf32> to vector<1x128xf32>
    %36 = vector.broadcast %35 : vector<1x128xf32> to vector<8x128xf32>
    %37 = arith.mulf %34, %36 : vector<8x128xf32>
    %38 = arith.addf %33, %37 : vector<8x128xf32>
    %39 = vector.extract_strided_slice %15 {offsets = [0, 512], sizes = [8, 128], strides = [1, 1]} : vector<8x1024xf32> to vector<8x128xf32>
    %40 = vector.extract_strided_slice %16 {offsets = [4, 0], sizes = [1, 128], strides = [1, 1]} : vector<64x128xf32> to vector<1x128xf32>
    %41 = vector.broadcast %40 : vector<1x128xf32> to vector<8x128xf32>
    %42 = arith.mulf %39, %41 : vector<8x128xf32>
    %43 = arith.addf %38, %42 : vector<8x128xf32>
    %44 = vector.extract_strided_slice %15 {offsets = [0, 640], sizes = [8, 128], strides = [1, 1]} : vector<8x1024xf32> to vector<8x128xf32>
    %45 = vector.extract_strided_slice %16 {offsets = [5, 0], sizes = [1, 128], strides = [1, 1]} : vector<64x128xf32> to vector<1x128xf32>
    %46 = vector.broadcast %45 : vector<1x128xf32> to vector<8x128xf32>
    %47 = arith.mulf %44, %46 : vector<8x128xf32>
    %48 = arith.addf %43, %47 : vector<8x128xf32>
    %49 = vector.extract_strided_slice %15 {offsets = [0, 768], sizes = [8, 128], strides = [1, 1]} : vector<8x1024xf32> to vector<8x128xf32>
    %50 = vector.extract_strided_slice %16 {offsets = [6, 0], sizes = [1, 128], strides = [1, 1]} : vector<64x128xf32> to vector<1x128xf32>
    %51 = vector.broadcast %50 : vector<1x128xf32> to vector<8x128xf32>
    %52 = arith.mulf %49, %51 : vector<8x128xf32>
    %53 = arith.addf %48, %52 : vector<8x128xf32>
    %54 = vector.extract_strided_slice %15 {offsets = [0, 896], sizes = [8, 128], strides = [1, 1]} : vector<8x1024xf32> to vector<8x128xf32>
    %55 = vector.extract_strided_slice %16 {offsets = [7, 0], sizes = [1, 128], strides = [1, 1]} : vector<64x128xf32> to vector<1x128xf32>
    %56 = vector.broadcast %55 : vector<1x128xf32> to vector<8x128xf32>
    %57 = arith.mulf %54, %56 : vector<8x128xf32>
    %58 = arith.addf %53, %57 : vector<8x128xf32>
    %59 = vector.broadcast %17 : vector<1x128xf32> to vector<8x128xf32>
    %60 = arith.addf %58, %59 : vector<8x128xf32>
    %61 = arith.truncf %60 : vector<8x128xf32> to vector<8x128xbf16>
    %cst_20 = arith.constant dense<0.000000e+00> : vector<8x128xf32>
    %62 = tpu.matmul %61, %18, %cst_20 {dimension_numbers = #tpu.dot_dimension_numbers<[1], [0], [0], [1], [0, 0, 1, 1], [], []>} : vector<8x128xbf16>, vector<128x128xbf16>, vector<8x128xf32> -> vector<8x128xf32>
    %63 = vector.broadcast %19 : vector<1x128xf32> to vector<8x128xf32>
    %64 = arith.addf %62, %63 : vector<8x128xf32>
    %cst_21 = arith.constant 0.000000e+00 : f32
    %65 = vector.broadcast %cst_21 : f32 to vector<8x128xf32>
    %66 = arith.maximumf %64, %65 : vector<8x128xf32>
    %67 = vector.extract_strided_slice %15 {offsets = [0, 0], sizes = [8, 128], strides = [1, 1]} : vector<8x1024xf32> to vector<8x128xf32>
    %68 = vector.extract_strided_slice %16 {offsets = [8, 0], sizes = [1, 128], strides = [1, 1]} : vector<64x128xf32> to vector<1x128xf32>
    %69 = vector.broadcast %68 : vector<1x128xf32> to vector<8x128xf32>
    %70 = arith.mulf %67, %69 : vector<8x128xf32>
    %71 = vector.extract_strided_slice %15 {offsets = [0, 128], sizes = [8, 128], strides = [1, 1]} : vector<8x1024xf32> to vector<8x128xf32>
    %72 = vector.extract_strided_slice %16 {offsets = [9, 0], sizes = [1, 128], strides = [1, 1]} : vector<64x128xf32> to vector<1x128xf32>
    %73 = vector.broadcast %72 : vector<1x128xf32> to vector<8x128xf32>
    %74 = arith.mulf %71, %73 : vector<8x128xf32>
    %75 = arith.addf %70, %74 : vector<8x128xf32>
    %76 = vector.extract_strided_slice %15 {offsets = [0, 256], sizes = [8, 128], strides = [1, 1]} : vector<8x1024xf32> to vector<8x128xf32>
    %77 = vector.extract_strided_slice %16 {offsets = [10, 0], sizes = [1, 128], strides = [1, 1]} : vector<64x128xf32> to vector<1x128xf32>
    %78 = vector.broadcast %77 : vector<1x128xf32> to vector<8x128xf32>
    %79 = arith.mulf %76, %78 : vector<8x128xf32>
    %80 = arith.addf %75, %79 : vector<8x128xf32>
    %81 = vector.extract_strided_slice %15 {offsets = [0, 384], sizes = [8, 128], strides = [1, 1]} : vector<8x1024xf32> to vector<8x128xf32>
    %82 = vector.extract_strided_slice %16 {offsets = [11, 0], sizes = [1, 128], strides = [1, 1]} : vector<64x128xf32> to vector<1x128xf32>
    %83 = vector.broadcast %82 : vector<1x128xf32> to vector<8x128xf32>
    %84 = arith.mulf %81, %83 : vector<8x128xf32>
    %85 = arith.addf %80, %84 : vector<8x128xf32>
    %86 = vector.extract_strided_slice %15 {offsets = [0, 512], sizes = [8, 128], strides = [1, 1]} : vector<8x1024xf32> to vector<8x128xf32>
    %87 = vector.extract_strided_slice %16 {offsets = [12, 0], sizes = [1, 128], strides = [1, 1]} : vector<64x128xf32> to vector<1x128xf32>
    %88 = vector.broadcast %87 : vector<1x128xf32> to vector<8x128xf32>
    %89 = arith.mulf %86, %88 : vector<8x128xf32>
    %90 = arith.addf %85, %89 : vector<8x128xf32>
    %91 = vector.extract_strided_slice %15 {offsets = [0, 640], sizes = [8, 128], strides = [1, 1]} : vector<8x1024xf32> to vector<8x128xf32>
    %92 = vector.extract_strided_slice %16 {offsets = [13, 0], sizes = [1, 128], strides = [1, 1]} : vector<64x128xf32> to vector<1x128xf32>
    %93 = vector.broadcast %92 : vector<1x128xf32> to vector<8x128xf32>
    %94 = arith.mulf %91, %93 : vector<8x128xf32>
    %95 = arith.addf %90, %94 : vector<8x128xf32>
    %96 = vector.extract_strided_slice %15 {offsets = [0, 768], sizes = [8, 128], strides = [1, 1]} : vector<8x1024xf32> to vector<8x128xf32>
    %97 = vector.extract_strided_slice %16 {offsets = [14, 0], sizes = [1, 128], strides = [1, 1]} : vector<64x128xf32> to vector<1x128xf32>
    %98 = vector.broadcast %97 : vector<1x128xf32> to vector<8x128xf32>
    %99 = arith.mulf %96, %98 : vector<8x128xf32>
    %100 = arith.addf %95, %99 : vector<8x128xf32>
    %101 = vector.extract_strided_slice %15 {offsets = [0, 896], sizes = [8, 128], strides = [1, 1]} : vector<8x1024xf32> to vector<8x128xf32>
    %102 = vector.extract_strided_slice %16 {offsets = [15, 0], sizes = [1, 128], strides = [1, 1]} : vector<64x128xf32> to vector<1x128xf32>
    %103 = vector.broadcast %102 : vector<1x128xf32> to vector<8x128xf32>
    %104 = arith.mulf %101, %103 : vector<8x128xf32>
    %105 = arith.addf %100, %104 : vector<8x128xf32>
    %106 = vector.broadcast %17 : vector<1x128xf32> to vector<8x128xf32>
    %107 = arith.addf %105, %106 : vector<8x128xf32>
    %108 = arith.truncf %107 : vector<8x128xf32> to vector<8x128xbf16>
    %cst_22 = arith.constant dense<0.000000e+00> : vector<8x128xf32>
    %109 = tpu.matmul %108, %18, %cst_22 {dimension_numbers = #tpu.dot_dimension_numbers<[1], [0], [0], [1], [0, 0, 1, 1], [], []>} : vector<8x128xbf16>, vector<128x128xbf16>, vector<8x128xf32> -> vector<8x128xf32>
    %110 = vector.broadcast %19 : vector<1x128xf32> to vector<8x128xf32>
    %111 = arith.addf %109, %110 : vector<8x128xf32>
    %cst_23 = arith.constant 0.000000e+00 : f32
    %112 = vector.broadcast %cst_23 : f32 to vector<8x128xf32>
    %113 = arith.maximumf %111, %112 : vector<8x128xf32>
    %114 = arith.maximumf %66, %113 : vector<8x128xf32>
    %115 = vector.extract_strided_slice %15 {offsets = [0, 0], sizes = [8, 128], strides = [1, 1]} : vector<8x1024xf32> to vector<8x128xf32>
    %116 = vector.extract_strided_slice %16 {offsets = [16, 0], sizes = [1, 128], strides = [1, 1]} : vector<64x128xf32> to vector<1x128xf32>
    %117 = vector.broadcast %116 : vector<1x128xf32> to vector<8x128xf32>
    %118 = arith.mulf %115, %117 : vector<8x128xf32>
    %119 = vector.extract_strided_slice %15 {offsets = [0, 128], sizes = [8, 128], strides = [1, 1]} : vector<8x1024xf32> to vector<8x128xf32>
    %120 = vector.extract_strided_slice %16 {offsets = [17, 0], sizes = [1, 128], strides = [1, 1]} : vector<64x128xf32> to vector<1x128xf32>
    %121 = vector.broadcast %120 : vector<1x128xf32> to vector<8x128xf32>
    %122 = arith.mulf %119, %121 : vector<8x128xf32>
    %123 = arith.addf %118, %122 : vector<8x128xf32>
    %124 = vector.extract_strided_slice %15 {offsets = [0, 256], sizes = [8, 128], strides = [1, 1]} : vector<8x1024xf32> to vector<8x128xf32>
    %125 = vector.extract_strided_slice %16 {offsets = [18, 0], sizes = [1, 128], strides = [1, 1]} : vector<64x128xf32> to vector<1x128xf32>
    %126 = vector.broadcast %125 : vector<1x128xf32> to vector<8x128xf32>
    %127 = arith.mulf %124, %126 : vector<8x128xf32>
    %128 = arith.addf %123, %127 : vector<8x128xf32>
    %129 = vector.extract_strided_slice %15 {offsets = [0, 384], sizes = [8, 128], strides = [1, 1]} : vector<8x1024xf32> to vector<8x128xf32>
    %130 = vector.extract_strided_slice %16 {offsets = [19, 0], sizes = [1, 128], strides = [1, 1]} : vector<64x128xf32> to vector<1x128xf32>
    %131 = vector.broadcast %130 : vector<1x128xf32> to vector<8x128xf32>
    %132 = arith.mulf %129, %131 : vector<8x128xf32>
    %133 = arith.addf %128, %132 : vector<8x128xf32>
    %134 = vector.extract_strided_slice %15 {offsets = [0, 512], sizes = [8, 128], strides = [1, 1]} : vector<8x1024xf32> to vector<8x128xf32>
    %135 = vector.extract_strided_slice %16 {offsets = [20, 0], sizes = [1, 128], strides = [1, 1]} : vector<64x128xf32> to vector<1x128xf32>
    %136 = vector.broadcast %135 : vector<1x128xf32> to vector<8x128xf32>
    %137 = arith.mulf %134, %136 : vector<8x128xf32>
    %138 = arith.addf %133, %137 : vector<8x128xf32>
    %139 = vector.extract_strided_slice %15 {offsets = [0, 640], sizes = [8, 128], strides = [1, 1]} : vector<8x1024xf32> to vector<8x128xf32>
    %140 = vector.extract_strided_slice %16 {offsets = [21, 0], sizes = [1, 128], strides = [1, 1]} : vector<64x128xf32> to vector<1x128xf32>
    %141 = vector.broadcast %140 : vector<1x128xf32> to vector<8x128xf32>
    %142 = arith.mulf %139, %141 : vector<8x128xf32>
    %143 = arith.addf %138, %142 : vector<8x128xf32>
    %144 = vector.extract_strided_slice %15 {offsets = [0, 768], sizes = [8, 128], strides = [1, 1]} : vector<8x1024xf32> to vector<8x128xf32>
    %145 = vector.extract_strided_slice %16 {offsets = [22, 0], sizes = [1, 128], strides = [1, 1]} : vector<64x128xf32> to vector<1x128xf32>
    %146 = vector.broadcast %145 : vector<1x128xf32> to vector<8x128xf32>
    %147 = arith.mulf %144, %146 : vector<8x128xf32>
    %148 = arith.addf %143, %147 : vector<8x128xf32>
    %149 = vector.extract_strided_slice %15 {offsets = [0, 896], sizes = [8, 128], strides = [1, 1]} : vector<8x1024xf32> to vector<8x128xf32>
    %150 = vector.extract_strided_slice %16 {offsets = [23, 0], sizes = [1, 128], strides = [1, 1]} : vector<64x128xf32> to vector<1x128xf32>
    %151 = vector.broadcast %150 : vector<1x128xf32> to vector<8x128xf32>
    %152 = arith.mulf %149, %151 : vector<8x128xf32>
    %153 = arith.addf %148, %152 : vector<8x128xf32>
    %154 = vector.broadcast %17 : vector<1x128xf32> to vector<8x128xf32>
    %155 = arith.addf %153, %154 : vector<8x128xf32>
    %156 = arith.truncf %155 : vector<8x128xf32> to vector<8x128xbf16>
    %cst_24 = arith.constant dense<0.000000e+00> : vector<8x128xf32>
    %157 = tpu.matmul %156, %18, %cst_24 {dimension_numbers = #tpu.dot_dimension_numbers<[1], [0], [0], [1], [0, 0, 1, 1], [], []>} : vector<8x128xbf16>, vector<128x128xbf16>, vector<8x128xf32> -> vector<8x128xf32>
    %158 = vector.broadcast %19 : vector<1x128xf32> to vector<8x128xf32>
    %159 = arith.addf %157, %158 : vector<8x128xf32>
    %cst_25 = arith.constant 0.000000e+00 : f32
    %160 = vector.broadcast %cst_25 : f32 to vector<8x128xf32>
    %161 = arith.maximumf %159, %160 : vector<8x128xf32>
    %162 = arith.maximumf %114, %161 : vector<8x128xf32>
    %163 = vector.extract_strided_slice %15 {offsets = [0, 0], sizes = [8, 128], strides = [1, 1]} : vector<8x1024xf32> to vector<8x128xf32>
    %164 = vector.extract_strided_slice %16 {offsets = [24, 0], sizes = [1, 128], strides = [1, 1]} : vector<64x128xf32> to vector<1x128xf32>
    %165 = vector.broadcast %164 : vector<1x128xf32> to vector<8x128xf32>
    %166 = arith.mulf %163, %165 : vector<8x128xf32>
    %167 = vector.extract_strided_slice %15 {offsets = [0, 128], sizes = [8, 128], strides = [1, 1]} : vector<8x1024xf32> to vector<8x128xf32>
    %168 = vector.extract_strided_slice %16 {offsets = [25, 0], sizes = [1, 128], strides = [1, 1]} : vector<64x128xf32> to vector<1x128xf32>
    %169 = vector.broadcast %168 : vector<1x128xf32> to vector<8x128xf32>
    %170 = arith.mulf %167, %169 : vector<8x128xf32>
    %171 = arith.addf %166, %170 : vector<8x128xf32>
    %172 = vector.extract_strided_slice %15 {offsets = [0, 256], sizes = [8, 128], strides = [1, 1]} : vector<8x1024xf32> to vector<8x128xf32>
    %173 = vector.extract_strided_slice %16 {offsets = [26, 0], sizes = [1, 128], strides = [1, 1]} : vector<64x128xf32> to vector<1x128xf32>
    %174 = vector.broadcast %173 : vector<1x128xf32> to vector<8x128xf32>
    %175 = arith.mulf %172, %174 : vector<8x128xf32>
    %176 = arith.addf %171, %175 : vector<8x128xf32>
    %177 = vector.extract_strided_slice %15 {offsets = [0, 384], sizes = [8, 128], strides = [1, 1]} : vector<8x1024xf32> to vector<8x128xf32>
    %178 = vector.extract_strided_slice %16 {offsets = [27, 0], sizes = [1, 128], strides = [1, 1]} : vector<64x128xf32> to vector<1x128xf32>
    %179 = vector.broadcast %178 : vector<1x128xf32> to vector<8x128xf32>
    %180 = arith.mulf %177, %179 : vector<8x128xf32>
    %181 = arith.addf %176, %180 : vector<8x128xf32>
    %182 = vector.extract_strided_slice %15 {offsets = [0, 512], sizes = [8, 128], strides = [1, 1]} : vector<8x1024xf32> to vector<8x128xf32>
    %183 = vector.extract_strided_slice %16 {offsets = [28, 0], sizes = [1, 128], strides = [1, 1]} : vector<64x128xf32> to vector<1x128xf32>
    %184 = vector.broadcast %183 : vector<1x128xf32> to vector<8x128xf32>
    %185 = arith.mulf %182, %184 : vector<8x128xf32>
    %186 = arith.addf %181, %185 : vector<8x128xf32>
    %187 = vector.extract_strided_slice %15 {offsets = [0, 640], sizes = [8, 128], strides = [1, 1]} : vector<8x1024xf32> to vector<8x128xf32>
    %188 = vector.extract_strided_slice %16 {offsets = [29, 0], sizes = [1, 128], strides = [1, 1]} : vector<64x128xf32> to vector<1x128xf32>
    %189 = vector.broadcast %188 : vector<1x128xf32> to vector<8x128xf32>
    %190 = arith.mulf %187, %189 : vector<8x128xf32>
    %191 = arith.addf %186, %190 : vector<8x128xf32>
    %192 = vector.extract_strided_slice %15 {offsets = [0, 768], sizes = [8, 128], strides = [1, 1]} : vector<8x1024xf32> to vector<8x128xf32>
    %193 = vector.extract_strided_slice %16 {offsets = [30, 0], sizes = [1, 128], strides = [1, 1]} : vector<64x128xf32> to vector<1x128xf32>
    %194 = vector.broadcast %193 : vector<1x128xf32> to vector<8x128xf32>
    %195 = arith.mulf %192, %194 : vector<8x128xf32>
    %196 = arith.addf %191, %195 : vector<8x128xf32>
    %197 = vector.extract_strided_slice %15 {offsets = [0, 896], sizes = [8, 128], strides = [1, 1]} : vector<8x1024xf32> to vector<8x128xf32>
    %198 = vector.extract_strided_slice %16 {offsets = [31, 0], sizes = [1, 128], strides = [1, 1]} : vector<64x128xf32> to vector<1x128xf32>
    %199 = vector.broadcast %198 : vector<1x128xf32> to vector<8x128xf32>
    %200 = arith.mulf %197, %199 : vector<8x128xf32>
    %201 = arith.addf %196, %200 : vector<8x128xf32>
    %202 = vector.broadcast %17 : vector<1x128xf32> to vector<8x128xf32>
    %203 = arith.addf %201, %202 : vector<8x128xf32>
    %204 = arith.truncf %203 : vector<8x128xf32> to vector<8x128xbf16>
    %cst_26 = arith.constant dense<0.000000e+00> : vector<8x128xf32>
    %205 = tpu.matmul %204, %18, %cst_26 {dimension_numbers = #tpu.dot_dimension_numbers<[1], [0], [0], [1], [0, 0, 1, 1], [], []>} : vector<8x128xbf16>, vector<128x128xbf16>, vector<8x128xf32> -> vector<8x128xf32>
    %206 = vector.broadcast %19 : vector<1x128xf32> to vector<8x128xf32>
    %207 = arith.addf %205, %206 : vector<8x128xf32>
    %cst_27 = arith.constant 0.000000e+00 : f32
    %208 = vector.broadcast %cst_27 : f32 to vector<8x128xf32>
    %209 = arith.maximumf %207, %208 : vector<8x128xf32>
    %210 = arith.maximumf %162, %209 : vector<8x128xf32>
    %211 = vector.extract_strided_slice %15 {offsets = [0, 0], sizes = [8, 128], strides = [1, 1]} : vector<8x1024xf32> to vector<8x128xf32>
    %212 = vector.extract_strided_slice %16 {offsets = [32, 0], sizes = [1, 128], strides = [1, 1]} : vector<64x128xf32> to vector<1x128xf32>
    %213 = vector.broadcast %212 : vector<1x128xf32> to vector<8x128xf32>
    %214 = arith.mulf %211, %213 : vector<8x128xf32>
    %215 = vector.extract_strided_slice %15 {offsets = [0, 128], sizes = [8, 128], strides = [1, 1]} : vector<8x1024xf32> to vector<8x128xf32>
    %216 = vector.extract_strided_slice %16 {offsets = [33, 0], sizes = [1, 128], strides = [1, 1]} : vector<64x128xf32> to vector<1x128xf32>
    %217 = vector.broadcast %216 : vector<1x128xf32> to vector<8x128xf32>
    %218 = arith.mulf %215, %217 : vector<8x128xf32>
    %219 = arith.addf %214, %218 : vector<8x128xf32>
    %220 = vector.extract_strided_slice %15 {offsets = [0, 256], sizes = [8, 128], strides = [1, 1]} : vector<8x1024xf32> to vector<8x128xf32>
    %221 = vector.extract_strided_slice %16 {offsets = [34, 0], sizes = [1, 128], strides = [1, 1]} : vector<64x128xf32> to vector<1x128xf32>
    %222 = vector.broadcast %221 : vector<1x128xf32> to vector<8x128xf32>
    %223 = arith.mulf %220, %222 : vector<8x128xf32>
    %224 = arith.addf %219, %223 : vector<8x128xf32>
    %225 = vector.extract_strided_slice %15 {offsets = [0, 384], sizes = [8, 128], strides = [1, 1]} : vector<8x1024xf32> to vector<8x128xf32>
    %226 = vector.extract_strided_slice %16 {offsets = [35, 0], sizes = [1, 128], strides = [1, 1]} : vector<64x128xf32> to vector<1x128xf32>
    %227 = vector.broadcast %226 : vector<1x128xf32> to vector<8x128xf32>
    %228 = arith.mulf %225, %227 : vector<8x128xf32>
    %229 = arith.addf %224, %228 : vector<8x128xf32>
    %230 = vector.extract_strided_slice %15 {offsets = [0, 512], sizes = [8, 128], strides = [1, 1]} : vector<8x1024xf32> to vector<8x128xf32>
    %231 = vector.extract_strided_slice %16 {offsets = [36, 0], sizes = [1, 128], strides = [1, 1]} : vector<64x128xf32> to vector<1x128xf32>
    %232 = vector.broadcast %231 : vector<1x128xf32> to vector<8x128xf32>
    %233 = arith.mulf %230, %232 : vector<8x128xf32>
    %234 = arith.addf %229, %233 : vector<8x128xf32>
    %235 = vector.extract_strided_slice %15 {offsets = [0, 640], sizes = [8, 128], strides = [1, 1]} : vector<8x1024xf32> to vector<8x128xf32>
    %236 = vector.extract_strided_slice %16 {offsets = [37, 0], sizes = [1, 128], strides = [1, 1]} : vector<64x128xf32> to vector<1x128xf32>
    %237 = vector.broadcast %236 : vector<1x128xf32> to vector<8x128xf32>
    %238 = arith.mulf %235, %237 : vector<8x128xf32>
    %239 = arith.addf %234, %238 : vector<8x128xf32>
    %240 = vector.extract_strided_slice %15 {offsets = [0, 768], sizes = [8, 128], strides = [1, 1]} : vector<8x1024xf32> to vector<8x128xf32>
    %241 = vector.extract_strided_slice %16 {offsets = [38, 0], sizes = [1, 128], strides = [1, 1]} : vector<64x128xf32> to vector<1x128xf32>
    %242 = vector.broadcast %241 : vector<1x128xf32> to vector<8x128xf32>
    %243 = arith.mulf %240, %242 : vector<8x128xf32>
    %244 = arith.addf %239, %243 : vector<8x128xf32>
    %245 = vector.extract_strided_slice %15 {offsets = [0, 896], sizes = [8, 128], strides = [1, 1]} : vector<8x1024xf32> to vector<8x128xf32>
    %246 = vector.extract_strided_slice %16 {offsets = [39, 0], sizes = [1, 128], strides = [1, 1]} : vector<64x128xf32> to vector<1x128xf32>
    %247 = vector.broadcast %246 : vector<1x128xf32> to vector<8x128xf32>
    %248 = arith.mulf %245, %247 : vector<8x128xf32>
    %249 = arith.addf %244, %248 : vector<8x128xf32>
    %250 = vector.broadcast %17 : vector<1x128xf32> to vector<8x128xf32>
    %251 = arith.addf %249, %250 : vector<8x128xf32>
    %252 = arith.truncf %251 : vector<8x128xf32> to vector<8x128xbf16>
    %cst_28 = arith.constant dense<0.000000e+00> : vector<8x128xf32>
    %253 = tpu.matmul %252, %18, %cst_28 {dimension_numbers = #tpu.dot_dimension_numbers<[1], [0], [0], [1], [0, 0, 1, 1], [], []>} : vector<8x128xbf16>, vector<128x128xbf16>, vector<8x128xf32> -> vector<8x128xf32>
    %254 = vector.broadcast %19 : vector<1x128xf32> to vector<8x128xf32>
    %255 = arith.addf %253, %254 : vector<8x128xf32>
    %cst_29 = arith.constant 0.000000e+00 : f32
    %256 = vector.broadcast %cst_29 : f32 to vector<8x128xf32>
    %257 = arith.maximumf %255, %256 : vector<8x128xf32>
    %258 = arith.maximumf %210, %257 : vector<8x128xf32>
    %259 = vector.extract_strided_slice %15 {offsets = [0, 0], sizes = [8, 128], strides = [1, 1]} : vector<8x1024xf32> to vector<8x128xf32>
    %260 = vector.extract_strided_slice %16 {offsets = [40, 0], sizes = [1, 128], strides = [1, 1]} : vector<64x128xf32> to vector<1x128xf32>
    %261 = vector.broadcast %260 : vector<1x128xf32> to vector<8x128xf32>
    %262 = arith.mulf %259, %261 : vector<8x128xf32>
    %263 = vector.extract_strided_slice %15 {offsets = [0, 128], sizes = [8, 128], strides = [1, 1]} : vector<8x1024xf32> to vector<8x128xf32>
    %264 = vector.extract_strided_slice %16 {offsets = [41, 0], sizes = [1, 128], strides = [1, 1]} : vector<64x128xf32> to vector<1x128xf32>
    %265 = vector.broadcast %264 : vector<1x128xf32> to vector<8x128xf32>
    %266 = arith.mulf %263, %265 : vector<8x128xf32>
    %267 = arith.addf %262, %266 : vector<8x128xf32>
    %268 = vector.extract_strided_slice %15 {offsets = [0, 256], sizes = [8, 128], strides = [1, 1]} : vector<8x1024xf32> to vector<8x128xf32>
    %269 = vector.extract_strided_slice %16 {offsets = [42, 0], sizes = [1, 128], strides = [1, 1]} : vector<64x128xf32> to vector<1x128xf32>
    %270 = vector.broadcast %269 : vector<1x128xf32> to vector<8x128xf32>
    %271 = arith.mulf %268, %270 : vector<8x128xf32>
    %272 = arith.addf %267, %271 : vector<8x128xf32>
    %273 = vector.extract_strided_slice %15 {offsets = [0, 384], sizes = [8, 128], strides = [1, 1]} : vector<8x1024xf32> to vector<8x128xf32>
    %274 = vector.extract_strided_slice %16 {offsets = [43, 0], sizes = [1, 128], strides = [1, 1]} : vector<64x128xf32> to vector<1x128xf32>
    %275 = vector.broadcast %274 : vector<1x128xf32> to vector<8x128xf32>
    %276 = arith.mulf %273, %275 : vector<8x128xf32>
    %277 = arith.addf %272, %276 : vector<8x128xf32>
    %278 = vector.extract_strided_slice %15 {offsets = [0, 512], sizes = [8, 128], strides = [1, 1]} : vector<8x1024xf32> to vector<8x128xf32>
    %279 = vector.extract_strided_slice %16 {offsets = [44, 0], sizes = [1, 128], strides = [1, 1]} : vector<64x128xf32> to vector<1x128xf32>
    %280 = vector.broadcast %279 : vector<1x128xf32> to vector<8x128xf32>
    %281 = arith.mulf %278, %280 : vector<8x128xf32>
    %282 = arith.addf %277, %281 : vector<8x128xf32>
    %283 = vector.extract_strided_slice %15 {offsets = [0, 640], sizes = [8, 128], strides = [1, 1]} : vector<8x1024xf32> to vector<8x128xf32>
    %284 = vector.extract_strided_slice %16 {offsets = [45, 0], sizes = [1, 128], strides = [1, 1]} : vector<64x128xf32> to vector<1x128xf32>
    %285 = vector.broadcast %284 : vector<1x128xf32> to vector<8x128xf32>
    %286 = arith.mulf %283, %285 : vector<8x128xf32>
    %287 = arith.addf %282, %286 : vector<8x128xf32>
    %288 = vector.extract_strided_slice %15 {offsets = [0, 768], sizes = [8, 128], strides = [1, 1]} : vector<8x1024xf32> to vector<8x128xf32>
    %289 = vector.extract_strided_slice %16 {offsets = [46, 0], sizes = [1, 128], strides = [1, 1]} : vector<64x128xf32> to vector<1x128xf32>
    %290 = vector.broadcast %289 : vector<1x128xf32> to vector<8x128xf32>
    %291 = arith.mulf %288, %290 : vector<8x128xf32>
    %292 = arith.addf %287, %291 : vector<8x128xf32>
    %293 = vector.extract_strided_slice %15 {offsets = [0, 896], sizes = [8, 128], strides = [1, 1]} : vector<8x1024xf32> to vector<8x128xf32>
    %294 = vector.extract_strided_slice %16 {offsets = [47, 0], sizes = [1, 128], strides = [1, 1]} : vector<64x128xf32> to vector<1x128xf32>
    %295 = vector.broadcast %294 : vector<1x128xf32> to vector<8x128xf32>
    %296 = arith.mulf %293, %295 : vector<8x128xf32>
    %297 = arith.addf %292, %296 : vector<8x128xf32>
    %298 = vector.broadcast %17 : vector<1x128xf32> to vector<8x128xf32>
    %299 = arith.addf %297, %298 : vector<8x128xf32>
    %300 = arith.truncf %299 : vector<8x128xf32> to vector<8x128xbf16>
    %cst_30 = arith.constant dense<0.000000e+00> : vector<8x128xf32>
    %301 = tpu.matmul %300, %18, %cst_30 {dimension_numbers = #tpu.dot_dimension_numbers<[1], [0], [0], [1], [0, 0, 1, 1], [], []>} : vector<8x128xbf16>, vector<128x128xbf16>, vector<8x128xf32> -> vector<8x128xf32>
    %302 = vector.broadcast %19 : vector<1x128xf32> to vector<8x128xf32>
    %303 = arith.addf %301, %302 : vector<8x128xf32>
    %cst_31 = arith.constant 0.000000e+00 : f32
    %304 = vector.broadcast %cst_31 : f32 to vector<8x128xf32>
    %305 = arith.maximumf %303, %304 : vector<8x128xf32>
    %306 = arith.maximumf %258, %305 : vector<8x128xf32>
    %307 = vector.extract_strided_slice %15 {offsets = [0, 0], sizes = [8, 128], strides = [1, 1]} : vector<8x1024xf32> to vector<8x128xf32>
    %308 = vector.extract_strided_slice %16 {offsets = [48, 0], sizes = [1, 128], strides = [1, 1]} : vector<64x128xf32> to vector<1x128xf32>
    %309 = vector.broadcast %308 : vector<1x128xf32> to vector<8x128xf32>
    %310 = arith.mulf %307, %309 : vector<8x128xf32>
    %311 = vector.extract_strided_slice %15 {offsets = [0, 128], sizes = [8, 128], strides = [1, 1]} : vector<8x1024xf32> to vector<8x128xf32>
    %312 = vector.extract_strided_slice %16 {offsets = [49, 0], sizes = [1, 128], strides = [1, 1]} : vector<64x128xf32> to vector<1x128xf32>
    %313 = vector.broadcast %312 : vector<1x128xf32> to vector<8x128xf32>
    %314 = arith.mulf %311, %313 : vector<8x128xf32>
    %315 = arith.addf %310, %314 : vector<8x128xf32>
    %316 = vector.extract_strided_slice %15 {offsets = [0, 256], sizes = [8, 128], strides = [1, 1]} : vector<8x1024xf32> to vector<8x128xf32>
    %317 = vector.extract_strided_slice %16 {offsets = [50, 0], sizes = [1, 128], strides = [1, 1]} : vector<64x128xf32> to vector<1x128xf32>
    %318 = vector.broadcast %317 : vector<1x128xf32> to vector<8x128xf32>
    %319 = arith.mulf %316, %318 : vector<8x128xf32>
    %320 = arith.addf %315, %319 : vector<8x128xf32>
    %321 = vector.extract_strided_slice %15 {offsets = [0, 384], sizes = [8, 128], strides = [1, 1]} : vector<8x1024xf32> to vector<8x128xf32>
    %322 = vector.extract_strided_slice %16 {offsets = [51, 0], sizes = [1, 128], strides = [1, 1]} : vector<64x128xf32> to vector<1x128xf32>
    %323 = vector.broadcast %322 : vector<1x128xf32> to vector<8x128xf32>
    %324 = arith.mulf %321, %323 : vector<8x128xf32>
    %325 = arith.addf %320, %324 : vector<8x128xf32>
    %326 = vector.extract_strided_slice %15 {offsets = [0, 512], sizes = [8, 128], strides = [1, 1]} : vector<8x1024xf32> to vector<8x128xf32>
    %327 = vector.extract_strided_slice %16 {offsets = [52, 0], sizes = [1, 128], strides = [1, 1]} : vector<64x128xf32> to vector<1x128xf32>
    %328 = vector.broadcast %327 : vector<1x128xf32> to vector<8x128xf32>
    %329 = arith.mulf %326, %328 : vector<8x128xf32>
    %330 = arith.addf %325, %329 : vector<8x128xf32>
    %331 = vector.extract_strided_slice %15 {offsets = [0, 640], sizes = [8, 128], strides = [1, 1]} : vector<8x1024xf32> to vector<8x128xf32>
    %332 = vector.extract_strided_slice %16 {offsets = [53, 0], sizes = [1, 128], strides = [1, 1]} : vector<64x128xf32> to vector<1x128xf32>
    %333 = vector.broadcast %332 : vector<1x128xf32> to vector<8x128xf32>
    %334 = arith.mulf %331, %333 : vector<8x128xf32>
    %335 = arith.addf %330, %334 : vector<8x128xf32>
    %336 = vector.extract_strided_slice %15 {offsets = [0, 768], sizes = [8, 128], strides = [1, 1]} : vector<8x1024xf32> to vector<8x128xf32>
    %337 = vector.extract_strided_slice %16 {offsets = [54, 0], sizes = [1, 128], strides = [1, 1]} : vector<64x128xf32> to vector<1x128xf32>
    %338 = vector.broadcast %337 : vector<1x128xf32> to vector<8x128xf32>
    %339 = arith.mulf %336, %338 : vector<8x128xf32>
    %340 = arith.addf %335, %339 : vector<8x128xf32>
    %341 = vector.extract_strided_slice %15 {offsets = [0, 896], sizes = [8, 128], strides = [1, 1]} : vector<8x1024xf32> to vector<8x128xf32>
    %342 = vector.extract_strided_slice %16 {offsets = [55, 0], sizes = [1, 128], strides = [1, 1]} : vector<64x128xf32> to vector<1x128xf32>
    %343 = vector.broadcast %342 : vector<1x128xf32> to vector<8x128xf32>
    %344 = arith.mulf %341, %343 : vector<8x128xf32>
    %345 = arith.addf %340, %344 : vector<8x128xf32>
    %346 = vector.broadcast %17 : vector<1x128xf32> to vector<8x128xf32>
    %347 = arith.addf %345, %346 : vector<8x128xf32>
    %348 = arith.truncf %347 : vector<8x128xf32> to vector<8x128xbf16>
    %cst_32 = arith.constant dense<0.000000e+00> : vector<8x128xf32>
    %349 = tpu.matmul %348, %18, %cst_32 {dimension_numbers = #tpu.dot_dimension_numbers<[1], [0], [0], [1], [0, 0, 1, 1], [], []>} : vector<8x128xbf16>, vector<128x128xbf16>, vector<8x128xf32> -> vector<8x128xf32>
    %350 = vector.broadcast %19 : vector<1x128xf32> to vector<8x128xf32>
    %351 = arith.addf %349, %350 : vector<8x128xf32>
    %cst_33 = arith.constant 0.000000e+00 : f32
    %352 = vector.broadcast %cst_33 : f32 to vector<8x128xf32>
    %353 = arith.maximumf %351, %352 : vector<8x128xf32>
    %354 = arith.maximumf %306, %353 : vector<8x128xf32>
    %355 = vector.extract_strided_slice %15 {offsets = [0, 0], sizes = [8, 128], strides = [1, 1]} : vector<8x1024xf32> to vector<8x128xf32>
    %356 = vector.extract_strided_slice %16 {offsets = [56, 0], sizes = [1, 128], strides = [1, 1]} : vector<64x128xf32> to vector<1x128xf32>
    %357 = vector.broadcast %356 : vector<1x128xf32> to vector<8x128xf32>
    %358 = arith.mulf %355, %357 : vector<8x128xf32>
    %359 = vector.extract_strided_slice %15 {offsets = [0, 128], sizes = [8, 128], strides = [1, 1]} : vector<8x1024xf32> to vector<8x128xf32>
    %360 = vector.extract_strided_slice %16 {offsets = [57, 0], sizes = [1, 128], strides = [1, 1]} : vector<64x128xf32> to vector<1x128xf32>
    %361 = vector.broadcast %360 : vector<1x128xf32> to vector<8x128xf32>
    %362 = arith.mulf %359, %361 : vector<8x128xf32>
    %363 = arith.addf %358, %362 : vector<8x128xf32>
    %364 = vector.extract_strided_slice %15 {offsets = [0, 256], sizes = [8, 128], strides = [1, 1]} : vector<8x1024xf32> to vector<8x128xf32>
    %365 = vector.extract_strided_slice %16 {offsets = [58, 0], sizes = [1, 128], strides = [1, 1]} : vector<64x128xf32> to vector<1x128xf32>
    %366 = vector.broadcast %365 : vector<1x128xf32> to vector<8x128xf32>
    %367 = arith.mulf %364, %366 : vector<8x128xf32>
    %368 = arith.addf %363, %367 : vector<8x128xf32>
    %369 = vector.extract_strided_slice %15 {offsets = [0, 384], sizes = [8, 128], strides = [1, 1]} : vector<8x1024xf32> to vector<8x128xf32>
    %370 = vector.extract_strided_slice %16 {offsets = [59, 0], sizes = [1, 128], strides = [1, 1]} : vector<64x128xf32> to vector<1x128xf32>
    %371 = vector.broadcast %370 : vector<1x128xf32> to vector<8x128xf32>
    %372 = arith.mulf %369, %371 : vector<8x128xf32>
    %373 = arith.addf %368, %372 : vector<8x128xf32>
    %374 = vector.extract_strided_slice %15 {offsets = [0, 512], sizes = [8, 128], strides = [1, 1]} : vector<8x1024xf32> to vector<8x128xf32>
    %375 = vector.extract_strided_slice %16 {offsets = [60, 0], sizes = [1, 128], strides = [1, 1]} : vector<64x128xf32> to vector<1x128xf32>
    %376 = vector.broadcast %375 : vector<1x128xf32> to vector<8x128xf32>
    %377 = arith.mulf %374, %376 : vector<8x128xf32>
    %378 = arith.addf %373, %377 : vector<8x128xf32>
    %379 = vector.extract_strided_slice %15 {offsets = [0, 640], sizes = [8, 128], strides = [1, 1]} : vector<8x1024xf32> to vector<8x128xf32>
    %380 = vector.extract_strided_slice %16 {offsets = [61, 0], sizes = [1, 128], strides = [1, 1]} : vector<64x128xf32> to vector<1x128xf32>
    %381 = vector.broadcast %380 : vector<1x128xf32> to vector<8x128xf32>
    %382 = arith.mulf %379, %381 : vector<8x128xf32>
    %383 = arith.addf %378, %382 : vector<8x128xf32>
    %384 = vector.extract_strided_slice %15 {offsets = [0, 768], sizes = [8, 128], strides = [1, 1]} : vector<8x1024xf32> to vector<8x128xf32>
    %385 = vector.extract_strided_slice %16 {offsets = [62, 0], sizes = [1, 128], strides = [1, 1]} : vector<64x128xf32> to vector<1x128xf32>
    %386 = vector.broadcast %385 : vector<1x128xf32> to vector<8x128xf32>
    %387 = arith.mulf %384, %386 : vector<8x128xf32>
    %388 = arith.addf %383, %387 : vector<8x128xf32>
    %389 = vector.extract_strided_slice %15 {offsets = [0, 896], sizes = [8, 128], strides = [1, 1]} : vector<8x1024xf32> to vector<8x128xf32>
    %390 = vector.extract_strided_slice %16 {offsets = [63, 0], sizes = [1, 128], strides = [1, 1]} : vector<64x128xf32> to vector<1x128xf32>
    %391 = vector.broadcast %390 : vector<1x128xf32> to vector<8x128xf32>
    %392 = arith.mulf %389, %391 : vector<8x128xf32>
    %393 = arith.addf %388, %392 : vector<8x128xf32>
    %394 = vector.broadcast %17 : vector<1x128xf32> to vector<8x128xf32>
    %395 = arith.addf %393, %394 : vector<8x128xf32>
    %396 = arith.truncf %395 : vector<8x128xf32> to vector<8x128xbf16>
    %cst_34 = arith.constant dense<0.000000e+00> : vector<8x128xf32>
    %397 = tpu.matmul %396, %18, %cst_34 {dimension_numbers = #tpu.dot_dimension_numbers<[1], [0], [0], [1], [0, 0, 1, 1], [], []>} : vector<8x128xbf16>, vector<128x128xbf16>, vector<8x128xf32> -> vector<8x128xf32>
    %398 = vector.broadcast %19 : vector<1x128xf32> to vector<8x128xf32>
    %399 = arith.addf %397, %398 : vector<8x128xf32>
    %cst_35 = arith.constant 0.000000e+00 : f32
    %400 = vector.broadcast %cst_35 : f32 to vector<8x128xf32>
    %401 = arith.maximumf %399, %400 : vector<8x128xf32>
    %402 = arith.maximumf %354, %401 : vector<8x128xf32>
    %403 = arith.truncf %402 : vector<8x128xf32> to vector<8x128xbf16>
    %c0_36 = arith.constant 0 : index
    %c0_37 = arith.constant 0 : index
    %404 = vector.load %arg9[%c0_36, %c0_37] : memref<128x128xbf16, #tpu.memory_space<vmem>>, vector<128x128xbf16>
    %cst_38 = arith.constant dense<0.000000e+00> : vector<8x128xf32>
    %405 = tpu.matmul %403, %404, %cst_38 {dimension_numbers = #tpu.dot_dimension_numbers<[1], [0], [0], [1], [0, 0, 1, 1], [], []>} : vector<8x128xbf16>, vector<128x128xbf16>, vector<8x128xf32> -> vector<8x128xf32>
    %c0_39 = arith.constant 0 : index
    %c0_40 = arith.constant 0 : index
    %406 = vector.load %arg10[%c0_39, %c0_40] : memref<1x128xf32, #tpu.memory_space<vmem>>, vector<1x128xf32>
    %407 = vector.broadcast %406 : vector<1x128xf32> to vector<8x128xf32>
    %408 = arith.addf %405, %407 : vector<8x128xf32>
    %c0_41 = arith.constant 0 : index
    %c0_42 = arith.constant 0 : index
    %409 = vector.load %arg11[%c0_41, %c0_42] : memref<8x128xf32, #tpu.memory_space<vmem>>, vector<8x128xf32>
    tpu.vector_store %arg11[%c0_41, %c0_42], %408 {strides = array<i32>} : memref<8x128xf32, #tpu.memory_space<vmem>>, vector<8x128xf32>,
    return
  }
}

</mosaic_0001>

<llo_original>
// kernel: forward.1
$region0: #{forward.1}
  #allocation0 [shape = 'u32[]', space=smem, size = 0x4, offset = 0x4, fixed_abs, tag = 'smem constant byte address 0x4 - core index']
  #allocation1 [shape = 'u32[144,128]{1,0:T(1,128)}', space=vmem, size = 0x12000, scoped, tag = 'internal scratch']
  %s0 = inlined_call_operand.vmem [shape: bf16[8,32], index: 0, kind: input, shape index: {}]
  %s1 = inlined_call_operand.hbm [shape: bf16[32,512], index: 1, kind: input, shape index: {}]
  %s2 = inlined_call_operand.vmem [shape: f32[1,512], index: 2, kind: input, shape index: {}]
  %s3 = inlined_call_operand.hbm [shape: bf16[512,1024], index: 3, kind: input, shape index: {}]
  %s4 = inlined_call_operand.hbm [shape: f32[1,1024], index: 4, kind: input, shape index: {}]
  %s5 = inlined_call_operand.vmem [shape: f32[64,128], index: 5, kind: input, shape index: {}]
  %s6 = inlined_call_operand.vmem [shape: f32[1,128], index: 6, kind: input, shape index: {}]
  %s7 = inlined_call_operand.hbm [shape: bf16[128,128], index: 7, kind: input, shape index: {}]
  %s8 = inlined_call_operand.hbm [shape: f32[1,128], index: 8, kind: input, shape index: {}]
  %s9 = inlined_call_operand.hbm [shape: bf16[128,128], index: 9, kind: input, shape index: {}]
  %s10 = inlined_call_operand.hbm [shape: f32[1,128], index: 10, kind: input, shape index: {}]
  %s11 = inlined_call_operand.vmem [shape: f32[8,128], index: 11, kind: output, shape index: {}]
  %s12 = sld [smem:[#allocation0]]
  $region82: #{forward.1} parent=0
    _
  %s14 = ssub.s32 1, %s12
  %s15 = scalar_select 0, %s14, %s12
  $region1: #{forward.1} parent=0
    #allocation2 [shape = 'u8[32768]{0}', space=vmem, size = 0x8000, scoped, tag = 'input window, operand 1, single buffered']
    #allocation3 [shape = 's32[1]{0}', space=sflag, size = 0x4, scoped, tag = 'scoped memory for forward.1']
    #allocation4 [shape = 'u8[1048576]{0}', space=vmem, size = 0x100000, scoped, tag = 'input window, operand 3, single buffered']
    #allocation5 [shape = 's32[1]{0}', space=sflag, size = 0x4, scoped, tag = 'scoped memory for forward.1']
    #allocation6 [shape = 'u8[4096]{0}', space=vmem, size = 0x1000, scoped, tag = 'input window, operand 4, single buffered']
    #allocation7 [shape = 'u8[32768]{0}', space=vmem, size = 0x8000, scoped, tag = 'input window, operand 7, single buffered']
    #allocation8 [shape = 's32[1]{0}', space=sflag, size = 0x4, scoped, tag = 'scoped memory for forward.1']
    #allocation9 [shape = 'u8[512]{0}', space=vmem, size = 0x400, scoped, tag = 'input window, operand 8, single buffered']
    #allocation10 [shape = 'u8[32768]{0}', space=vmem, size = 0x8000, scoped, tag = 'input window, operand 9, single buffered']
    #allocation11 [shape = 's32[1]{0}', space=sflag, size = 0x4, scoped, tag = 'scoped memory for forward.1']
    #allocation12 [shape = 'u8[512]{0}', space=vmem, size = 0x400, scoped, tag = 'input window, operand 10, single buffered']
    %16 = vsyncpa [#allocation3], 0
    %17 = vsyncpa [#allocation5], 0
    %18 = vsyncpa [#allocation8], 0
    %19 = vsyncpa [#allocation11], 0
    // Predicated region
    $region2: #{forward.1} parent=1 // pred_check
      _
    $region3: #{forward.1} parent=1 // pred_check_branch
      %21 = sbr.rel (0) target = $region5
    $region4: #{forward.1} parent=1 // pred_region
      _
    $region5: #{forward.1} parent=1 // pred_fallthru
      _
    // Predicated region
    $region6: #{forward.1} parent=1 // pred_check
      _
    $region7: #{forward.1} parent=1 // pred_check_branch
      %23 = sbr.rel (0) target = $region9
    $region8: #{forward.1} parent=1 // pred_region
      %s25 = ssub.s32 1024, 1024
      %26 = vsyncadd [#allocation3], %s25
      %s27 = sshll.u32 [#allocation2], 4
      %s28 = int_to_ptr.vmem [resolvable:$true] %s27
      %33 = dma.hbm_to_vmem [thread:$0]  %s1, 1024, %s28, [#allocation3], 256, 256, 16
    $region9: #{forward.1} parent=1 // pred_fallthru
      _
    // Predicated region
    $region10: #{forward.1} parent=1 // pred_check
      _
    $region11: #{forward.1} parent=1 // pred_check_branch
      %35 = sbr.rel (0) target = $region13
    $region12: #{forward.1} parent=1 // pred_region
      _
    $region13: #{forward.1} parent=1 // pred_fallthru
      _
    // Predicated region
    $region14: #{forward.1} parent=1 // pred_check
      _
    $region15: #{forward.1} parent=1 // pred_check_branch
      %37 = sbr.rel (0) target = $region17
    $region16: #{forward.1} parent=1 // pred_region
      %s39 = ssub.s32 32768, 32768
      %40 = vsyncadd [#allocation5], %s39
      %s41 = sshll.u32 [#allocation4], 4
      %s42 = int_to_ptr.vmem [resolvable:$true] %s41
      %47 = dma.hbm_to_vmem [thread:$0]  %s3, 32768, %s42, [#allocation5], 512, 512, 32
    $region17: #{forward.1} parent=1 // pred_fallthru
      _
    // Predicated region
    $region18: #{forward.1} parent=1 // pred_check
      _
    $region19: #{forward.1} parent=1 // pred_check_branch
      %49 = sbr.rel (0) target = $region21
    $region20: #{forward.1} parent=1 // pred_region
      %s51 = ssub.s32 128, 128
      %52 = vsyncadd [#allocation5], %s51
      %s54 = sshll.u32 [#allocation6], 4
      %s55 = int_to_ptr.vmem [resolvable:$true] %s54
      %57 = dma.hbm_to_vmem [thread:$0]  %s4, 128, %s55, [#allocation5]
    $region21: #{forward.1} parent=1 // pred_fallthru
      _
    // Predicated region
    $region22: #{forward.1} parent=1 // pred_check
      _
    $region23: #{forward.1} parent=1 // pred_check_branch
      %59 = sbr.rel (0) target = $region25
    $region24: #{forward.1} parent=1 // pred_region
      _
    $region25: #{forward.1} parent=1 // pred_fallthru
      _
    // Predicated region
    $region26: #{forward.1} parent=1 // pred_check
      _
    $region27: #{forward.1} parent=1 // pred_check_branch
      %61 = sbr.rel (0) target = $region29
    $region28: #{forward.1} parent=1 // pred_region
      _
    $region29: #{forward.1} parent=1 // pred_fallthru
      _
    // Predicated region
    $region30: #{forward.1} parent=1 // pred_check
      _
    $region31: #{forward.1} parent=1 // pred_check_branch
      %63 = sbr.rel (0) target = $region33
    $region32: #{forward.1} parent=1 // pred_region
      %s65 = ssub.s32 1024, 1024
      %66 = vsyncadd [#allocation8], %s65
      %s67 = sshll.u32 [#allocation7], 4
      %s68 = int_to_ptr.vmem [resolvable:$true] %s67
      %73 = dma.hbm_to_vmem [thread:$0]  %s7, 1024, %s68, [#allocation8], 64, 64, 4
    $region33: #{forward.1} parent=1 // pred_fallthru
      _
    // Predicated region
    $region34: #{forward.1} parent=1 // pred_check
      _
    $region35: #{forward.1} parent=1 // pred_check_branch
      %75 = sbr.rel (0) target = $region37
    $region36: #{forward.1} parent=1 // pred_region
      %s77 = ssub.s32 16, 16
      %78 = vsyncadd [#allocation8], %s77
      %s80 = sshll.u32 [#allocation9], 4
      %s81 = int_to_ptr.vmem [resolvable:$true] %s80
      %83 = dma.hbm_to_vmem [thread:$0]  %s8, 16, %s81, [#allocation8]
    $region37: #{forward.1} parent=1 // pred_fallthru
      _
    // Predicated region
    $region38: #{forward.1} parent=1 // pred_check
      _
    $region39: #{forward.1} parent=1 // pred_check_branch
      %85 = sbr.rel (0) target = $region41
    $region40: #{forward.1} parent=1 // pred_region
      %s87 = ssub.s32 1024, 1024
      %88 = vsyncadd [#allocation11], %s87
      %s89 = sshll.u32 [#allocation10], 4
      %s90 = int_to_ptr.vmem [resolvable:$true] %s89
      %95 = dma.hbm_to_vmem [thread:$0]  %s9, 1024, %s90, [#allocation11], 64, 64, 4
    $region41: #{forward.1} parent=1 // pred_fallthru
      _
    // Predicated region
    $region42: #{forward.1} parent=1 // pred_check
      _
    $region43: #{forward.1} parent=1 // pred_check_branch
      %97 = sbr.rel (0) target = $region45
    $region44: #{forward.1} parent=1 // pred_region
      %s99 = ssub.s32 16, 16
      %100 = vsyncadd [#allocation11], %s99
      %s102 = sshll.u32 [#allocation12], 4
      %s103 = int_to_ptr.vmem [resolvable:$true] %s102
      %105 = dma.hbm_to_vmem [thread:$0]  %s10, 16, %s103, [#allocation11]
    $region45: #{forward.1} parent=1 // pred_fallthru
      _
    // Predicated region
    $region46: #{forward.1} parent=1 // pred_check
      _
    $region47: #{forward.1} parent=1 // pred_check_branch
      %107 = sbr.rel (0) target = $region49
    $region48: #{forward.1} parent=1 // pred_region
      %108 = dma.done [#allocation3], 1024
    $region49: #{forward.1} parent=1 // pred_fallthru
      _
    // Predicated region
    $region50: #{forward.1} parent=1 // pred_check
      _
    $region51: #{forward.1} parent=1 // pred_check_branch
      %110 = sbr.rel (0) target = $region53
    $region52: #{forward.1} parent=1 // pred_region
      %111 = dma.done [#allocation5], 32768
    $region53: #{forward.1} parent=1 // pred_fallthru
      _
    // Predicated region
    $region54: #{forward.1} parent=1 // pred_check
      _
    $region55: #{forward.1} parent=1 // pred_check_branch
      %113 = sbr.rel (0) target = $region57
    $region56: #{forward.1} parent=1 // pred_region
      %114 = dma.done [#allocation5], 128
    $region57: #{forward.1} parent=1 // pred_fallthru
      _
    // Predicated region
    $region58: #{forward.1} parent=1 // pred_check
      _
    $region59: #{forward.1} parent=1 // pred_check_branch
      %116 = sbr.rel (0) target = $region61
    $region60: #{forward.1} parent=1 // pred_region
      %117 = dma.done [#allocation8], 1024
    $region61: #{forward.1} parent=1 // pred_fallthru
      _
    // Predicated region
    $region62: #{forward.1} parent=1 // pred_check
      _
    $region63: #{forward.1} parent=1 // pred_check_branch
      %119 = sbr.rel (0) target = $region65
    $region64: #{forward.1} parent=1 // pred_region
      %120 = dma.done [#allocation8], 16
    $region65: #{forward.1} parent=1 // pred_fallthru
      _
    // Predicated region
    $region66: #{forward.1} parent=1 // pred_check
      _
    $region67: #{forward.1} parent=1 // pred_check_branch
      %122 = sbr.rel (0) target = $region69
    $region68: #{forward.1} parent=1 // pred_region
      %123 = dma.done [#allocation11], 1024
    $region69: #{forward.1} parent=1 // pred_fallthru
      _
    // Predicated region
    $region70: #{forward.1} parent=1 // pred_check
      _
    $region71: #{forward.1} parent=1 // pred_check_branch
      %125 = sbr.rel (0) target = $region73
    $region72: #{forward.1} parent=1 // pred_region
      %126 = dma.done [#allocation11], 16
    $region73: #{forward.1} parent=1 // pred_fallthru
      _
    %v128 = vld [vmem:[%s0] sm:$0xf]
    %v129 = vld [vmem:[#allocation2] sm:$0xff]
    %v130 = vld [vmem:[#allocation2 + $0x8] sm:$0xff]
    %v131 = vld [vmem:[#allocation2 + $0x10] sm:$0xff]
    %v132 = vld [vmem:[#allocation2 + $0x18] sm:$0xff]
    %v133 = vld [vmem:[#allocation2 + $0x20] sm:$0xff]
    %v134 = vld [vmem:[#allocation2 + $0x28] sm:$0xff]
    %v135 = vld [vmem:[#allocation2 + $0x30] sm:$0xff]
    %v136 = vld [vmem:[#allocation2 + $0x38] sm:$0xff]
    %v137 = vld [vmem:[%s2] sm:$0xf]
    %v139 = vlaneseq
    %v140 = vshrl.u32 %v139, 7
    %v141 = vsub.s32 0, %v140
    %v142 = vrot.slane %v137, %v141
    %v143 = vlaneseq
    %v144 = vshrl.u32 %v143, 7
    %v145 = vsub.s32 1, %v144
    %v146 = vrot.slane %v137, %v145
    %v147 = vlaneseq
    %v148 = vshrl.u32 %v147, 7
    %v149 = vsub.s32 2, %v148
    %v150 = vrot.slane %v137, %v149
    %v151 = vlaneseq
    %v152 = vshrl.u32 %v151, 7
    %v153 = vsub.s32 3, %v152
    %v154 = vrot.slane %v137, %v153
    %v167 = vunpack.c.l.b16 %v129
    %v168 = vunpack.c.h.b16 %v129
    %v169 = vunpack.c.l.b16 %v130
    %v170 = vunpack.c.h.b16 %v130
    %v171 = vunpack.c.l.b16 %v131
    %v172 = vunpack.c.h.b16 %v131
    %v173 = vunpack.c.l.b16 %v132
    %v174 = vunpack.c.h.b16 %v132
    %v175 = vunpack.c.l.b16 %v133
    %v176 = vunpack.c.h.b16 %v133
    %v177 = vunpack.c.l.b16 %v134
    %v178 = vunpack.c.h.b16 %v134
    %v179 = vunpack.c.l.b16 %v135
    %v180 = vunpack.c.h.b16 %v135
    %v181 = vunpack.c.l.b16 %v136
    %v182 = vunpack.c.h.b16 %v136
    %v183 = vpack.c.b16 %v171, %v167
    %v184 = vpack.c.b16 %v172, %v168
    %v185 = vpack.c.b16 %v173, %v169
    %v186 = vpack.c.b16 %v174, %v170
    %v187 = vpack.c.b16 %v179, %v175
    %v188 = vpack.c.b16 %v180, %v176
    %v189 = vpack.c.b16 %v181, %v177
    %v190 = vpack.c.b16 %v182, %v178
    %vm199 = vcmask 261120
    %v201 = vsel %vm199, %v128, 0
    %203 = vmatprep.subr.bf16.mxu0 %v184
    %204 = vmatpush1.bf16.msra.mxu0 %v183
    %205 = vmatprep.subr.bf16.mxu0 %v188
    %206 = vmatpush1.bf16.msra.mxu0 %v187
    %207 = vmatprep.subr.bf16.mxu0 0
    %208 = vmatpush1.bf16.msra.mxu0 0
    %209 = vmatprep.subr.bf16.mxu0 0
    %210 = vmatpush1.bf16.msra.mxu0 0
    %211 = vmatprep.subr.bf16.mxu0 0
    %212 = vmatpush1.bf16.msra.mxu0 0
    %213 = vmatprep.subr.bf16.mxu0 0
    %214 = vmatpush1.bf16.msra.mxu0 0
    %215 = vmatprep.subr.bf16.mxu0 0
    %216 = vmatpush1.bf16.msra.mxu0 0
    %217 = vmatprep.subr.bf16.mxu0 0
    %218 = vmatpush1.bf16.msra.mxu0 0
    %219 = vmatprep.subr.bf16.mxu0 0
    %220 = vmatpush1.bf16.msra.mxu0 0
    %221 = vmatprep.subr.bf16.mxu0 0
    %222 = vmatpush1.bf16.msra.mxu0 0
    %223 = vmatprep.subr.bf16.mxu0 0
    %224 = vmatpush1.bf16.msra.mxu0 0
    %225 = vmatprep.subr.bf16.mxu0 0
    %226 = vmatpush1.bf16.msra.mxu0 0
    %227 = vmatprep.subr.bf16.mxu0 0
    %228 = vmatpush1.bf16.msra.mxu0 0
    %229 = vmatprep.subr.bf16.mxu0 0
    %230 = vmatpush1.bf16.msra.mxu0 0
    %231 = vmatprep.subr.bf16.mxu0 0
    %232 = vmatpush1.bf16.msra.mxu0 0
    %233 = vmatprep.subr.bf16.mxu0 0
    %234 = vmatpush1.bf16.msra.mxu0 0
    %235 = vmatprep.mubr.bf16.mxu0 0
    %236 = vmatmul.mubr.bf16.gmra.mrb[0].mxu0 %v201
    %v237 = vpop.f32.mrb[0].mxu0
    %v238 = vadd.f32 %v142, %v237
    %v239 = vpop.f32.mrb[0].mxu0
    %v240 = vadd.f32 %v146, %v239
    %v241 = vpop.f32.mrb[0].mxu0
    %v242 = vpop.f32.mrb[0].mxu0
    %243 = vdwg.mxu0
    %244 = vmatprep.subr.bf16.mxu0 %v186
    %245 = vmatpush1.bf16.msra.mxu0 %v185
    %246 = vmatprep.subr.bf16.mxu0 %v190
    %247 = vmatpush1.bf16.msra.mxu0 %v189
    %248 = vmatprep.subr.bf16.mxu0 0
    %249 = vmatpush1.bf16.msra.mxu0 0
    %250 = vmatprep.subr.bf16.mxu0 0
    %251 = vmatpush1.bf16.msra.mxu0 0
    %252 = vmatprep.subr.bf16.mxu0 0
    %253 = vmatpush1.bf16.msra.mxu0 0
    %254 = vmatprep.subr.bf16.mxu0 0
    %255 = vmatpush1.bf16.msra.mxu0 0
    %256 = vmatprep.subr.bf16.mxu0 0
    %257 = vmatpush1.bf16.msra.mxu0 0
    %258 = vmatprep.subr.bf16.mxu0 0
    %259 = vmatpush1.bf16.msra.mxu0 0
    %260 = vmatprep.subr.bf16.mxu0 0
    %261 = vmatpush1.bf16.msra.mxu0 0
    %262 = vmatprep.subr.bf16.mxu0 0
    %263 = vmatpush1.bf16.msra.mxu0 0
    %264 = vmatprep.subr.bf16.mxu0 0
    %265 = vmatpush1.bf16.msra.mxu0 0
    %266 = vmatprep.subr.bf16.mxu0 0
    %267 = vmatpush1.bf16.msra.mxu0 0
    %268 = vmatprep.subr.bf16.mxu0 0
    %269 = vmatpush1.bf16.msra.mxu0 0
    %270 = vmatprep.subr.bf16.mxu0 0
    %271 = vmatpush1.bf16.msra.mxu0 0
    %272 = vmatprep.subr.bf16.mxu0 0
    %273 = vmatpush1.bf16.msra.mxu0 0
    %274 = vmatprep.subr.bf16.mxu0 0
    %275 = vmatpush1.bf16.msra.mxu0 0
    %276 = vmatprep.mubr.bf16.mxu0 0
    %277 = vmatmul.mubr.bf16.gmra.mrb[0].mxu0 %v201
    %v278 = vpop.f32.mrb[0].mxu0
    %v279 = vadd.f32 %v150, %v278
    %v280 = vpop.f32.mrb[0].mxu0
    %v281 = vadd.f32 %v154, %v280
    %v282 = vpop.f32.mrb[0].mxu0
    %v283 = vpop.f32.mrb[0].mxu0
    %284 = vdwg.mxu0
    %v285 = vmax.f32 %v238, 0.0
    %v286 = vmax.f32 %v240, 0.0
    %v287 = vmax.f32 %v279, 0.0
    %v288 = vmax.f32 %v281, 0.0
    %v289 = vpack.c.bf16 %v285, %v285
    %v290 = vpack.c.bf16 %v286, %v286
    %v291 = vpack.c.bf16 %v287, %v287
    %v292 = vpack.c.bf16 %v288, %v288
    %v293 = vld [vmem:[#allocation4] sm:$0xff]
    %v294 = vld [vmem:[#allocation4 + $0x8] sm:$0xff]
    %v295 = vld [vmem:[#allocation4 + $0x10] sm:$0xff]
    %v296 = vld [vmem:[#allocation4 + $0x18] sm:$0xff]
    %v297 = vld [vmem:[#allocation4 + $0x20] sm:$0xff]
    %v298 = vld [vmem:[#allocation4 + $0x28] sm:$0xff]
    %v299 = vld [vmem:[#allocation4 + $0x30] sm:$0xff]
    %v300 = vld [vmem:[#allocation4 + $0x38] sm:$0xff]
    %v301 = vld [vmem:[#allocation4 + $0x40] sm:$0xff]
    %v302 = vld [vmem:[#allocation4 + $0x48] sm:$0xff]
    %v303 = vld [vmem:[#allocation4 + $0x50] sm:$0xff]
    %v304 = vld [vmem:[#allocation4 + $0x58] sm:$0xff]
    %v305 = vld [vmem:[#allocation4 + $0x60] sm:$0xff]
    %v306 = vld [vmem:[#allocation4 + $0x68] sm:$0xff]
    %v307 = vld [vmem:[#allocation4 + $0x70] sm:$0xff]
    %v308 = vld [vmem:[#allocation4 + $0x78] sm:$0xff]
    %v309 = vld [vmem:[#allocation4 + $0x80] sm:$0xff]
    %v310 = vld [vmem:[#allocation4 + $0x88] sm:$0xff]
    %v311 = vld [vmem:[#allocation4 + $0x90] sm:$0xff]
    %v312 = vld [vmem:[#allocation4 + $0x98] sm:$0xff]
    %v313 = vld [vmem:[#allocation4 + $0xa0] sm:$0xff]
    %v314 = vld [vmem:[#allocation4 + $0xa8] sm:$0xff]
    %v315 = vld [vmem:[#allocation4 + $0xb0] sm:$0xff]
    %v316 = vld [vmem:[#allocation4 + $0xb8] sm:$0xff]
    %v317 = vld [vmem:[#allocation4 + $0xc0] sm:$0xff]
    %v318 = vld [vmem:[#allocation4 + $0xc8] sm:$0xff]
    %v319 = vld [vmem:[#allocation4 + $0xd0] sm:$0xff]
    %v320 = vld [vmem:[#allocation4 + $0xd8] sm:$0xff]
    %v321 = vld [vmem:[#allocation4 + $0xe0] sm:$0xff]
    %v322 = vld [vmem:[#allocation4 + $0xe8] sm:$0xff]
    %v323 = vld [vmem:[#allocation4 + $0xf0] sm:$0xff]
    %v324 = vld [vmem:[#allocation4 + $0xf8] sm:$0xff]
    %v325 = vld [vmem:[#allocation4 + $0x100] sm:$0xff]
    %v326 = vld [vmem:[#allocation4 + $0x108] sm:$0xff]
    %v327 = vld [vmem:[#allocation4 + $0x110] sm:$0xff]
    %v328 = vld [vmem:[#allocation4 + $0x118] sm:$0xff]
    %v329 = vld [vmem:[#allocation4 + $0x120] sm:$0xff]
    %v330 = vld [vmem:[#allocation4 + $0x128] sm:$0xff]
    %v331 = vld [vmem:[#allocation4 + $0x130] sm:$0xff]
    %v332 = vld [vmem:[#allocation4 + $0x138] sm:$0xff]
    %v333 = vld [vmem:[#allocation4 + $0x140] sm:$0xff]
    %v334 = vld [vmem:[#allocation4 + $0x148] sm:$0xff]
    %v335 = vld [vmem:[#allocation4 + $0x150] sm:$0xff]
    %v336 = vld [vmem:[#allocation4 + $0x158] sm:$0xff]
    %v337 = vld [vmem:[#allocation4 + $0x160] sm:$0xff]
    %v338 = vld [vmem:[#allocation4 + $0x168] sm:$0xff]
    %v339 = vld [vmem:[#allocation4 + $0x170] sm:$0xff]
    %v340 = vld [vmem:[#allocation4 + $0x178] sm:$0xff]
    %v341 = vld [vmem:[#allocation4 + $0x180] sm:$0xff]
    %v342 = vld [vmem:[#allocation4 + $0x188] sm:$0xff]
    %v343 = vld [vmem:[#allocation4 + $0x190] sm:$0xff]
    %v344 = vld [vmem:[#allocation4 + $0x198] sm:$0xff]
    %v345 = vld [vmem:[#allocation4 + $0x1a0] sm:$0xff]
    %v346 = vld [vmem:[#allocation4 + $0x1a8] sm:$0xff]
    %v347 = vld [vmem:[#allocation4 + $0x1b0] sm:$0xff]
    %v348 = vld [vmem:[#allocation4 + $0x1b8] sm:$0xff]
    %v349 = vld [vmem:[#allocation4 + $0x1c0] sm:$0xff]
    %v350 = vld [vmem:[#allocation4 + $0x1c8] sm:$0xff]
    %v351 = vld [vmem:[#allocation4 + $0x1d0] sm:$0xff]
    %v352 = vld [vmem:[#allocation4 + $0x1d8] sm:$0xff]
    %v353 = vld [vmem:[#allocation4 + $0x1e0] sm:$0xff]
    %v354 = vld [vmem:[#allocation4 + $0x1e8] sm:$0xff]
    %v355 = vld [vmem:[#allocation4 + $0x1f0] sm:$0xff]
    %v356 = vld [vmem:[#allocation4 + $0x1f8] sm:$0xff]
    %v357 = vld [vmem:[#allocation4 + $0x200] sm:$0xff]
    %v358 = vld [vmem:[#allocation4 + $0x208] sm:$0xff]
    %v359 = vld [vmem:[#allocation4 + $0x210] sm:$0xff]
    %v360 = vld [vmem:[#allocation4 + $0x218] sm:$0xff]
    %v361 = vld [vmem:[#allocation4 + $0x220] sm:$0xff]
    %v362 = vld [vmem:[#allocation4 + $0x228] sm:$0xff]
    %v363 = vld [vmem:[#allocation4 + $0x230] sm:$0xff]
    %v364 = vld [vmem:[#allocation4 + $0x238] sm:$0xff]
    %v365 = vld [vmem:[#allocation4 + $0x240] sm:$0xff]
    %v366 = vld [vmem:[#allocation4 + $0x248] sm:$0xff]
    %v367 = vld [vmem:[#allocation4 + $0x250] sm:$0xff]
    %v368 = vld [vmem:[#allocation4 + $0x258] sm:$0xff]
    %v369 = vld [vmem:[#allocation4 + $0x260] sm:$0xff]
    %v370 = vld [vmem:[#allocation4 + $0x268] sm:$0xff]
    %v371 = vld [vmem:[#allocation4 + $0x270] sm:$0xff]
    %v372 = vld [vmem:[#allocation4 + $0x278] sm:$0xff]
    %v373 = vld [vmem:[#allocation4 + $0x280] sm:$0xff]
    %v374 = vld [vmem:[#allocation4 + $0x288] sm:$0xff]
    %v375 = vld [vmem:[#allocation4 + $0x290] sm:$0xff]
    %v376 = vld [vmem:[#allocation4 + $0x298] sm:$0xff]
    %v377 = vld [vmem:[#allocation4 + $0x2a0] sm:$0xff]
    %v378 = vld [vmem:[#allocation4 + $0x2a8] sm:$0xff]
    %v379 = vld [vmem:[#allocation4 + $0x2b0] sm:$0xff]
    %v380 = vld [vmem:[#allocation4 + $0x2b8] sm:$0xff]
    %v381 = vld [vmem:[#allocation4 + $0x2c0] sm:$0xff]
    %v382 = vld [vmem:[#allocation4 + $0x2c8] sm:$0xff]
    %v383 = vld [vmem:[#allocation4 + $0x2d0] sm:$0xff]
    %v384 = vld [vmem:[#allocation4 + $0x2d8] sm:$0xff]
    %v385 = vld [vmem:[#allocation4 + $0x2e0] sm:$0xff]
    %v386 = vld [vmem:[#allocation4 + $0x2e8] sm:$0xff]
    %v387 = vld [vmem:[#allocation4 + $0x2f0] sm:$0xff]
    %v388 = vld [vmem:[#allocation4 + $0x2f8] sm:$0xff]
    %v389 = vld [vmem:[#allocation4 + $0x300] sm:$0xff]
    %v390 = vld [vmem:[#allocation4 + $0x308] sm:$0xff]
    %v391 = vld [vmem:[#allocation4 + $0x310] sm:$0xff]
    %v392 = vld [vmem:[#allocation4 + $0x318] sm:$0xff]
    %v393 = vld [vmem:[#allocation4 + $0x320] sm:$0xff]
    %v394 = vld [vmem:[#allocation4 + $0x328] sm:$0xff]
    %v395 = vld [vmem:[#allocation4 + $0x330] sm:$0xff]
    %v396 = vld [vmem:[#allocation4 + $0x338] sm:$0xff]
    %v397 = vld [vmem:[#allocation4 + $0x340] sm:$0xff]
    %v398 = vld [vmem:[#allocation4 + $0x348] sm:$0xff]
    %v399 = vld [vmem:[#allocation4 + $0x350] sm:$0xff]
    %v400 = vld [vmem:[#allocation4 + $0x358] sm:$0xff]
    %v401 = vld [vmem:[#allocation4 + $0x360] sm:$0xff]
    %v402 = vld [vmem:[#allocation4 + $0x368] sm:$0xff]
    %v403 = vld [vmem:[#allocation4 + $0x370] sm:$0xff]
    %v404 = vld [vmem:[#allocation4 + $0x378] sm:$0xff]
    %v405 = vld [vmem:[#allocation4 + $0x380] sm:$0xff]
    %v406 = vld [vmem:[#allocation4 + $0x388] sm:$0xff]
    %v407 = vld [vmem:[#allocation4 + $0x390] sm:$0xff]
    %v408 = vld [vmem:[#allocation4 + $0x398] sm:$0xff]
    %v409 = vld [vmem:[#allocation4 + $0x3a0] sm:$0xff]
    %v410 = vld [vmem:[#allocation4 + $0x3a8] sm:$0xff]
    %v411 = vld [vmem:[#allocation4 + $0x3b0] sm:$0xff]
    %v412 = vld [vmem:[#allocation4 + $0x3b8] sm:$0xff]
    %v413 = vld [vmem:[#allocation4 + $0x3c0] sm:$0xff]
    %v414 = vld [vmem:[#allocation4 + $0x3c8] sm:$0xff]
    %v415 = vld [vmem:[#allocation4 + $0x3d0] sm:$0xff]
    %v416 = vld [vmem:[#allocation4 + $0x3d8] sm:$0xff]
    %v417 = vld [vmem:[#allocation4 + $0x3e0] sm:$0xff]
    %v418 = vld [vmem:[#allocation4 + $0x3e8] sm:$0xff]
    %v419 = vld [vmem:[#allocation4 + $0x3f0] sm:$0xff]
    %v420 = vld [vmem:[#allocation4 + $0x3f8] sm:$0xff]
    %v421 = vld [vmem:[#allocation4 + $0x400] sm:$0xff]
    %v422 = vld [vmem:[#allocation4 + $0x408] sm:$0xff]
    %v423 = vld [vmem:[#allocation4 + $0x410] sm:$0xff]
    %v424 = vld [vmem:[#allocation4 + $0x418] sm:$0xff]
    %v425 = vld [vmem:[#allocation4 + $0x420] sm:$0xff]
    %v426 = vld [vmem:[#allocation4 + $0x428] sm:$0xff]
    %v427 = vld [vmem:[#allocation4 + $0x430] sm:$0xff]
    %v428 = vld [vmem:[#allocation4 + $0x438] sm:$0xff]
    %v429 = vld [vmem:[#allocation4 + $0x440] sm:$0xff]
    %v430 = vld [vmem:[#allocation4 + $0x448] sm:$0xff]
    %v431 = vld [vmem:[#allocation4 + $0x450] sm:$0xff]
    %v432 = vld [vmem:[#allocation4 + $0x458] sm:$0xff]
    %v433 = vld [vmem:[#allocation4 + $0x460] sm:$0xff]
    %v434 = vld [vmem:[#allocation4 + $0x468] sm:$0xff]
    %v435 = vld [vmem:[#allocation4 + $0x470] sm:$0xff]
    %v436 = vld [vmem:[#allocation4 + $0x478] sm:$0xff]
    %v437 = vld [vmem:[#allocation4 + $0x480] sm:$0xff]
    %v438 = vld [vmem:[#allocation4 + $0x488] sm:$0xff]
    %v439 = vld [vmem:[#allocation4 + $0x490] sm:$0xff]
    %v440 = vld [vmem:[#allocation4 + $0x498] sm:$0xff]
    %v441 = vld [vmem:[#allocation4 + $0x4a0] sm:$0xff]
    %v442 = vld [vmem:[#allocation4 + $0x4a8] sm:$0xff]
    %v443 = vld [vmem:[#allocation4 + $0x4b0] sm:$0xff]
    %v444 = vld [vmem:[#allocation4 + $0x4b8] sm:$0xff]
    %v445 = vld [vmem:[#allocation4 + $0x4c0] sm:$0xff]
    %v446 = vld [vmem:[#allocation4 + $0x4c8] sm:$0xff]
    %v447 = vld [vmem:[#allocation4 + $0x4d0] sm:$0xff]
    %v448 = vld [vmem:[#allocation4 + $0x4d8] sm:$0xff]
    %v449 = vld [vmem:[#allocation4 + $0x4e0] sm:$0xff]
    %v450 = vld [vmem:[#allocation4 + $0x4e8] sm:$0xff]
    %v451 = vld [vmem:[#allocation4 + $0x4f0] sm:$0xff]
    %v452 = vld [vmem:[#allocation4 + $0x4f8] sm:$0xff]
    %v453 = vld [vmem:[#allocation4 + $0x500] sm:$0xff]
    %v454 = vld [vmem:[#allocation4 + $0x508] sm:$0xff]
    %v455 = vld [vmem:[#allocation4 + $0x510] sm:$0xff]
    %v456 = vld [vmem:[#allocation4 + $0x518] sm:$0xff]
    %v457 = vld [vmem:[#allocation4 + $0x520] sm:$0xff]
    %v458 = vld [vmem:[#allocation4 + $0x528] sm:$0xff]
    %v459 = vld [vmem:[#allocation4 + $0x530] sm:$0xff]
    %v460 = vld [vmem:[#allocation4 + $0x538] sm:$0xff]
    %v461 = vld [vmem:[#allocation4 + $0x540] sm:$0xff]
    %v462 = vld [vmem:[#allocation4 + $0x548] sm:$0xff]
    %v463 = vld [vmem:[#allocation4 + $0x550] sm:$0xff]
    %v464 = vld [vmem:[#allocation4 + $0x558] sm:$0xff]
    %v465 = vld [vmem:[#allocation4 + $0x560] sm:$0xff]
    %v466 = vld [vmem:[#allocation4 + $0x568] sm:$0xff]
    %v467 = vld [vmem:[#allocation4 + $0x570] sm:$0xff]
    %v468 = vld [vmem:[#allocation4 + $0x578] sm:$0xff]
    %v469 = vld [vmem:[#allocation4 + $0x580] sm:$0xff]
    %v470 = vld [vmem:[#allocation4 + $0x588] sm:$0xff]
    %v471 = vld [vmem:[#allocation4 + $0x590] sm:$0xff]
    %v472 = vld [vmem:[#allocation4 + $0x598] sm:$0xff]
    %v473 = vld [vmem:[#allocation4 + $0x5a0] sm:$0xff]
    %v474 = vld [vmem:[#allocation4 + $0x5a8] sm:$0xff]
    %v475 = vld [vmem:[#allocation4 + $0x5b0] sm:$0xff]
    %v476 = vld [vmem:[#allocation4 + $0x5b8] sm:$0xff]
    %v477 = vld [vmem:[#allocation4 + $0x5c0] sm:$0xff]
    %v478 = vld [vmem:[#allocation4 + $0x5c8] sm:$0xff]
    %v479 = vld [vmem:[#allocation4 + $0x5d0] sm:$0xff]
    %v480 = vld [vmem:[#allocation4 + $0x5d8] sm:$0xff]
    %v481 = vld [vmem:[#allocation4 + $0x5e0] sm:$0xff]
    %v482 = vld [vmem:[#allocation4 + $0x5e8] sm:$0xff]
    %v483 = vld [vmem:[#allocation4 + $0x5f0] sm:$0xff]
    %v484 = vld [vmem:[#allocation4 + $0x5f8] sm:$0xff]
    %v485 = vld [vmem:[#allocation4 + $0x600] sm:$0xff]
    %v486 = vld [vmem:[#allocation4 + $0x608] sm:$0xff]
    %v487 = vld [vmem:[#allocation4 + $0x610] sm:$0xff]
    %v488 = vld [vmem:[#allocation4 + $0x618] sm:$0xff]
    %v489 = vld [vmem:[#allocation4 + $0x620] sm:$0xff]
    %v490 = vld [vmem:[#allocation4 + $0x628] sm:$0xff]
    %v491 = vld [vmem:[#allocation4 + $0x630] sm:$0xff]
    %v492 = vld [vmem:[#allocation4 + $0x638] sm:$0xff]
    %v493 = vld [vmem:[#allocation4 + $0x640] sm:$0xff]
    %v494 = vld [vmem:[#allocation4 + $0x648] sm:$0xff]
    %v495 = vld [vmem:[#allocation4 + $0x650] sm:$0xff]
    %v496 = vld [vmem:[#allocation4 + $0x658] sm:$0xff]
    %v497 = vld [vmem:[#allocation4 + $0x660] sm:$0xff]
    %v498 = vld [vmem:[#allocation4 + $0x668] sm:$0xff]
    %v499 = vld [vmem:[#allocation4 + $0x670] sm:$0xff]
    %v500 = vld [vmem:[#allocation4 + $0x678] sm:$0xff]
    %v501 = vld [vmem:[#allocation4 + $0x680] sm:$0xff]
    %v502 = vld [vmem:[#allocation4 + $0x688] sm:$0xff]
    %v503 = vld [vmem:[#allocation4 + $0x690] sm:$0xff]
    %v504 = vld [vmem:[#allocation4 + $0x698] sm:$0xff]
    %v505 = vld [vmem:[#allocation4 + $0x6a0] sm:$0xff]
    %v506 = vld [vmem:[#allocation4 + $0x6a8] sm:$0xff]
    %v507 = vld [vmem:[#allocation4 + $0x6b0] sm:$0xff]
    %v508 = vld [vmem:[#allocation4 + $0x6b8] sm:$0xff]
    %v509 = vld [vmem:[#allocation4 + $0x6c0] sm:$0xff]
    %v510 = vld [vmem:[#allocation4 + $0x6c8] sm:$0xff]
    %v511 = vld [vmem:[#allocation4 + $0x6d0] sm:$0xff]
    %v512 = vld [vmem:[#allocation4 + $0x6d8] sm:$0xff]
    %v513 = vld [vmem:[#allocation4 + $0x6e0] sm:$0xff]
    %v514 = vld [vmem:[#allocation4 + $0x6e8] sm:$0xff]
    %v515 = vld [vmem:[#allocation4 + $0x6f0] sm:$0xff]
    %v516 = vld [vmem:[#allocation4 + $0x6f8] sm:$0xff]
    %v517 = vld [vmem:[#allocation4 + $0x700] sm:$0xff]
    %v518 = vld [vmem:[#allocation4 + $0x708] sm:$0xff]
    %v519 = vld [vmem:[#allocation4 + $0x710] sm:$0xff]
    %v520 = vld [vmem:[#allocation4 + $0x718] sm:$0xff]
    %v521 = vld [vmem:[#allocation4 + $0x720] sm:$0xff]
    %v522 = vld [vmem:[#allocation4 + $0x728] sm:$0xff]
    %v523 = vld [vmem:[#allocation4 + $0x730] sm:$0xff]
    %v524 = vld [vmem:[#allocation4 + $0x738] sm:$0xff]
    %v525 = vld [vmem:[#allocation4 + $0x740] sm:$0xff]
    %v526 = vld [vmem:[#allocation4 + $0x748] sm:$0xff]
    %v527 = vld [vmem:[#allocation4 + $0x750] sm:$0xff]
    %v528 = vld [vmem:[#allocation4 + $0x758] sm:$0xff]
    %v529 = vld [vmem:[#allocation4 + $0x760] sm:$0xff]
    %v530 = vld [vmem:[#allocation4 + $0x768] sm:$0xff]
    %v531 = vld [vmem:[#allocation4 + $0x770] sm:$0xff]
    %v532 = vld [vmem:[#allocation4 + $0x778] sm:$0xff]
    %v533 = vld [vmem:[#allocation4 + $0x780] sm:$0xff]
    %v534 = vld [vmem:[#allocation4 + $0x788] sm:$0xff]
    %v535 = vld [vmem:[#allocation4 + $0x790] sm:$0xff]
    %v536 = vld [vmem:[#allocation4 + $0x798] sm:$0xff]
    %v537 = vld [vmem:[#allocation4 + $0x7a0] sm:$0xff]
    %v538 = vld [vmem:[#allocation4 + $0x7a8] sm:$0xff]
    %v539 = vld [vmem:[#allocation4 + $0x7b0] sm:$0xff]
    %v540 = vld [vmem:[#allocation4 + $0x7b8] sm:$0xff]
    %v541 = vld [vmem:[#allocation4 + $0x7c0] sm:$0xff]
    %v542 = vld [vmem:[#allocation4 + $0x7c8] sm:$0xff]
    %v543 = vld [vmem:[#allocation4 + $0x7d0] sm:$0xff]
    %v544 = vld [vmem:[#allocation4 + $0x7d8] sm:$0xff]
    %v545 = vld [vmem:[#allocation4 + $0x7e0] sm:$0xff]
    %v546 = vld [vmem:[#allocation4 + $0x7e8] sm:$0xff]
    %v547 = vld [vmem:[#allocation4 + $0x7f0] sm:$0xff]
    %v548 = vld [vmem:[#allocation4 + $0x7f8] sm:$0xff]
    %v549 = vld [vmem:[#allocation6] sm:$0xff]
    %v551 = vlaneseq
    %v552 = vshrl.u32 %v551, 7
    %v553 = vsub.s32 0, %v552
    %v554 = vrot.slane %v549, %v553
    %v555 = vlaneseq
    %v556 = vshrl.u32 %v555, 7
    %v557 = vsub.s32 1, %v556
    %v558 = vrot.slane %v549, %v557
    %v559 = vlaneseq
    %v560 = vshrl.u32 %v559, 7
    %v561 = vsub.s32 2, %v560
    %v562 = vrot.slane %v549, %v561
    %v563 = vlaneseq
    %v564 = vshrl.u32 %v563, 7
    %v565 = vsub.s32 3, %v564
    %v566 = vrot.slane %v549, %v565
    %v567 = vlaneseq
    %v568 = vshrl.u32 %v567, 7
    %v569 = vsub.s32 4, %v568
    %v570 = vrot.slane %v549, %v569
    %v571 = vlaneseq
    %v572 = vshrl.u32 %v571, 7
    %v573 = vsub.s32 5, %v572
    %v574 = vrot.slane %v549, %v573
    %v575 = vlaneseq
    %v576 = vshrl.u32 %v575, 7
    %v577 = vsub.s32 6, %v576
    %v578 = vrot.slane %v549, %v577
    %v579 = vlaneseq
    %v580 = vshrl.u32 %v579, 7
    %v581 = vsub.s32 7, %v580
    %v582 = vrot.slane %v549, %v581
    %v847 = vunpack.c.l.b16 %v293
    %v848 = vunpack.c.h.b16 %v293
    %v849 = vunpack.c.l.b16 %v294
    %v850 = vunpack.c.h.b16 %v294
    %v851 = vunpack.c.l.b16 %v295
    %v852 = vunpack.c.h.b16 %v295
    %v853 = vunpack.c.l.b16 %v296
    %v854 = vunpack.c.h.b16 %v296
    %v855 = vunpack.c.l.b16 %v297
    %v856 = vunpack.c.h.b16 %v297
    %v857 = vunpack.c.l.b16 %v298
    %v858 = vunpack.c.h.b16 %v298
    %v859 = vunpack.c.l.b16 %v299
    %v860 = vunpack.c.h.b16 %v299
    %v861 = vunpack.c.l.b16 %v300
    %v862 = vunpack.c.h.b16 %v300
    %v863 = vunpack.c.l.b16 %v301
    %v864 = vunpack.c.h.b16 %v301
    %v865 = vunpack.c.l.b16 %v302
    %v866 = vunpack.c.h.b16 %v302
    %v867 = vunpack.c.l.b16 %v303
    %v868 = vunpack.c.h.b16 %v303
    %v869 = vunpack.c.l.b16 %v304
    %v870 = vunpack.c.h.b16 %v304
    %v871 = vunpack.c.l.b16 %v305
    %v872 = vunpack.c.h.b16 %v305
    %v873 = vunpack.c.l.b16 %v306
    %v874 = vunpack.c.h.b16 %v306
    %v875 = vunpack.c.l.b16 %v307
    %v876 = vunpack.c.h.b16 %v307
    %v877 = vunpack.c.l.b16 %v308
    %v878 = vunpack.c.h.b16 %v308
    %v879 = vunpack.c.l.b16 %v309
    %v880 = vunpack.c.h.b16 %v309
    %v881 = vunpack.c.l.b16 %v310
    %v882 = vunpack.c.h.b16 %v310
    %v883 = vunpack.c.l.b16 %v311
    %v884 = vunpack.c.h.b16 %v311
    %v885 = vunpack.c.l.b16 %v312
    %v886 = vunpack.c.h.b16 %v312
    %v887 = vunpack.c.l.b16 %v313
    %v888 = vunpack.c.h.b16 %v313
    %v889 = vunpack.c.l.b16 %v314
    %v890 = vunpack.c.h.b16 %v314
    %v891 = vunpack.c.l.b16 %v315
    %v892 = vunpack.c.h.b16 %v315
    %v893 = vunpack.c.l.b16 %v316
    %v894 = vunpack.c.h.b16 %v316
    %v895 = vunpack.c.l.b16 %v317
    %v896 = vunpack.c.h.b16 %v317
    %v897 = vunpack.c.l.b16 %v318
    %v898 = vunpack.c.h.b16 %v318
    %v899 = vunpack.c.l.b16 %v319
    %v900 = vunpack.c.h.b16 %v319
    %v901 = vunpack.c.l.b16 %v320
    %v902 = vunpack.c.h.b16 %v320
    %v903 = vunpack.c.l.b16 %v321
    %v904 = vunpack.c.h.b16 %v321
    %v905 = vunpack.c.l.b16 %v322
    %v906 = vunpack.c.h.b16 %v322
    %v907 = vunpack.c.l.b16 %v323
    %v908 = vunpack.c.h.b16 %v323
    %v909 = vunpack.c.l.b16 %v324
    %v910 = vunpack.c.h.b16 %v324
    %v911 = vunpack.c.l.b16 %v325
    %v912 = vunpack.c.h.b16 %v325
    %v913 = vunpack.c.l.b16 %v326
    %v914 = vunpack.c.h.b16 %v326
    %v915 = vunpack.c.l.b16 %v327
    %v916 = vunpack.c.h.b16 %v327
    %v917 = vunpack.c.l.b16 %v328
    %v918 = vunpack.c.h.b16 %v328
    %v919 = vunpack.c.l.b16 %v329
    %v920 = vunpack.c.h.b16 %v329
    %v921 = vunpack.c.l.b16 %v330
    %v922 = vunpack.c.h.b16 %v330
    %v923 = vunpack.c.l.b16 %v331
    %v924 = vunpack.c.h.b16 %v331
    %v925 = vunpack.c.l.b16 %v332
    %v926 = vunpack.c.h.b16 %v332
    %v927 = vunpack.c.l.b16 %v333
    %v928 = vunpack.c.h.b16 %v333
    %v929 = vunpack.c.l.b16 %v334
    %v930 = vunpack.c.h.b16 %v334
    %v931 = vunpack.c.l.b16 %v335
    %v932 = vunpack.c.h.b16 %v335
    %v933 = vunpack.c.l.b16 %v336
    %v934 = vunpack.c.h.b16 %v336
    %v935 = vunpack.c.l.b16 %v337
    %v936 = vunpack.c.h.b16 %v337
    %v937 = vunpack.c.l.b16 %v338
    %v938 = vunpack.c.h.b16 %v338
    %v939 = vunpack.c.l.b16 %v339
    %v940 = vunpack.c.h.b16 %v339
    %v941 = vunpack.c.l.b16 %v340
    %v942 = vunpack.c.h.b16 %v340
    %v943 = vunpack.c.l.b16 %v341
    %v944 = vunpack.c.h.b16 %v341
    %v945 = vunpack.c.l.b16 %v342
    %v946 = vunpack.c.h.b16 %v342
    %v947 = vunpack.c.l.b16 %v343
    %v948 = vunpack.c.h.b16 %v343
    %v949 = vunpack.c.l.b16 %v344
    %v950 = vunpack.c.h.b16 %v344
    %v951 = vunpack.c.l.b16 %v345
    %v952 = vunpack.c.h.b16 %v345
    %v953 = vunpack.c.l.b16 %v346
    %v954 = vunpack.c.h.b16 %v346
    %v955 = vunpack.c.l.b16 %v347
    %v956 = vunpack.c.h.b16 %v347
    %v957 = vunpack.c.l.b16 %v348
    %v958 = vunpack.c.h.b16 %v348
    %v959 = vunpack.c.l.b16 %v349
    %v960 = vunpack.c.h.b16 %v349
    %v961 = vunpack.c.l.b16 %v350
    %v962 = vunpack.c.h.b16 %v350
    %v963 = vunpack.c.l.b16 %v351
    %v964 = vunpack.c.h.b16 %v351
    %v965 = vunpack.c.l.b16 %v352
    %v966 = vunpack.c.h.b16 %v352
    %v967 = vunpack.c.l.b16 %v353
    %v968 = vunpack.c.h.b16 %v353
    %v969 = vunpack.c.l.b16 %v354
    %v970 = vunpack.c.h.b16 %v354
    %v971 = vunpack.c.l.b16 %v355
    %v972 = vunpack.c.h.b16 %v355
    %v973 = vunpack.c.l.b16 %v356
    %v974 = vunpack.c.h.b16 %v356
    %v975 = vunpack.c.l.b16 %v357
    %v976 = vunpack.c.h.b16 %v357
    %v977 = vunpack.c.l.b16 %v358
    %v978 = vunpack.c.h.b16 %v358
    %v979 = vunpack.c.l.b16 %v359
    %v980 = vunpack.c.h.b16 %v359
    %v981 = vunpack.c.l.b16 %v360
    %v982 = vunpack.c.h.b16 %v360
    %v983 = vunpack.c.l.b16 %v361
    %v984 = vunpack.c.h.b16 %v361
    %v985 = vunpack.c.l.b16 %v362
    %v986 = vunpack.c.h.b16 %v362
    %v987 = vunpack.c.l.b16 %v363
    %v988 = vunpack.c.h.b16 %v363
    %v989 = vunpack.c.l.b16 %v364
    %v990 = vunpack.c.h.b16 %v364
    %v991 = vunpack.c.l.b16 %v365
    %v992 = vunpack.c.h.b16 %v365
    %v993 = vunpack.c.l.b16 %v366
    %v994 = vunpack.c.h.b16 %v366
    %v995 = vunpack.c.l.b16 %v367
    %v996 = vunpack.c.h.b16 %v367
    %v997 = vunpack.c.l.b16 %v368
    %v998 = vunpack.c.h.b16 %v368
    %v999 = vunpack.c.l.b16 %v369
    %v1000 = vunpack.c.h.b16 %v369
    %v1001 = vunpack.c.l.b16 %v370
    %v1002 = vunpack.c.h.b16 %v370
    %v1003 = vunpack.c.l.b16 %v371
    %v1004 = vunpack.c.h.b16 %v371
    %v1005 = vunpack.c.l.b16 %v372
    %v1006 = vunpack.c.h.b16 %v372
    %v1007 = vunpack.c.l.b16 %v373
    %v1008 = vunpack.c.h.b16 %v373
    %v1009 = vunpack.c.l.b16 %v374
    %v1010 = vunpack.c.h.b16 %v374
    %v1011 = vunpack.c.l.b16 %v375
    %v1012 = vunpack.c.h.b16 %v375
    %v1013 = vunpack.c.l.b16 %v376
    %v1014 = vunpack.c.h.b16 %v376
    %v1015 = vunpack.c.l.b16 %v377
    %v1016 = vunpack.c.h.b16 %v377
    %v1017 = vunpack.c.l.b16 %v378
    %v1018 = vunpack.c.h.b16 %v378
    %v1019 = vunpack.c.l.b16 %v379
    %v1020 = vunpack.c.h.b16 %v379
    %v1021 = vunpack.c.l.b16 %v380
    %v1022 = vunpack.c.h.b16 %v380
    %v1023 = vunpack.c.l.b16 %v381
    %v1024 = vunpack.c.h.b16 %v381
    %v1025 = vunpack.c.l.b16 %v382
    %v1026 = vunpack.c.h.b16 %v382
    %v1027 = vunpack.c.l.b16 %v383
    %v1028 = vunpack.c.h.b16 %v383
    %v1029 = vunpack.c.l.b16 %v384
    %v1030 = vunpack.c.h.b16 %v384
    %v1031 = vunpack.c.l.b16 %v385
    %v1032 = vunpack.c.h.b16 %v385
    %v1033 = vunpack.c.l.b16 %v386
    %v1034 = vunpack.c.h.b16 %v386
    %v1035 = vunpack.c.l.b16 %v387
    %v1036 = vunpack.c.h.b16 %v387
    %v1037 = vunpack.c.l.b16 %v388
    %v1038 = vunpack.c.h.b16 %v388
    %v1039 = vunpack.c.l.b16 %v389
    %v1040 = vunpack.c.h.b16 %v389
    %v1041 = vunpack.c.l.b16 %v390
    %v1042 = vunpack.c.h.b16 %v390
    %v1043 = vunpack.c.l.b16 %v391
    %v1044 = vunpack.c.h.b16 %v391
    %v1045 = vunpack.c.l.b16 %v392
    %v1046 = vunpack.c.h.b16 %v392
    %v1047 = vunpack.c.l.b16 %v393
    %v1048 = vunpack.c.h.b16 %v393
    %v1049 = vunpack.c.l.b16 %v394
    %v1050 = vunpack.c.h.b16 %v394
    %v1051 = vunpack.c.l.b16 %v395
    %v1052 = vunpack.c.h.b16 %v395
    %v1053 = vunpack.c.l.b16 %v396
    %v1054 = vunpack.c.h.b16 %v396
    %v1055 = vunpack.c.l.b16 %v397
    %v1056 = vunpack.c.h.b16 %v397
    %v1057 = vunpack.c.l.b16 %v398
    %v1058 = vunpack.c.h.b16 %v398
    %v1059 = vunpack.c.l.b16 %v399
    %v1060 = vunpack.c.h.b16 %v399
    %v1061 = vunpack.c.l.b16 %v400
    %v1062 = vunpack.c.h.b16 %v400
    %v1063 = vunpack.c.l.b16 %v401
    %v1064 = vunpack.c.h.b16 %v401
    %v1065 = vunpack.c.l.b16 %v402
    %v1066 = vunpack.c.h.b16 %v402
    %v1067 = vunpack.c.l.b16 %v403
    %v1068 = vunpack.c.h.b16 %v403
    %v1069 = vunpack.c.l.b16 %v404
    %v1070 = vunpack.c.h.b16 %v404
    %v1071 = vunpack.c.l.b16 %v405
    %v1072 = vunpack.c.h.b16 %v405
    %v1073 = vunpack.c.l.b16 %v406
    %v1074 = vunpack.c.h.b16 %v406
    %v1075 = vunpack.c.l.b16 %v407
    %v1076 = vunpack.c.h.b16 %v407
    %v1077 = vunpack.c.l.b16 %v408
    %v1078 = vunpack.c.h.b16 %v408
    %v1079 = vunpack.c.l.b16 %v409
    %v1080 = vunpack.c.h.b16 %v409
    %v1081 = vunpack.c.l.b16 %v410
    %v1082 = vunpack.c.h.b16 %v410
    %v1083 = vunpack.c.l.b16 %v411
    %v1084 = vunpack.c.h.b16 %v411
    %v1085 = vunpack.c.l.b16 %v412
    %v1086 = vunpack.c.h.b16 %v412
    %v1087 = vunpack.c.l.b16 %v413
    %v1088 = vunpack.c.h.b16 %v413
    %v1089 = vunpack.c.l.b16 %v414
    %v1090 = vunpack.c.h.b16 %v414
    %v1091 = vunpack.c.l.b16 %v415
    %v1092 = vunpack.c.h.b16 %v415
    %v1093 = vunpack.c.l.b16 %v416
    %v1094 = vunpack.c.h.b16 %v416
    %v1095 = vunpack.c.l.b16 %v417
    %v1096 = vunpack.c.h.b16 %v417
    %v1097 = vunpack.c.l.b16 %v418
    %v1098 = vunpack.c.h.b16 %v418
    %v1099 = vunpack.c.l.b16 %v419
    %v1100 = vunpack.c.h.b16 %v419
    %v1101 = vunpack.c.l.b16 %v420
    %v1102 = vunpack.c.h.b16 %v420
    %v1103 = vunpack.c.l.b16 %v421
    %v1104 = vunpack.c.h.b16 %v421
    %v1105 = vunpack.c.l.b16 %v422
    %v1106 = vunpack.c.h.b16 %v422
    %v1107 = vunpack.c.l.b16 %v423
    %v1108 = vunpack.c.h.b16 %v423
    %v1109 = vunpack.c.l.b16 %v424
    %v1110 = vunpack.c.h.b16 %v424
    %v1111 = vunpack.c.l.b16 %v425
    %v1112 = vunpack.c.h.b16 %v425
    %v1113 = vunpack.c.l.b16 %v426
    %v1114 = vunpack.c.h.b16 %v426
    %v1115 = vunpack.c.l.b16 %v427
    %v1116 = vunpack.c.h.b16 %v427
    %v1117 = vunpack.c.l.b16 %v428
    %v1118 = vunpack.c.h.b16 %v428
    %v1119 = vunpack.c.l.b16 %v429
    %v1120 = vunpack.c.h.b16 %v429
    %v1121 = vunpack.c.l.b16 %v430
    %v1122 = vunpack.c.h.b16 %v430
    %v1123 = vunpack.c.l.b16 %v431
    %v1124 = vunpack.c.h.b16 %v431
    %v1125 = vunpack.c.l.b16 %v432
    %v1126 = vunpack.c.h.b16 %v432
    %v1127 = vunpack.c.l.b16 %v433
    %v1128 = vunpack.c.h.b16 %v433
    %v1129 = vunpack.c.l.b16 %v434
    %v1130 = vunpack.c.h.b16 %v434
    %v1131 = vunpack.c.l.b16 %v435
    %v1132 = vunpack.c.h.b16 %v435
    %v1133 = vunpack.c.l.b16 %v436
    %v1134 = vunpack.c.h.b16 %v436
    %v1135 = vunpack.c.l.b16 %v437
    %v1136 = vunpack.c.h.b16 %v437
    %v1137 = vunpack.c.l.b16 %v438
    %v1138 = vunpack.c.h.b16 %v438
    %v1139 = vunpack.c.l.b16 %v439
    %v1140 = vunpack.c.h.b16 %v439
    %v1141 = vunpack.c.l.b16 %v440
    %v1142 = vunpack.c.h.b16 %v440
    %v1143 = vunpack.c.l.b16 %v441
    %v1144 = vunpack.c.h.b16 %v441
    %v1145 = vunpack.c.l.b16 %v442
    %v1146 = vunpack.c.h.b16 %v442
    %v1147 = vunpack.c.l.b16 %v443
    %v1148 = vunpack.c.h.b16 %v443
    %v1149 = vunpack.c.l.b16 %v444
    %v1150 = vunpack.c.h.b16 %v444
    %v1151 = vunpack.c.l.b16 %v445
    %v1152 = vunpack.c.h.b16 %v445
    %v1153 = vunpack.c.l.b16 %v446
    %v1154 = vunpack.c.h.b16 %v446
    %v1155 = vunpack.c.l.b16 %v447
    %v1156 = vunpack.c.h.b16 %v447
    %v1157 = vunpack.c.l.b16 %v448
    %v1158 = vunpack.c.h.b16 %v448
    %v1159 = vunpack.c.l.b16 %v449
    %v1160 = vunpack.c.h.b16 %v449
    %v1161 = vunpack.c.l.b16 %v450
    %v1162 = vunpack.c.h.b16 %v450
    %v1163 = vunpack.c.l.b16 %v451
    %v1164 = vunpack.c.h.b16 %v451
    %v1165 = vunpack.c.l.b16 %v452
    %v1166 = vunpack.c.h.b16 %v452
    %v1167 = vunpack.c.l.b16 %v453
    %v1168 = vunpack.c.h.b16 %v453
    %v1169 = vunpack.c.l.b16 %v454
    %v1170 = vunpack.c.h.b16 %v454
    %v1171 = vunpack.c.l.b16 %v455
    %v1172 = vunpack.c.h.b16 %v455
    %v1173 = vunpack.c.l.b16 %v456
    %v1174 = vunpack.c.h.b16 %v456
    %v1175 = vunpack.c.l.b16 %v457
    %v1176 = vunpack.c.h.b16 %v457
    %v1177 = vunpack.c.l.b16 %v458
    %v1178 = vunpack.c.h.b16 %v458
    %v1179 = vunpack.c.l.b16 %v459
    %v1180 = vunpack.c.h.b16 %v459
    %v1181 = vunpack.c.l.b16 %v460
    %v1182 = vunpack.c.h.b16 %v460
    %v1183 = vunpack.c.l.b16 %v461
    %v1184 = vunpack.c.h.b16 %v461
    %v1185 = vunpack.c.l.b16 %v462
    %v1186 = vunpack.c.h.b16 %v462
    %v1187 = vunpack.c.l.b16 %v463
    %v1188 = vunpack.c.h.b16 %v463
    %v1189 = vunpack.c.l.b16 %v464
    %v1190 = vunpack.c.h.b16 %v464
    %v1191 = vunpack.c.l.b16 %v465
    %v1192 = vunpack.c.h.b16 %v465
    %v1193 = vunpack.c.l.b16 %v466
    %v1194 = vunpack.c.h.b16 %v466
    %v1195 = vunpack.c.l.b16 %v467
    %v1196 = vunpack.c.h.b16 %v467
    %v1197 = vunpack.c.l.b16 %v468
    %v1198 = vunpack.c.h.b16 %v468
    %v1199 = vunpack.c.l.b16 %v469
    %v1200 = vunpack.c.h.b16 %v469
    %v1201 = vunpack.c.l.b16 %v470
    %v1202 = vunpack.c.h.b16 %v470
    %v1203 = vunpack.c.l.b16 %v471
    %v1204 = vunpack.c.h.b16 %v471
    %v1205 = vunpack.c.l.b16 %v472
    %v1206 = vunpack.c.h.b16 %v472
    %v1207 = vunpack.c.l.b16 %v473
    %v1208 = vunpack.c.h.b16 %v473
    %v1209 = vunpack.c.l.b16 %v474
    %v1210 = vunpack.c.h.b16 %v474
    %v1211 = vunpack.c.l.b16 %v475
    %v1212 = vunpack.c.h.b16 %v475
    %v1213 = vunpack.c.l.b16 %v476
    %v1214 = vunpack.c.h.b16 %v476
    %v1215 = vunpack.c.l.b16 %v477
    %v1216 = vunpack.c.h.b16 %v477
    %v1217 = vunpack.c.l.b16 %v478
    %v1218 = vunpack.c.h.b16 %v478
    %v1219 = vunpack.c.l.b16 %v479
    %v1220 = vunpack.c.h.b16 %v479
    %v1221 = vunpack.c.l.b16 %v480
    %v1222 = vunpack.c.h.b16 %v480
    %v1223 = vunpack.c.l.b16 %v481
    %v1224 = vunpack.c.h.b16 %v481
    %v1225 = vunpack.c.l.b16 %v482
    %v1226 = vunpack.c.h.b16 %v482
    %v1227 = vunpack.c.l.b16 %v483
    %v1228 = vunpack.c.h.b16 %v483
    %v1229 = vunpack.c.l.b16 %v484
    %v1230 = vunpack.c.h.b16 %v484
    %v1231 = vunpack.c.l.b16 %v485
    %v1232 = vunpack.c.h.b16 %v485
    %v1233 = vunpack.c.l.b16 %v486
    %v1234 = vunpack.c.h.b16 %v486
    %v1235 = vunpack.c.l.b16 %v487
    %v1236 = vunpack.c.h.b16 %v487
    %v1237 = vunpack.c.l.b16 %v488
    %v1238 = vunpack.c.h.b16 %v488
    %v1239 = vunpack.c.l.b16 %v489
    %v1240 = vunpack.c.h.b16 %v489
    %v1241 = vunpack.c.l.b16 %v490
    %v1242 = vunpack.c.h.b16 %v490
    %v1243 = vunpack.c.l.b16 %v491
    %v1244 = vunpack.c.h.b16 %v491
    %v1245 = vunpack.c.l.b16 %v492
    %v1246 = vunpack.c.h.b16 %v492
    %v1247 = vunpack.c.l.b16 %v493
    %v1248 = vunpack.c.h.b16 %v493
    %v1249 = vunpack.c.l.b16 %v494
    %v1250 = vunpack.c.h.b16 %v494
    %v1251 = vunpack.c.l.b16 %v495
    %v1252 = vunpack.c.h.b16 %v495
    %v1253 = vunpack.c.l.b16 %v496
    %v1254 = vunpack.c.h.b16 %v496
    %v1255 = vunpack.c.l.b16 %v497
    %v1256 = vunpack.c.h.b16 %v497
    %v1257 = vunpack.c.l.b16 %v498
    %v1258 = vunpack.c.h.b16 %v498
    %v1259 = vunpack.c.l.b16 %v499
    %v1260 = vunpack.c.h.b16 %v499
    %v1261 = vunpack.c.l.b16 %v500
    %v1262 = vunpack.c.h.b16 %v500
    %v1263 = vunpack.c.l.b16 %v501
    %v1264 = vunpack.c.h.b16 %v501
    %v1265 = vunpack.c.l.b16 %v502
    %v1266 = vunpack.c.h.b16 %v502
    %v1267 = vunpack.c.l.b16 %v503
    %v1268 = vunpack.c.h.b16 %v503
    %v1269 = vunpack.c.l.b16 %v504
    %v1270 = vunpack.c.h.b16 %v504
    %v1271 = vunpack.c.l.b16 %v505
    %v1272 = vunpack.c.h.b16 %v505
    %v1273 = vunpack.c.l.b16 %v506
    %v1274 = vunpack.c.h.b16 %v506
    %v1275 = vunpack.c.l.b16 %v507
    %v1276 = vunpack.c.h.b16 %v507
    %v1277 = vunpack.c.l.b16 %v508
    %v1278 = vunpack.c.h.b16 %v508
    %v1279 = vunpack.c.l.b16 %v509
    %v1280 = vunpack.c.h.b16 %v509
    %v1281 = vunpack.c.l.b16 %v510
    %v1282 = vunpack.c.h.b16 %v510
    %v1283 = vunpack.c.l.b16 %v511
    %v1284 = vunpack.c.h.b16 %v511
    %v1285 = vunpack.c.l.b16 %v512
    %v1286 = vunpack.c.h.b16 %v512
    %v1287 = vunpack.c.l.b16 %v513
    %v1288 = vunpack.c.h.b16 %v513
    %v1289 = vunpack.c.l.b16 %v514
    %v1290 = vunpack.c.h.b16 %v514
    %v1291 = vunpack.c.l.b16 %v515
    %v1292 = vunpack.c.h.b16 %v515
    %v1293 = vunpack.c.l.b16 %v516
    %v1294 = vunpack.c.h.b16 %v516
    %v1295 = vunpack.c.l.b16 %v517
    %v1296 = vunpack.c.h.b16 %v517
    %v1297 = vunpack.c.l.b16 %v518
    %v1298 = vunpack.c.h.b16 %v518
    %v1299 = vunpack.c.l.b16 %v519
    %v1300 = vunpack.c.h.b16 %v519
    %v1301 = vunpack.c.l.b16 %v520
    %v1302 = vunpack.c.h.b16 %v520
    %v1303 = vunpack.c.l.b16 %v521
    %v1304 = vunpack.c.h.b16 %v521
    %v1305 = vunpack.c.l.b16 %v522
    %v1306 = vunpack.c.h.b16 %v522
    %v1307 = vunpack.c.l.b16 %v523
    %v1308 = vunpack.c.h.b16 %v523
    %v1309 = vunpack.c.l.b16 %v524
    %v1310 = vunpack.c.h.b16 %v524
    %v1311 = vunpack.c.l.b16 %v525
    %v1312 = vunpack.c.h.b16 %v525
    %v1313 = vunpack.c.l.b16 %v526
    %v1314 = vunpack.c.h.b16 %v526
    %v1315 = vunpack.c.l.b16 %v527
    %v1316 = vunpack.c.h.b16 %v527
    %v1317 = vunpack.c.l.b16 %v528
    %v1318 = vunpack.c.h.b16 %v528
    %v1319 = vunpack.c.l.b16 %v529
    %v1320 = vunpack.c.h.b16 %v529
    %v1321 = vunpack.c.l.b16 %v530
    %v1322 = vunpack.c.h.b16 %v530
    %v1323 = vunpack.c.l.b16 %v531
    %v1324 = vunpack.c.h.b16 %v531
    %v1325 = vunpack.c.l.b16 %v532
    %v1326 = vunpack.c.h.b16 %v532
    %v1327 = vunpack.c.l.b16 %v533
    %v1328 = vunpack.c.h.b16 %v533
    %v1329 = vunpack.c.l.b16 %v534
    %v1330 = vunpack.c.h.b16 %v534
    %v1331 = vunpack.c.l.b16 %v535
    %v1332 = vunpack.c.h.b16 %v535
    %v1333 = vunpack.c.l.b16 %v536
    %v1334 = vunpack.c.h.b16 %v536
    %v1335 = vunpack.c.l.b16 %v537
    %v1336 = vunpack.c.h.b16 %v537
    %v1337 = vunpack.c.l.b16 %v538
    %v1338 = vunpack.c.h.b16 %v538
    %v1339 = vunpack.c.l.b16 %v539
    %v1340 = vunpack.c.h.b16 %v539
    %v1341 = vunpack.c.l.b16 %v540
    %v1342 = vunpack.c.h.b16 %v540
    %v1343 = vunpack.c.l.b16 %v541
    %v1344 = vunpack.c.h.b16 %v541
    %v1345 = vunpack.c.l.b16 %v542
    %v1346 = vunpack.c.h.b16 %v542
    %v1347 = vunpack.c.l.b16 %v543
    %v1348 = vunpack.c.h.b16 %v543
    %v1349 = vunpack.c.l.b16 %v544
    %v1350 = vunpack.c.h.b16 %v544
    %v1351 = vunpack.c.l.b16 %v545
    %v1352 = vunpack.c.h.b16 %v545
    %v1353 = vunpack.c.l.b16 %v546
    %v1354 = vunpack.c.h.b16 %v546
    %v1355 = vunpack.c.l.b16 %v547
    %v1356 = vunpack.c.h.b16 %v547
    %v1357 = vunpack.c.l.b16 %v548
    %v1358 = vunpack.c.h.b16 %v548
    %v1359 = vpack.c.b16 %v855, %v847
    %v1360 = vpack.c.b16 %v856, %v848
    %v1361 = vpack.c.b16 %v857, %v849
    %v1362 = vpack.c.b16 %v858, %v850
    %v1363 = vpack.c.b16 %v859, %v851
    %v1364 = vpack.c.b16 %v860, %v852
    %v1365 = vpack.c.b16 %v861, %v853
    %v1366 = vpack.c.b16 %v862, %v854
    %v1367 = vpack.c.b16 %v871, %v863
    %v1368 = vpack.c.b16 %v872, %v864
    %v1369 = vpack.c.b16 %v873, %v865
    %v1370 = vpack.c.b16 %v874, %v866
    %v1371 = vpack.c.b16 %v875, %v867
    %v1372 = vpack.c.b16 %v876, %v868
    %v1373 = vpack.c.b16 %v877, %v869
    %v1374 = vpack.c.b16 %v878, %v870
    %v1375 = vpack.c.b16 %v887, %v879
    %v1376 = vpack.c.b16 %v888, %v880
    %v1377 = vpack.c.b16 %v889, %v881
    %v1378 = vpack.c.b16 %v890, %v882
    %v1379 = vpack.c.b16 %v891, %v883
    %v1380 = vpack.c.b16 %v892, %v884
    %v1381 = vpack.c.b16 %v893, %v885
    %v1382 = vpack.c.b16 %v894, %v886
    %v1383 = vpack.c.b16 %v903, %v895
    %v1384 = vpack.c.b16 %v904, %v896
    %v1385 = vpack.c.b16 %v905, %v897
    %v1386 = vpack.c.b16 %v906, %v898
    %v1387 = vpack.c.b16 %v907, %v899
    %v1388 = vpack.c.b16 %v908, %v900
    %v1389 = vpack.c.b16 %v909, %v901
    %v1390 = vpack.c.b16 %v910, %v902
    %v1391 = vpack.c.b16 %v919, %v911
    %v1392 = vpack.c.b16 %v920, %v912
    %v1393 = vpack.c.b16 %v921, %v913
    %v1394 = vpack.c.b16 %v922, %v914
    %v1395 = vpack.c.b16 %v923, %v915
    %v1396 = vpack.c.b16 %v924, %v916
    %v1397 = vpack.c.b16 %v925, %v917
    %v1398 = vpack.c.b16 %v926, %v918
    %v1399 = vpack.c.b16 %v935, %v927
    %v1400 = vpack.c.b16 %v936, %v928
    %v1401 = vpack.c.b16 %v937, %v929
    %v1402 = vpack.c.b16 %v938, %v930
    %v1403 = vpack.c.b16 %v939, %v931
    %v1404 = vpack.c.b16 %v940, %v932
    %v1405 = vpack.c.b16 %v941, %v933
    %v1406 = vpack.c.b16 %v942, %v934
    %v1407 = vpack.c.b16 %v951, %v943
    %v1408 = vpack.c.b16 %v952, %v944
    %v1409 = vpack.c.b16 %v953, %v945
    %v1410 = vpack.c.b16 %v954, %v946
    %v1411 = vpack.c.b16 %v955, %v947
    %v1412 = vpack.c.b16 %v956, %v948
    %v1413 = vpack.c.b16 %v957, %v949
    %v1414 = vpack.c.b16 %v958, %v950
    %v1415 = vpack.c.b16 %v967, %v959
    %v1416 = vpack.c.b16 %v968, %v960
    %v1417 = vpack.c.b16 %v969, %v961
    %v1418 = vpack.c.b16 %v970, %v962
    %v1419 = vpack.c.b16 %v971, %v963
    %v1420 = vpack.c.b16 %v972, %v964
    %v1421 = vpack.c.b16 %v973, %v965
    %v1422 = vpack.c.b16 %v974, %v966
    %v1423 = vpack.c.b16 %v983, %v975
    %v1424 = vpack.c.b16 %v984, %v976
    %v1425 = vpack.c.b16 %v985, %v977
    %v1426 = vpack.c.b16 %v986, %v978
    %v1427 = vpack.c.b16 %v987, %v979
    %v1428 = vpack.c.b16 %v988, %v980
    %v1429 = vpack.c.b16 %v989, %v981
    %v1430 = vpack.c.b16 %v990, %v982
    %v1431 = vpack.c.b16 %v999, %v991
    %v1432 = vpack.c.b16 %v1000, %v992
    %v1433 = vpack.c.b16 %v1001, %v993
    %v1434 = vpack.c.b16 %v1002, %v994
    %v1435 = vpack.c.b16 %v1003, %v995
    %v1436 = vpack.c.b16 %v1004, %v996
    %v1437 = vpack.c.b16 %v1005, %v997
    %v1438 = vpack.c.b16 %v1006, %v998
    %v1439 = vpack.c.b16 %v1015, %v1007
    %v1440 = vpack.c.b16 %v1016, %v1008
    %v1441 = vpack.c.b16 %v1017, %v1009
    %v1442 = vpack.c.b16 %v1018, %v1010
    %v1443 = vpack.c.b16 %v1019, %v1011
    %v1444 = vpack.c.b16 %v1020, %v1012
    %v1445 = vpack.c.b16 %v1021, %v1013
    %v1446 = vpack.c.b16 %v1022, %v1014
    %v1447 = vpack.c.b16 %v1031, %v1023
    %v1448 = vpack.c.b16 %v1032, %v1024
    %v1449 = vpack.c.b16 %v1033, %v1025
    %v1450 = vpack.c.b16 %v1034, %v1026
    %v1451 = vpack.c.b16 %v1035, %v1027
    %v1452 = vpack.c.b16 %v1036, %v1028
    %v1453 = vpack.c.b16 %v1037, %v1029
    %v1454 = vpack.c.b16 %v1038, %v1030
    %v1455 = vpack.c.b16 %v1047, %v1039
    %v1456 = vpack.c.b16 %v1048, %v1040
    %v1457 = vpack.c.b16 %v1049, %v1041
    %v1458 = vpack.c.b16 %v1050, %v1042
    %v1459 = vpack.c.b16 %v1051, %v1043
    %v1460 = vpack.c.b16 %v1052, %v1044
    %v1461 = vpack.c.b16 %v1053, %v1045
    %v1462 = vpack.c.b16 %v1054, %v1046
    %v1463 = vpack.c.b16 %v1063, %v1055
    %v1464 = vpack.c.b16 %v1064, %v1056
    %v1465 = vpack.c.b16 %v1065, %v1057
    %v1466 = vpack.c.b16 %v1066, %v1058
    %v1467 = vpack.c.b16 %v1067, %v1059
    %v1468 = vpack.c.b16 %v1068, %v1060
    %v1469 = vpack.c.b16 %v1069, %v1061
    %v1470 = vpack.c.b16 %v1070, %v1062
    %v1471 = vpack.c.b16 %v1079, %v1071
    %v1472 = vpack.c.b16 %v1080, %v1072
    %v1473 = vpack.c.b16 %v1081, %v1073
    %v1474 = vpack.c.b16 %v1082, %v1074
    %v1475 = vpack.c.b16 %v1083, %v1075
    %v1476 = vpack.c.b16 %v1084, %v1076
    %v1477 = vpack.c.b16 %v1085, %v1077
    %v1478 = vpack.c.b16 %v1086, %v1078
    %v1479 = vpack.c.b16 %v1095, %v1087
    %v1480 = vpack.c.b16 %v1096, %v1088
    %v1481 = vpack.c.b16 %v1097, %v1089
    %v1482 = vpack.c.b16 %v1098, %v1090
    %v1483 = vpack.c.b16 %v1099, %v1091
    %v1484 = vpack.c.b16 %v1100, %v1092
    %v1485 = vpack.c.b16 %v1101, %v1093
    %v1486 = vpack.c.b16 %v1102, %v1094
    %v1487 = vpack.c.b16 %v1111, %v1103
    %v1488 = vpack.c.b16 %v1112, %v1104
    %v1489 = vpack.c.b16 %v1113, %v1105
    %v1490 = vpack.c.b16 %v1114, %v1106
    %v1491 = vpack.c.b16 %v1115, %v1107
    %v1492 = vpack.c.b16 %v1116, %v1108
    %v1493 = vpack.c.b16 %v1117, %v1109
    %v1494 = vpack.c.b16 %v1118, %v1110
    %v1495 = vpack.c.b16 %v1127, %v1119
    %v1496 = vpack.c.b16 %v1128, %v1120
    %v1497 = vpack.c.b16 %v1129, %v1121
    %v1498 = vpack.c.b16 %v1130, %v1122
    %v1499 = vpack.c.b16 %v1131, %v1123
    %v1500 = vpack.c.b16 %v1132, %v1124
    %v1501 = vpack.c.b16 %v1133, %v1125
    %v1502 = vpack.c.b16 %v1134, %v1126
    %v1503 = vpack.c.b16 %v1143, %v1135
    %v1504 = vpack.c.b16 %v1144, %v1136
    %v1505 = vpack.c.b16 %v1145, %v1137
    %v1506 = vpack.c.b16 %v1146, %v1138
    %v1507 = vpack.c.b16 %v1147, %v1139
    %v1508 = vpack.c.b16 %v1148, %v1140
    %v1509 = vpack.c.b16 %v1149, %v1141
    %v1510 = vpack.c.b16 %v1150, %v1142
    %v1511 = vpack.c.b16 %v1159, %v1151
    %v1512 = vpack.c.b16 %v1160, %v1152
    %v1513 = vpack.c.b16 %v1161, %v1153
    %v1514 = vpack.c.b16 %v1162, %v1154
    %v1515 = vpack.c.b16 %v1163, %v1155
    %v1516 = vpack.c.b16 %v1164, %v1156
    %v1517 = vpack.c.b16 %v1165, %v1157
    %v1518 = vpack.c.b16 %v1166, %v1158
    %v1519 = vpack.c.b16 %v1175, %v1167
    %v1520 = vpack.c.b16 %v1176, %v1168
    %v1521 = vpack.c.b16 %v1177, %v1169
    %v1522 = vpack.c.b16 %v1178, %v1170
    %v1523 = vpack.c.b16 %v1179, %v1171
    %v1524 = vpack.c.b16 %v1180, %v1172
    %v1525 = vpack.c.b16 %v1181, %v1173
    %v1526 = vpack.c.b16 %v1182, %v1174
    %v1527 = vpack.c.b16 %v1191, %v1183
    %v1528 = vpack.c.b16 %v1192, %v1184
    %v1529 = vpack.c.b16 %v1193, %v1185
    %v1530 = vpack.c.b16 %v1194, %v1186
    %v1531 = vpack.c.b16 %v1195, %v1187
    %v1532 = vpack.c.b16 %v1196, %v1188
    %v1533 = vpack.c.b16 %v1197, %v1189
    %v1534 = vpack.c.b16 %v1198, %v1190
    %v1535 = vpack.c.b16 %v1207, %v1199
    %v1536 = vpack.c.b16 %v1208, %v1200
    %v1537 = vpack.c.b16 %v1209, %v1201
    %v1538 = vpack.c.b16 %v1210, %v1202
    %v1539 = vpack.c.b16 %v1211, %v1203
    %v1540 = vpack.c.b16 %v1212, %v1204
    %v1541 = vpack.c.b16 %v1213, %v1205
    %v1542 = vpack.c.b16 %v1214, %v1206
    %v1543 = vpack.c.b16 %v1223, %v1215
    %v1544 = vpack.c.b16 %v1224, %v1216
    %v1545 = vpack.c.b16 %v1225, %v1217
    %v1546 = vpack.c.b16 %v1226, %v1218
    %v1547 = vpack.c.b16 %v1227, %v1219
    %v1548 = vpack.c.b16 %v1228, %v1220
    %v1549 = vpack.c.b16 %v1229, %v1221
    %v1550 = vpack.c.b16 %v1230, %v1222
    %v1551 = vpack.c.b16 %v1239, %v1231
    %v1552 = vpack.c.b16 %v1240, %v1232
    %v1553 = vpack.c.b16 %v1241, %v1233
    %v1554 = vpack.c.b16 %v1242, %v1234
    %v1555 = vpack.c.b16 %v1243, %v1235
    %v1556 = vpack.c.b16 %v1244, %v1236
    %v1557 = vpack.c.b16 %v1245, %v1237
    %v1558 = vpack.c.b16 %v1246, %v1238
    %v1559 = vpack.c.b16 %v1255, %v1247
    %v1560 = vpack.c.b16 %v1256, %v1248
    %v1561 = vpack.c.b16 %v1257, %v1249
    %v1562 = vpack.c.b16 %v1258, %v1250
    %v1563 = vpack.c.b16 %v1259, %v1251
    %v1564 = vpack.c.b16 %v1260, %v1252
    %v1565 = vpack.c.b16 %v1261, %v1253
    %v1566 = vpack.c.b16 %v1262, %v1254
    %v1567 = vpack.c.b16 %v1271, %v1263
    %v1568 = vpack.c.b16 %v1272, %v1264
    %v1569 = vpack.c.b16 %v1273, %v1265
    %v1570 = vpack.c.b16 %v1274, %v1266
    %v1571 = vpack.c.b16 %v1275, %v1267
    %v1572 = vpack.c.b16 %v1276, %v1268
    %v1573 = vpack.c.b16 %v1277, %v1269
    %v1574 = vpack.c.b16 %v1278, %v1270
    %v1575 = vpack.c.b16 %v1287, %v1279
    %v1576 = vpack.c.b16 %v1288, %v1280
    %v1577 = vpack.c.b16 %v1289, %v1281
    %v1578 = vpack.c.b16 %v1290, %v1282
    %v1579 = vpack.c.b16 %v1291, %v1283
    %v1580 = vpack.c.b16 %v1292, %v1284
    %v1581 = vpack.c.b16 %v1293, %v1285
    %v1582 = vpack.c.b16 %v1294, %v1286
    %v1583 = vpack.c.b16 %v1303, %v1295
    %v1584 = vpack.c.b16 %v1304, %v1296
    %v1585 = vpack.c.b16 %v1305, %v1297
    %v1586 = vpack.c.b16 %v1306, %v1298
    %v1587 = vpack.c.b16 %v1307, %v1299
    %v1588 = vpack.c.b16 %v1308, %v1300
    %v1589 = vpack.c.b16 %v1309, %v1301
    %v1590 = vpack.c.b16 %v1310, %v1302
    %v1591 = vpack.c.b16 %v1319, %v1311
    %v1592 = vpack.c.b16 %v1320, %v1312
    %v1593 = vpack.c.b16 %v1321, %v1313
    %v1594 = vpack.c.b16 %v1322, %v1314
    %v1595 = vpack.c.b16 %v1323, %v1315
    %v1596 = vpack.c.b16 %v1324, %v1316
    %v1597 = vpack.c.b16 %v1325, %v1317
    %v1598 = vpack.c.b16 %v1326, %v1318
    %v1599 = vpack.c.b16 %v1335, %v1327
    %v1600 = vpack.c.b16 %v1336, %v1328
    %v1601 = vpack.c.b16 %v1337, %v1329
    %v1602 = vpack.c.b16 %v1338, %v1330
    %v1603 = vpack.c.b16 %v1339, %v1331
    %v1604 = vpack.c.b16 %v1340, %v1332
    %v1605 = vpack.c.b16 %v1341, %v1333
    %v1606 = vpack.c.b16 %v1342, %v1334
    %v1607 = vpack.c.b16 %v1351, %v1343
    %v1608 = vpack.c.b16 %v1352, %v1344
    %v1609 = vpack.c.b16 %v1353, %v1345
    %v1610 = vpack.c.b16 %v1354, %v1346
    %v1611 = vpack.c.b16 %v1355, %v1347
    %v1612 = vpack.c.b16 %v1356, %v1348
    %v1613 = vpack.c.b16 %v1357, %v1349
    %v1614 = vpack.c.b16 %v1358, %v1350
    %1871 = vmatprep.subr.bf16.mxu0 %v1360
    %1872 = vmatpush1.bf16.msra.mxu0 %v1359
    %1873 = vmatprep.subr.bf16.mxu0 %v1368
    %1874 = vmatpush1.bf16.msra.mxu0 %v1367
    %1875 = vmatprep.subr.bf16.mxu0 %v1376
    %1876 = vmatpush1.bf16.msra.mxu0 %v1375
    %1877 = vmatprep.subr.bf16.mxu0 %v1384
    %1878 = vmatpush1.bf16.msra.mxu0 %v1383
    %1879 = vmatprep.subr.bf16.mxu0 %v1392
    %1880 = vmatpush1.bf16.msra.mxu0 %v1391
    %1881 = vmatprep.subr.bf16.mxu0 %v1400
    %1882 = vmatpush1.bf16.msra.mxu0 %v1399
    %1883 = vmatprep.subr.bf16.mxu0 %v1408
    %1884 = vmatpush1.bf16.msra.mxu0 %v1407
    %1885 = vmatprep.subr.bf16.mxu0 %v1416
    %1886 = vmatpush1.bf16.msra.mxu0 %v1415
    %1887 = vmatprep.subr.bf16.mxu0 %v1424
    %1888 = vmatpush1.bf16.msra.mxu0 %v1423
    %1889 = vmatprep.subr.bf16.mxu0 %v1432
    %1890 = vmatpush1.bf16.msra.mxu0 %v1431
    %1891 = vmatprep.subr.bf16.mxu0 %v1440
    %1892 = vmatpush1.bf16.msra.mxu0 %v1439
    %1893 = vmatprep.subr.bf16.mxu0 %v1448
    %1894 = vmatpush1.bf16.msra.mxu0 %v1447
    %1895 = vmatprep.subr.bf16.mxu0 %v1456
    %1896 = vmatpush1.bf16.msra.mxu0 %v1455
    %1897 = vmatprep.subr.bf16.mxu0 %v1464
    %1898 = vmatpush1.bf16.msra.mxu0 %v1463
    %1899 = vmatprep.subr.bf16.mxu0 %v1472
    %1900 = vmatpush1.bf16.msra.mxu0 %v1471
    %1901 = vmatprep.subr.bf16.mxu0 %v1480
    %1902 = vmatpush1.bf16.msra.mxu0 %v1479
    %1903 = vmatprep.mubr.bf16.mxu0 %v290
    %1904 = vmatmul.mubr.bf16.gmra.mrb[0].mxu0 %v289
    %v1905 = vpop.f32.mrb[0].mxu0
    %v1906 = vadd.f32 %v554, %v1905
    %v1907 = vpop.f32.mrb[0].mxu0
    %v1908 = vadd.f32 %v558, %v1907
    %v1909 = vpop.f32.mrb[0].mxu0
    %v1910 = vpop.f32.mrb[0].mxu0
    %1911 = vdwg.mxu0
    %1912 = vmatprep.subr.bf16.mxu0 %v1488
    %1913 = vmatpush1.bf16.msra.mxu0 %v1487
    %1914 = vmatprep.subr.bf16.mxu0 %v1496
    %1915 = vmatpush1.bf16.msra.mxu0 %v1495
    %1916 = vmatprep.subr.bf16.mxu0 %v1504
    %1917 = vmatpush1.bf16.msra.mxu0 %v1503
    %1918 = vmatprep.subr.bf16.mxu0 %v1512
    %1919 = vmatpush1.bf16.msra.mxu0 %v1511
    %1920 = vmatprep.subr.bf16.mxu0 %v1520
    %1921 = vmatpush1.bf16.msra.mxu0 %v1519
    %1922 = vmatprep.subr.bf16.mxu0 %v1528
    %1923 = vmatpush1.bf16.msra.mxu0 %v1527
    %1924 = vmatprep.subr.bf16.mxu0 %v1536
    %1925 = vmatpush1.bf16.msra.mxu0 %v1535
    %1926 = vmatprep.subr.bf16.mxu0 %v1544
    %1927 = vmatpush1.bf16.msra.mxu0 %v1543
    %1928 = vmatprep.subr.bf16.mxu0 %v1552
    %1929 = vmatpush1.bf16.msra.mxu0 %v1551
    %1930 = vmatprep.subr.bf16.mxu0 %v1560
    %1931 = vmatpush1.bf16.msra.mxu0 %v1559
    %1932 = vmatprep.subr.bf16.mxu0 %v1568
    %1933 = vmatpush1.bf16.msra.mxu0 %v1567
    %1934 = vmatprep.subr.bf16.mxu0 %v1576
    %1935 = vmatpush1.bf16.msra.mxu0 %v1575
    %1936 = vmatprep.subr.bf16.mxu0 %v1584
    %1937 = vmatpush1.bf16.msra.mxu0 %v1583
    %1938 = vmatprep.subr.bf16.mxu0 %v1592
    %1939 = vmatpush1.bf16.msra.mxu0 %v1591
    %1940 = vmatprep.subr.bf16.mxu0 %v1600
    %1941 = vmatpush1.bf16.msra.mxu0 %v1599
    %1942 = vmatprep.subr.bf16.mxu0 %v1608
    %1943 = vmatpush1.bf16.msra.mxu0 %v1607
    %1944 = vmatprep.mubr.bf16.mxu0 %v292
    %1945 = vmatmul.mubr.bf16.gmra.mrb[0].mxu0 %v291
    %v1946 = vpop.f32.mrb[0].mxu0
    %v1947 = vadd.f32 %v1906, %v1946
    %v1948 = vpop.f32.mrb[0].mxu0
    %v1949 = vadd.f32 %v1908, %v1948
    %v1950 = vpop.f32.mrb[0].mxu0
    %v1951 = vpop.f32.mrb[0].mxu0
    %1952 = vdwg.mxu0
    %1953 = vmatprep.subr.bf16.mxu0 %v1362
    %1954 = vmatpush1.bf16.msra.mxu0 %v1361
    %1955 = vmatprep.subr.bf16.mxu0 %v1370
    %1956 = vmatpush1.bf16.msra.mxu0 %v1369
    %1957 = vmatprep.subr.bf16.mxu0 %v1378
    %1958 = vmatpush1.bf16.msra.mxu0 %v1377
    %1959 = vmatprep.subr.bf16.mxu0 %v1386
    %1960 = vmatpush1.bf16.msra.mxu0 %v1385
    %1961 = vmatprep.subr.bf16.mxu0 %v1394
    %1962 = vmatpush1.bf16.msra.mxu0 %v1393
    %1963 = vmatprep.subr.bf16.mxu0 %v1402
    %1964 = vmatpush1.bf16.msra.mxu0 %v1401
    %1965 = vmatprep.subr.bf16.mxu0 %v1410
    %1966 = vmatpush1.bf16.msra.mxu0 %v1409
    %1967 = vmatprep.subr.bf16.mxu0 %v1418
    %1968 = vmatpush1.bf16.msra.mxu0 %v1417
    %1969 = vmatprep.subr.bf16.mxu0 %v1426
    %1970 = vmatpush1.bf16.msra.mxu0 %v1425
    %1971 = vmatprep.subr.bf16.mxu0 %v1434
    %1972 = vmatpush1.bf16.msra.mxu0 %v1433
    %1973 = vmatprep.subr.bf16.mxu0 %v1442
    %1974 = vmatpush1.bf16.msra.mxu0 %v1441
    %1975 = vmatprep.subr.bf16.mxu0 %v1450
    %1976 = vmatpush1.bf16.msra.mxu0 %v1449
    %1977 = vmatprep.subr.bf16.mxu0 %v1458
    %1978 = vmatpush1.bf16.msra.mxu0 %v1457
    %1979 = vmatprep.subr.bf16.mxu0 %v1466
    %1980 = vmatpush1.bf16.msra.mxu0 %v1465
    %1981 = vmatprep.subr.bf16.mxu0 %v1474
    %1982 = vmatpush1.bf16.msra.mxu0 %v1473
    %1983 = vmatprep.subr.bf16.mxu0 %v1482
    %1984 = vmatpush1.bf16.msra.mxu0 %v1481
    %1985 = vmatprep.mubr.bf16.mxu0 %v290
    %1986 = vmatmul.mubr.bf16.gmra.mrb[0].mxu0 %v289
    %v1987 = vpop.f32.mrb[0].mxu0
    %v1988 = vadd.f32 %v562, %v1987
    %v1989 = vpop.f32.mrb[0].mxu0
    %v1990 = vadd.f32 %v566, %v1989
    %v1991 = vpop.f32.mrb[0].mxu0
    %v1992 = vpop.f32.mrb[0].mxu0
    %1993 = vdwg.mxu0
    %1994 = vmatprep.subr.bf16.mxu0 %v1490
    %1995 = vmatpush1.bf16.msra.mxu0 %v1489
    %1996 = vmatprep.subr.bf16.mxu0 %v1498
    %1997 = vmatpush1.bf16.msra.mxu0 %v1497
    %1998 = vmatprep.subr.bf16.mxu0 %v1506
    %1999 = vmatpush1.bf16.msra.mxu0 %v1505
    %2000 = vmatprep.subr.bf16.mxu0 %v1514
    %2001 = vmatpush1.bf16.msra.mxu0 %v1513
    %2002 = vmatprep.subr.bf16.mxu0 %v1522
    %2003 = vmatpush1.bf16.msra.mxu0 %v1521
    %2004 = vmatprep.subr.bf16.mxu0 %v1530
    %2005 = vmatpush1.bf16.msra.mxu0 %v1529
    %2006 = vmatprep.subr.bf16.mxu0 %v1538
    %2007 = vmatpush1.bf16.msra.mxu0 %v1537
    %2008 = vmatprep.subr.bf16.mxu0 %v1546
    %2009 = vmatpush1.bf16.msra.mxu0 %v1545
    %2010 = vmatprep.subr.bf16.mxu0 %v1554
    %2011 = vmatpush1.bf16.msra.mxu0 %v1553
    %2012 = vmatprep.subr.bf16.mxu0 %v1562
    %2013 = vmatpush1.bf16.msra.mxu0 %v1561
    %2014 = vmatprep.subr.bf16.mxu0 %v1570
    %2015 = vmatpush1.bf16.msra.mxu0 %v1569
    %2016 = vmatprep.subr.bf16.mxu0 %v1578
    %2017 = vmatpush1.bf16.msra.mxu0 %v1577
    %2018 = vmatprep.subr.bf16.mxu0 %v1586
    %2019 = vmatpush1.bf16.msra.mxu0 %v1585
    %2020 = vmatprep.subr.bf16.mxu0 %v1594
    %2021 = vmatpush1.bf16.msra.mxu0 %v1593
    %2022 = vmatprep.subr.bf16.mxu0 %v1602
    %2023 = vmatpush1.bf16.msra.mxu0 %v1601
    %2024 = vmatprep.subr.bf16.mxu0 %v1610
    %2025 = vmatpush1.bf16.msra.mxu0 %v1609
    %2026 = vmatprep.mubr.bf16.mxu0 %v292
    %2027 = vmatmul.mubr.bf16.gmra.mrb[0].mxu0 %v291
    %v2028 = vpop.f32.mrb[0].mxu0
    %v2029 = vadd.f32 %v1988, %v2028
    %v2030 = vpop.f32.mrb[0].mxu0
    %v2031 = vadd.f32 %v1990, %v2030
    %v2032 = vpop.f32.mrb[0].mxu0
    %v2033 = vpop.f32.mrb[0].mxu0
    %2034 = vdwg.mxu0
    %2035 = vmatprep.subr.bf16.mxu0 %v1364
    %2036 = vmatpush1.bf16.msra.mxu0 %v1363
    %2037 = vmatprep.subr.bf16.mxu0 %v1372
    %2038 = vmatpush1.bf16.msra.mxu0 %v1371
    %2039 = vmatprep.subr.bf16.mxu0 %v1380
    %2040 = vmatpush1.bf16.msra.mxu0 %v1379
    %2041 = vmatprep.subr.bf16.mxu0 %v1388
    %2042 = vmatpush1.bf16.msra.mxu0 %v1387
    %2043 = vmatprep.subr.bf16.mxu0 %v1396
    %2044 = vmatpush1.bf16.msra.mxu0 %v1395
    %2045 = vmatprep.subr.bf16.mxu0 %v1404
    %2046 = vmatpush1.bf16.msra.mxu0 %v1403
    %2047 = vmatprep.subr.bf16.mxu0 %v1412
    %2048 = vmatpush1.bf16.msra.mxu0 %v1411
    %2049 = vmatprep.subr.bf16.mxu0 %v1420
    %2050 = vmatpush1.bf16.msra.mxu0 %v1419
    %2051 = vmatprep.subr.bf16.mxu0 %v1428
    %2052 = vmatpush1.bf16.msra.mxu0 %v1427
    %2053 = vmatprep.subr.bf16.mxu0 %v1436
    %2054 = vmatpush1.bf16.msra.mxu0 %v1435
    %2055 = vmatprep.subr.bf16.mxu0 %v1444
    %2056 = vmatpush1.bf16.msra.mxu0 %v1443
    %2057 = vmatprep.subr.bf16.mxu0 %v1452
    %2058 = vmatpush1.bf16.msra.mxu0 %v1451
    %2059 = vmatprep.subr.bf16.mxu0 %v1460
    %2060 = vmatpush1.bf16.msra.mxu0 %v1459
    %2061 = vmatprep.subr.bf16.mxu0 %v1468
    %2062 = vmatpush1.bf16.msra.mxu0 %v1467
    %2063 = vmatprep.subr.bf16.mxu0 %v1476
    %2064 = vmatpush1.bf16.msra.mxu0 %v1475
    %2065 = vmatprep.subr.bf16.mxu0 %v1484
    %2066 = vmatpush1.bf16.msra.mxu0 %v1483
    %2067 = vmatprep.mubr.bf16.mxu0 %v290
    %2068 = vmatmul.mubr.bf16.gmra.mrb[0].mxu0 %v289
    %v2069 = vpop.f32.mrb[0].mxu0
    %v2070 = vadd.f32 %v570, %v2069
    %v2071 = vpop.f32.mrb[0].mxu0
    %v2072 = vadd.f32 %v574, %v2071
    %v2073 = vpop.f32.mrb[0].mxu0
    %v2074 = vpop.f32.mrb[0].mxu0
    %2075 = vdwg.mxu0
    %2076 = vmatprep.subr.bf16.mxu0 %v1492
    %2077 = vmatpush1.bf16.msra.mxu0 %v1491
    %2078 = vmatprep.subr.bf16.mxu0 %v1500
    %2079 = vmatpush1.bf16.msra.mxu0 %v1499
    %2080 = vmatprep.subr.bf16.mxu0 %v1508
    %2081 = vmatpush1.bf16.msra.mxu0 %v1507
    %2082 = vmatprep.subr.bf16.mxu0 %v1516
    %2083 = vmatpush1.bf16.msra.mxu0 %v1515
    %2084 = vmatprep.subr.bf16.mxu0 %v1524
    %2085 = vmatpush1.bf16.msra.mxu0 %v1523
    %2086 = vmatprep.subr.bf16.mxu0 %v1532
    %2087 = vmatpush1.bf16.msra.mxu0 %v1531
    %2088 = vmatprep.subr.bf16.mxu0 %v1540
    %2089 = vmatpush1.bf16.msra.mxu0 %v1539
    %2090 = vmatprep.subr.bf16.mxu0 %v1548
    %2091 = vmatpush1.bf16.msra.mxu0 %v1547
    %2092 = vmatprep.subr.bf16.mxu0 %v1556
    %2093 = vmatpush1.bf16.msra.mxu0 %v1555
    %2094 = vmatprep.subr.bf16.mxu0 %v1564
    %2095 = vmatpush1.bf16.msra.mxu0 %v1563
    %2096 = vmatprep.subr.bf16.mxu0 %v1572
    %2097 = vmatpush1.bf16.msra.mxu0 %v1571
    %2098 = vmatprep.subr.bf16.mxu0 %v1580
    %2099 = vmatpush1.bf16.msra.mxu0 %v1579
    %2100 = vmatprep.subr.bf16.mxu0 %v1588
    %2101 = vmatpush1.bf16.msra.mxu0 %v1587
    %2102 = vmatprep.subr.bf16.mxu0 %v1596
    %2103 = vmatpush1.bf16.msra.mxu0 %v1595
    %2104 = vmatprep.subr.bf16.mxu0 %v1604
    %2105 = vmatpush1.bf16.msra.mxu0 %v1603
    %2106 = vmatprep.subr.bf16.mxu0 %v1612
    %2107 = vmatpush1.bf16.msra.mxu0 %v1611
    %2108 = vmatprep.mubr.bf16.mxu0 %v292
    %2109 = vmatmul.mubr.bf16.gmra.mrb[0].mxu0 %v291
    %v2110 = vpop.f32.mrb[0].mxu0
    %v2111 = vadd.f32 %v2070, %v2110
    %v2112 = vpop.f32.mrb[0].mxu0
    %v2113 = vadd.f32 %v2072, %v2112
    %v2114 = vpop.f32.mrb[0].mxu0
    %v2115 = vpop.f32.mrb[0].mxu0
    %2116 = vdwg.mxu0
    %2117 = vmatprep.subr.bf16.mxu0 %v1366
    %2118 = vmatpush1.bf16.msra.mxu0 %v1365
    %2119 = vmatprep.subr.bf16.mxu0 %v1374
    %2120 = vmatpush1.bf16.msra.mxu0 %v1373
    %2121 = vmatprep.subr.bf16.mxu0 %v1382
    %2122 = vmatpush1.bf16.msra.mxu0 %v1381
    %2123 = vmatprep.subr.bf16.mxu0 %v1390
    %2124 = vmatpush1.bf16.msra.mxu0 %v1389
    %2125 = vmatprep.subr.bf16.mxu0 %v1398
    %2126 = vmatpush1.bf16.msra.mxu0 %v1397
    %2127 = vmatprep.subr.bf16.mxu0 %v1406
    %2128 = vmatpush1.bf16.msra.mxu0 %v1405
    %2129 = vmatprep.subr.bf16.mxu0 %v1414
    %2130 = vmatpush1.bf16.msra.mxu0 %v1413
    %2131 = vmatprep.subr.bf16.mxu0 %v1422
    %2132 = vmatpush1.bf16.msra.mxu0 %v1421
    %2133 = vmatprep.subr.bf16.mxu0 %v1430
    %2134 = vmatpush1.bf16.msra.mxu0 %v1429
    %2135 = vmatprep.subr.bf16.mxu0 %v1438
    %2136 = vmatpush1.bf16.msra.mxu0 %v1437
    %2137 = vmatprep.subr.bf16.mxu0 %v1446
    %2138 = vmatpush1.bf16.msra.mxu0 %v1445
    %2139 = vmatprep.subr.bf16.mxu0 %v1454
    %2140 = vmatpush1.bf16.msra.mxu0 %v1453
    %2141 = vmatprep.subr.bf16.mxu0 %v1462
    %2142 = vmatpush1.bf16.msra.mxu0 %v1461
    %2143 = vmatprep.subr.bf16.mxu0 %v1470
    %2144 = vmatpush1.bf16.msra.mxu0 %v1469
    %2145 = vmatprep.subr.bf16.mxu0 %v1478
    %2146 = vmatpush1.bf16.msra.mxu0 %v1477
    %2147 = vmatprep.subr.bf16.mxu0 %v1486
    %2148 = vmatpush1.bf16.msra.mxu0 %v1485
    %2149 = vmatprep.mubr.bf16.mxu0 %v290
    %2150 = vmatmul.mubr.bf16.gmra.mrb[0].mxu0 %v289
    %v2151 = vpop.f32.mrb[0].mxu0
    %v2152 = vadd.f32 %v578, %v2151
    %v2153 = vpop.f32.mrb[0].mxu0
    %v2154 = vadd.f32 %v582, %v2153
    %v2155 = vpop.f32.mrb[0].mxu0
    %v2156 = vpop.f32.mrb[0].mxu0
    %2157 = vdwg.mxu0
    %2158 = vmatprep.subr.bf16.mxu0 %v1494
    %2159 = vmatpush1.bf16.msra.mxu0 %v1493
    %2160 = vmatprep.subr.bf16.mxu0 %v1502
    %2161 = vmatpush1.bf16.msra.mxu0 %v1501
    %2162 = vmatprep.subr.bf16.mxu0 %v1510
    %2163 = vmatpush1.bf16.msra.mxu0 %v1509
    %2164 = vmatprep.subr.bf16.mxu0 %v1518
    %2165 = vmatpush1.bf16.msra.mxu0 %v1517
    %2166 = vmatprep.subr.bf16.mxu0 %v1526
    %2167 = vmatpush1.bf16.msra.mxu0 %v1525
    %2168 = vmatprep.subr.bf16.mxu0 %v1534
    %2169 = vmatpush1.bf16.msra.mxu0 %v1533
    %2170 = vmatprep.subr.bf16.mxu0 %v1542
    %2171 = vmatpush1.bf16.msra.mxu0 %v1541
    %2172 = vmatprep.subr.bf16.mxu0 %v1550
    %2173 = vmatpush1.bf16.msra.mxu0 %v1549
    %2174 = vmatprep.subr.bf16.mxu0 %v1558
    %2175 = vmatpush1.bf16.msra.mxu0 %v1557
    %2176 = vmatprep.subr.bf16.mxu0 %v1566
    %2177 = vmatpush1.bf16.msra.mxu0 %v1565
    %2178 = vmatprep.subr.bf16.mxu0 %v1574
    %2179 = vmatpush1.bf16.msra.mxu0 %v1573
    %2180 = vmatprep.subr.bf16.mxu0 %v1582
    %2181 = vmatpush1.bf16.msra.mxu0 %v1581
    %2182 = vmatprep.subr.bf16.mxu0 %v1590
    %2183 = vmatpush1.bf16.msra.mxu0 %v1589
    %2184 = vmatprep.subr.bf16.mxu0 %v1598
    %2185 = vmatpush1.bf16.msra.mxu0 %v1597
    %2186 = vmatprep.subr.bf16.mxu0 %v1606
    %2187 = vmatpush1.bf16.msra.mxu0 %v1605
    %2188 = vmatprep.subr.bf16.mxu0 %v1614
    %2189 = vmatpush1.bf16.msra.mxu0 %v1613
    %2190 = vmatprep.mubr.bf16.mxu0 %v292
    %2191 = vmatmul.mubr.bf16.gmra.mrb[0].mxu0 %v291
    %v2192 = vpop.f32.mrb[0].mxu0
    %v2193 = vadd.f32 %v2152, %v2192
    %v2194 = vpop.f32.mrb[0].mxu0
    %v2195 = vadd.f32 %v2154, %v2194
    %v2196 = vpop.f32.mrb[0].mxu0
    %v2197 = vpop.f32.mrb[0].mxu0
    %2198 = vdwg.mxu0
    %v2199 = vmax.f32 %v1947, 0.0
    %v2200 = vmax.f32 %v1949, 0.0
    %v2201 = vmax.f32 %v2029, 0.0
    %v2202 = vmax.f32 %v2031, 0.0
    %v2203 = vmax.f32 %v2111, 0.0
    %v2204 = vmax.f32 %v2113, 0.0
    %v2205 = vmax.f32 %v2193, 0.0
    %v2206 = vmax.f32 %v2195, 0.0
    %v2207 = vld [vmem:[%s5] sm:$0xff]
    %v2208 = vld [vmem:[%s5 + $0x8] sm:$0xff]
    %v2209 = vld [vmem:[%s5 + $0x10] sm:$0xff]
    %v2210 = vld [vmem:[%s5 + $0x18] sm:$0xff]
    %v2211 = vld [vmem:[%s5 + $0x20] sm:$0xff]
    %v2212 = vld [vmem:[%s5 + $0x28] sm:$0xff]
    %v2213 = vld [vmem:[%s5 + $0x30] sm:$0xff]
    %v2214 = vld [vmem:[%s5 + $0x38] sm:$0xff]
    %v2215 = vld [vmem:[%s6] sm:$0x1]
    %v2216 = vld [vmem:[#allocation7] sm:$0xf]
    %v2217 = vld [vmem:[#allocation7 + $0x4] sm:$0xf]
    %v2218 = vld [vmem:[#allocation7 + $0x8] sm:$0xf]
    %v2219 = vld [vmem:[#allocation7 + $0xc] sm:$0xf]
    %v2220 = vld [vmem:[#allocation7 + $0x10] sm:$0xf]
    %v2221 = vld [vmem:[#allocation7 + $0x14] sm:$0xf]
    %v2222 = vld [vmem:[#allocation7 + $0x18] sm:$0xf]
    %v2223 = vld [vmem:[#allocation7 + $0x1c] sm:$0xf]
    %v2224 = vld [vmem:[#allocation7 + $0x20] sm:$0xf]
    %v2225 = vld [vmem:[#allocation7 + $0x24] sm:$0xf]
    %v2226 = vld [vmem:[#allocation7 + $0x28] sm:$0xf]
    %v2227 = vld [vmem:[#allocation7 + $0x2c] sm:$0xf]
    %v2228 = vld [vmem:[#allocation7 + $0x30] sm:$0xf]
    %v2229 = vld [vmem:[#allocation7 + $0x34] sm:$0xf]
    %v2230 = vld [vmem:[#allocation7 + $0x38] sm:$0xf]
    %v2231 = vld [vmem:[#allocation7 + $0x3c] sm:$0xf]
    %v2232 = vld [vmem:[#allocation9] sm:$0x1]
    %v2233 = vlaneseq
    %v2234 = vshrl.u32 %v2233, 7
    %v2235 = vsub.s32 0, %v2234
    %v2236 = vrot.slane %v2207, %v2235
    %v2237 = vmul.f32 %v2199, %v2236
    %v2238 = vlaneseq
    %v2239 = vshrl.u32 %v2238, 7
    %v2240 = vsub.s32 1, %v2239
    %v2241 = vrot.slane %v2207, %v2240
    %v2242 = vmul.f32 %v2200, %v2241
    %v2243 = vadd.f32 %v2237, %v2242
    %v2244 = vlaneseq
    %v2245 = vshrl.u32 %v2244, 7
    %v2246 = vsub.s32 2, %v2245
    %v2247 = vrot.slane %v2207, %v2246
    %v2248 = vmul.f32 %v2201, %v2247
    %v2249 = vadd.f32 %v2243, %v2248
    %v2250 = vlaneseq
    %v2251 = vshrl.u32 %v2250, 7
    %v2252 = vsub.s32 3, %v2251
    %v2253 = vrot.slane %v2207, %v2252
    %v2254 = vmul.f32 %v2202, %v2253
    %v2255 = vadd.f32 %v2249, %v2254
    %v2256 = vlaneseq
    %v2257 = vshrl.u32 %v2256, 7
    %v2258 = vsub.s32 4, %v2257
    %v2259 = vrot.slane %v2207, %v2258
    %v2260 = vmul.f32 %v2203, %v2259
    %v2261 = vadd.f32 %v2255, %v2260
    %v2262 = vlaneseq
    %v2263 = vshrl.u32 %v2262, 7
    %v2264 = vsub.s32 5, %v2263
    %v2265 = vrot.slane %v2207, %v2264
    %v2266 = vmul.f32 %v2204, %v2265
    %v2267 = vadd.f32 %v2261, %v2266
    %v2268 = vlaneseq
    %v2269 = vshrl.u32 %v2268, 7
    %v2270 = vsub.s32 6, %v2269
    %v2271 = vrot.slane %v2207, %v2270
    %v2272 = vmul.f32 %v2205, %v2271
    %v2273 = vadd.f32 %v2267, %v2272
    %v2274 = vlaneseq
    %v2275 = vshrl.u32 %v2274, 7
    %v2276 = vsub.s32 7, %v2275
    %v2277 = vrot.slane %v2207, %v2276
    %v2278 = vmul.f32 %v2206, %v2277
    %v2279 = vadd.f32 %v2273, %v2278
    %v2281 = vlaneseq
    %v2282 = vshrl.u32 %v2281, 7
    %v2283 = vsub.s32 0, %v2282
    %v2284 = vrot.slane %v2215, %v2283
    %v2286 = vadd.f32 %v2279, %v2284
    %v2287 = vpack.c.bf16 %v2286, %v2286
    %v2289 = vlaneseq
    %v2290 = vshrl.u32 %v2289, 7
    %v2291 = vsub.s32 0, %v2290
    %v2292 = vrot.slane %v2232, %v2291
    %v2310 = vunpack.c.l.b16 %v2216
    %v2311 = vunpack.c.l.b16 %v2217
    %v2312 = vunpack.c.l.b16 %v2218
    %v2313 = vunpack.c.l.b16 %v2219
    %v2314 = vunpack.c.l.b16 %v2220
    %v2315 = vunpack.c.l.b16 %v2221
    %v2316 = vunpack.c.l.b16 %v2222
    %v2317 = vunpack.c.l.b16 %v2223
    %v2318 = vunpack.c.l.b16 %v2224
    %v2319 = vunpack.c.l.b16 %v2225
    %v2320 = vunpack.c.l.b16 %v2226
    %v2321 = vunpack.c.l.b16 %v2227
    %v2322 = vunpack.c.l.b16 %v2228
    %v2323 = vunpack.c.l.b16 %v2229
    %v2324 = vunpack.c.l.b16 %v2230
    %v2325 = vunpack.c.l.b16 %v2231
    %v2326 = vpack.c.b16 %v2311, %v2310
    %v2327 = vpack.c.b16 %v2313, %v2312
    %v2328 = vpack.c.b16 %v2315, %v2314
    %v2329 = vpack.c.b16 %v2317, %v2316
    %v2330 = vpack.c.b16 %v2319, %v2318
    %v2331 = vpack.c.b16 %v2321, %v2320
    %v2332 = vpack.c.b16 %v2323, %v2322
    %v2333 = vpack.c.b16 %v2325, %v2324
    %2342 = vmatprep.subr.bf16.mxu0 0
    %2343 = vmatpush1.bf16.msra.mxu0 %v2326
    %2344 = vmatprep.subr.bf16.mxu0 0
    %2345 = vmatpush1.bf16.msra.mxu0 %v2327
    %2346 = vmatprep.subr.bf16.mxu0 0
    %2347 = vmatpush1.bf16.msra.mxu0 %v2328
    %2348 = vmatprep.subr.bf16.mxu0 0
    %2349 = vmatpush1.bf16.msra.mxu0 %v2329
    %2350 = vmatprep.subr.bf16.mxu0 0
    %2351 = vmatpush1.bf16.msra.mxu0 %v2330
    %2352 = vmatprep.subr.bf16.mxu0 0
    %2353 = vmatpush1.bf16.msra.mxu0 %v2331
    %2354 = vmatprep.subr.bf16.mxu0 0
    %2355 = vmatpush1.bf16.msra.mxu0 %v2332
    %2356 = vmatprep.subr.bf16.mxu0 0
    %2357 = vmatpush1.bf16.msra.mxu0 %v2333
    %2358 = vmatprep.subr.bf16.mxu0 0
    %2359 = vmatpush1.bf16.msra.mxu0 0
    %2360 = vmatprep.subr.bf16.mxu0 0
    %2361 = vmatpush1.bf16.msra.mxu0 0
    %2362 = vmatprep.subr.bf16.mxu0 0
    %2363 = vmatpush1.bf16.msra.mxu0 0
    %2364 = vmatprep.subr.bf16.mxu0 0
    %2365 = vmatpush1.bf16.msra.mxu0 0
    %2366 = vmatprep.subr.bf16.mxu0 0
    %2367 = vmatpush1.bf16.msra.mxu0 0
    %2368 = vmatprep.subr.bf16.mxu0 0
    %2369 = vmatpush1.bf16.msra.mxu0 0
    %2370 = vmatprep.subr.bf16.mxu0 0
    %2371 = vmatpush1.bf16.msra.mxu0 0
    %2372 = vmatprep.subr.bf16.mxu0 0
    %2373 = vmatpush1.bf16.msra.mxu0 0
    %2374 = vmatprep.mubr.bf16.mxu0 0
    %2375 = vmatmul.mubr.bf16.gmra.mrb[0].mxu0 %v2287
    %v2376 = vpop.f32.mrb[0].mxu0
    %v2377 = vadd.f32 %v2292, %v2376
    %v2378 = vpop.f32.mrb[0].mxu0
    %v2379 = vpop.f32.mrb[0].mxu0
    %v2380 = vpop.f32.mrb[0].mxu0
    %2381 = vdwg.mxu0
    %v2382 = vmax.f32 %v2377, 0.0
    %v2383 = vlaneseq
    %v2384 = vshrl.u32 %v2383, 7
    %v2385 = vsub.s32 0, %v2384
    %v2386 = vrot.slane %v2208, %v2385
    %v2387 = vmul.f32 %v2199, %v2386
    %v2388 = vlaneseq
    %v2389 = vshrl.u32 %v2388, 7
    %v2390 = vsub.s32 1, %v2389
    %v2391 = vrot.slane %v2208, %v2390
    %v2392 = vmul.f32 %v2200, %v2391
    %v2393 = vadd.f32 %v2387, %v2392
    %v2394 = vlaneseq
    %v2395 = vshrl.u32 %v2394, 7
    %v2396 = vsub.s32 2, %v2395
    %v2397 = vrot.slane %v2208, %v2396
    %v2398 = vmul.f32 %v2201, %v2397
    %v2399 = vadd.f32 %v2393, %v2398
    %v2400 = vlaneseq
    %v2401 = vshrl.u32 %v2400, 7
    %v2402 = vsub.s32 3, %v2401
    %v2403 = vrot.slane %v2208, %v2402
    %v2404 = vmul.f32 %v2202, %v2403
    %v2405 = vadd.f32 %v2399, %v2404
    %v2406 = vlaneseq
    %v2407 = vshrl.u32 %v2406, 7
    %v2408 = vsub.s32 4, %v2407
    %v2409 = vrot.slane %v2208, %v2408
    %v2410 = vmul.f32 %v2203, %v2409
    %v2411 = vadd.f32 %v2405, %v2410
    %v2412 = vlaneseq
    %v2413 = vshrl.u32 %v2412, 7
    %v2414 = vsub.s32 5, %v2413
    %v2415 = vrot.slane %v2208, %v2414
    %v2416 = vmul.f32 %v2204, %v2415
    %v2417 = vadd.f32 %v2411, %v2416
    %v2418 = vlaneseq
    %v2419 = vshrl.u32 %v2418, 7
    %v2420 = vsub.s32 6, %v2419
    %v2421 = vrot.slane %v2208, %v2420
    %v2422 = vmul.f32 %v2205, %v2421
    %v2423 = vadd.f32 %v2417, %v2422
    %v2424 = vlaneseq
    %v2425 = vshrl.u32 %v2424, 7
    %v2426 = vsub.s32 7, %v2425
    %v2427 = vrot.slane %v2208, %v2426
    %v2428 = vmul.f32 %v2206, %v2427
    %v2429 = vadd.f32 %v2423, %v2428
    %v2430 = vadd.f32 %v2429, %v2284
    %v2431 = vpack.c.bf16 %v2430, %v2430
    %2432 = vmatprep.subr.bf16.mxu0 0
    %2433 = vmatpush1.bf16.msra.mxu0 %v2326
    %2434 = vmatprep.subr.bf16.mxu0 0
    %2435 = vmatpush1.bf16.msra.mxu0 %v2327
    %2436 = vmatprep.subr.bf16.mxu0 0
    %2437 = vmatpush1.bf16.msra.mxu0 %v2328
    %2438 = vmatprep.subr.bf16.mxu0 0
    %2439 = vmatpush1.bf16.msra.mxu0 %v2329
    %2440 = vmatprep.subr.bf16.mxu0 0
    %2441 = vmatpush1.bf16.msra.mxu0 %v2330
    %2442 = vmatprep.subr.bf16.mxu0 0
    %2443 = vmatpush1.bf16.msra.mxu0 %v2331
    %2444 = vmatprep.subr.bf16.mxu0 0
    %2445 = vmatpush1.bf16.msra.mxu0 %v2332
    %2446 = vmatprep.subr.bf16.mxu0 0
    %2447 = vmatpush1.bf16.msra.mxu0 %v2333
    %2448 = vmatprep.subr.bf16.mxu0 0
    %2449 = vmatpush1.bf16.msra.mxu0 0
    %2450 = vmatprep.subr.bf16.mxu0 0
    %2451 = vmatpush1.bf16.msra.mxu0 0
    %2452 = vmatprep.subr.bf16.mxu0 0
    %2453 = vmatpush1.bf16.msra.mxu0 0
    %2454 = vmatprep.subr.bf16.mxu0 0
    %2455 = vmatpush1.bf16.msra.mxu0 0
    %2456 = vmatprep.subr.bf16.mxu0 0
    %2457 = vmatpush1.bf16.msra.mxu0 0
    %2458 = vmatprep.subr.bf16.mxu0 0
    %2459 = vmatpush1.bf16.msra.mxu0 0
    %2460 = vmatprep.subr.bf16.mxu0 0
    %2461 = vmatpush1.bf16.msra.mxu0 0
    %2462 = vmatprep.subr.bf16.mxu0 0
    %2463 = vmatpush1.bf16.msra.mxu0 0
    %2464 = vmatprep.mubr.bf16.mxu0 0
    %2465 = vmatmul.mubr.bf16.gmra.mrb[0].mxu0 %v2431
    %v2466 = vpop.f32.mrb[0].mxu0
    %v2467 = vadd.f32 %v2292, %v2466
    %v2468 = vpop.f32.mrb[0].mxu0
    %v2469 = vpop.f32.mrb[0].mxu0
    %v2470 = vpop.f32.mrb[0].mxu0
    %2471 = vdwg.mxu0
    %v2472 = vmax.f32 %v2467, 0.0
    %v2473 = vmax.f32 %v2382, %v2472
    %v2474 = vlaneseq
    %v2475 = vshrl.u32 %v2474, 7
    %v2476 = vsub.s32 0, %v2475
    %v2477 = vrot.slane %v2209, %v2476
    %v2478 = vmul.f32 %v2199, %v2477
    %v2479 = vlaneseq
    %v2480 = vshrl.u32 %v2479, 7
    %v2481 = vsub.s32 1, %v2480
    %v2482 = vrot.slane %v2209, %v2481
    %v2483 = vmul.f32 %v2200, %v2482
    %v2484 = vadd.f32 %v2478, %v2483
    %v2485 = vlaneseq
    %v2486 = vshrl.u32 %v2485, 7
    %v2487 = vsub.s32 2, %v2486
    %v2488 = vrot.slane %v2209, %v2487
    %v2489 = vmul.f32 %v2201, %v2488
    %v2490 = vadd.f32 %v2484, %v2489
    %v2491 = vlaneseq
    %v2492 = vshrl.u32 %v2491, 7
    %v2493 = vsub.s32 3, %v2492
    %v2494 = vrot.slane %v2209, %v2493
    %v2495 = vmul.f32 %v2202, %v2494
    %v2496 = vadd.f32 %v2490, %v2495
    %v2497 = vlaneseq
    %v2498 = vshrl.u32 %v2497, 7
    %v2499 = vsub.s32 4, %v2498
    %v2500 = vrot.slane %v2209, %v2499
    %v2501 = vmul.f32 %v2203, %v2500
    %v2502 = vadd.f32 %v2496, %v2501
    %v2503 = vlaneseq
    %v2504 = vshrl.u32 %v2503, 7
    %v2505 = vsub.s32 5, %v2504
    %v2506 = vrot.slane %v2209, %v2505
    %v2507 = vmul.f32 %v2204, %v2506
    %v2508 = vadd.f32 %v2502, %v2507
    %v2509 = vlaneseq
    %v2510 = vshrl.u32 %v2509, 7
    %v2511 = vsub.s32 6, %v2510
    %v2512 = vrot.slane %v2209, %v2511
    %v2513 = vmul.f32 %v2205, %v2512
    %v2514 = vadd.f32 %v2508, %v2513
    %v2515 = vlaneseq
    %v2516 = vshrl.u32 %v2515, 7
    %v2517 = vsub.s32 7, %v2516
    %v2518 = vrot.slane %v2209, %v2517
    %v2519 = vmul.f32 %v2206, %v2518
    %v2520 = vadd.f32 %v2514, %v2519
    %v2521 = vadd.f32 %v2520, %v2284
    %v2522 = vpack.c.bf16 %v2521, %v2521
    %2523 = vmatprep.subr.bf16.mxu0 0
    %2524 = vmatpush1.bf16.msra.mxu0 %v2326
    %2525 = vmatprep.subr.bf16.mxu0 0
    %2526 = vmatpush1.bf16.msra.mxu0 %v2327
    %2527 = vmatprep.subr.bf16.mxu0 0
    %2528 = vmatpush1.bf16.msra.mxu0 %v2328
    %2529 = vmatprep.subr.bf16.mxu0 0
    %2530 = vmatpush1.bf16.msra.mxu0 %v2329
    %2531 = vmatprep.subr.bf16.mxu0 0
    %2532 = vmatpush1.bf16.msra.mxu0 %v2330
    %2533 = vmatprep.subr.bf16.mxu0 0
    %2534 = vmatpush1.bf16.msra.mxu0 %v2331
    %2535 = vmatprep.subr.bf16.mxu0 0
    %2536 = vmatpush1.bf16.msra.mxu0 %v2332
    %2537 = vmatprep.subr.bf16.mxu0 0
    %2538 = vmatpush1.bf16.msra.mxu0 %v2333
    %2539 = vmatprep.subr.bf16.mxu0 0
    %2540 = vmatpush1.bf16.msra.mxu0 0
    %2541 = vmatprep.subr.bf16.mxu0 0
    %2542 = vmatpush1.bf16.msra.mxu0 0
    %2543 = vmatprep.subr.bf16.mxu0 0
    %2544 = vmatpush1.bf16.msra.mxu0 0
    %2545 = vmatprep.subr.bf16.mxu0 0
    %2546 = vmatpush1.bf16.msra.mxu0 0
    %2547 = vmatprep.subr.bf16.mxu0 0
    %2548 = vmatpush1.bf16.msra.mxu0 0
    %2549 = vmatprep.subr.bf16.mxu0 0
    %2550 = vmatpush1.bf16.msra.mxu0 0
    %2551 = vmatprep.subr.bf16.mxu0 0
    %2552 = vmatpush1.bf16.msra.mxu0 0
    %2553 = vmatprep.subr.bf16.mxu0 0
    %2554 = vmatpush1.bf16.msra.mxu0 0
    %2555 = vmatprep.mubr.bf16.mxu0 0
    %2556 = vmatmul.mubr.bf16.gmra.mrb[0].mxu0 %v2522
    %v2557 = vpop.f32.mrb[0].mxu0
    %v2558 = vadd.f32 %v2292, %v2557
    %v2559 = vpop.f32.mrb[0].mxu0
    %v2560 = vpop.f32.mrb[0].mxu0
    %v2561 = vpop.f32.mrb[0].mxu0
    %2562 = vdwg.mxu0
    %v2563 = vmax.f32 %v2558, 0.0
    %v2564 = vmax.f32 %v2473, %v2563
    %v2565 = vlaneseq
    %v2566 = vshrl.u32 %v2565, 7
    %v2567 = vsub.s32 0, %v2566
    %v2568 = vrot.slane %v2210, %v2567
    %v2569 = vmul.f32 %v2199, %v2568
    %v2570 = vlaneseq
    %v2571 = vshrl.u32 %v2570, 7
    %v2572 = vsub.s32 1, %v2571
    %v2573 = vrot.slane %v2210, %v2572
    %v2574 = vmul.f32 %v2200, %v2573
    %v2575 = vadd.f32 %v2569, %v2574
    %v2576 = vlaneseq
    %v2577 = vshrl.u32 %v2576, 7
    %v2578 = vsub.s32 2, %v2577
    %v2579 = vrot.slane %v2210, %v2578
    %v2580 = vmul.f32 %v2201, %v2579
    %v2581 = vadd.f32 %v2575, %v2580
    %v2582 = vlaneseq
    %v2583 = vshrl.u32 %v2582, 7
    %v2584 = vsub.s32 3, %v2583
    %v2585 = vrot.slane %v2210, %v2584
    %v2586 = vmul.f32 %v2202, %v2585
    %v2587 = vadd.f32 %v2581, %v2586
    %v2588 = vlaneseq
    %v2589 = vshrl.u32 %v2588, 7
    %v2590 = vsub.s32 4, %v2589
    %v2591 = vrot.slane %v2210, %v2590
    %v2592 = vmul.f32 %v2203, %v2591
    %v2593 = vadd.f32 %v2587, %v2592
    %v2594 = vlaneseq
    %v2595 = vshrl.u32 %v2594, 7
    %v2596 = vsub.s32 5, %v2595
    %v2597 = vrot.slane %v2210, %v2596
    %v2598 = vmul.f32 %v2204, %v2597
    %v2599 = vadd.f32 %v2593, %v2598
    %v2600 = vlaneseq
    %v2601 = vshrl.u32 %v2600, 7
    %v2602 = vsub.s32 6, %v2601
    %v2603 = vrot.slane %v2210, %v2602
    %v2604 = vmul.f32 %v2205, %v2603
    %v2605 = vadd.f32 %v2599, %v2604
    %v2606 = vlaneseq
    %v2607 = vshrl.u32 %v2606, 7
    %v2608 = vsub.s32 7, %v2607
    %v2609 = vrot.slane %v2210, %v2608
    %v2610 = vmul.f32 %v2206, %v2609
    %v2611 = vadd.f32 %v2605, %v2610
    %v2612 = vadd.f32 %v2611, %v2284
    %v2613 = vpack.c.bf16 %v2612, %v2612
    %2614 = vmatprep.subr.bf16.mxu0 0
    %2615 = vmatpush1.bf16.msra.mxu0 %v2326
    %2616 = vmatprep.subr.bf16.mxu0 0
    %2617 = vmatpush1.bf16.msra.mxu0 %v2327
    %2618 = vmatprep.subr.bf16.mxu0 0
    %2619 = vmatpush1.bf16.msra.mxu0 %v2328
    %2620 = vmatprep.subr.bf16.mxu0 0
    %2621 = vmatpush1.bf16.msra.mxu0 %v2329
    %2622 = vmatprep.subr.bf16.mxu0 0
    %2623 = vmatpush1.bf16.msra.mxu0 %v2330
    %2624 = vmatprep.subr.bf16.mxu0 0
    %2625 = vmatpush1.bf16.msra.mxu0 %v2331
    %2626 = vmatprep.subr.bf16.mxu0 0
    %2627 = vmatpush1.bf16.msra.mxu0 %v2332
    %2628 = vmatprep.subr.bf16.mxu0 0
    %2629 = vmatpush1.bf16.msra.mxu0 %v2333
    %2630 = vmatprep.subr.bf16.mxu0 0
    %2631 = vmatpush1.bf16.msra.mxu0 0
    %2632 = vmatprep.subr.bf16.mxu0 0
    %2633 = vmatpush1.bf16.msra.mxu0 0
    %2634 = vmatprep.subr.bf16.mxu0 0
    %2635 = vmatpush1.bf16.msra.mxu0 0
    %2636 = vmatprep.subr.bf16.mxu0 0
    %2637 = vmatpush1.bf16.msra.mxu0 0
    %2638 = vmatprep.subr.bf16.mxu0 0
    %2639 = vmatpush1.bf16.msra.mxu0 0
    %2640 = vmatprep.subr.bf16.mxu0 0
    %2641 = vmatpush1.bf16.msra.mxu0 0
    %2642 = vmatprep.subr.bf16.mxu0 0
    %2643 = vmatpush1.bf16.msra.mxu0 0
    %2644 = vmatprep.subr.bf16.mxu0 0
    %2645 = vmatpush1.bf16.msra.mxu0 0
    %2646 = vmatprep.mubr.bf16.mxu0 0
    %2647 = vmatmul.mubr.bf16.gmra.mrb[0].mxu0 %v2613
    %v2648 = vpop.f32.mrb[0].mxu0
    %v2649 = vadd.f32 %v2292, %v2648
    %v2650 = vpop.f32.mrb[0].mxu0
    %v2651 = vpop.f32.mrb[0].mxu0
    %v2652 = vpop.f32.mrb[0].mxu0
    %2653 = vdwg.mxu0
    %v2654 = vmax.f32 %v2649, 0.0
    %v2655 = vmax.f32 %v2564, %v2654
    %v2656 = vlaneseq
    %v2657 = vshrl.u32 %v2656, 7
    %v2658 = vsub.s32 0, %v2657
    %v2659 = vrot.slane %v2211, %v2658
    %v2660 = vmul.f32 %v2199, %v2659
    %v2661 = vlaneseq
    %v2662 = vshrl.u32 %v2661, 7
    %v2663 = vsub.s32 1, %v2662
    %v2664 = vrot.slane %v2211, %v2663
    %v2665 = vmul.f32 %v2200, %v2664
    %v2666 = vadd.f32 %v2660, %v2665
    %v2667 = vlaneseq
    %v2668 = vshrl.u32 %v2667, 7
    %v2669 = vsub.s32 2, %v2668
    %v2670 = vrot.slane %v2211, %v2669
    %v2671 = vmul.f32 %v2201, %v2670
    %v2672 = vadd.f32 %v2666, %v2671
    %v2673 = vlaneseq
    %v2674 = vshrl.u32 %v2673, 7
    %v2675 = vsub.s32 3, %v2674
    %v2676 = vrot.slane %v2211, %v2675
    %v2677 = vmul.f32 %v2202, %v2676
    %v2678 = vadd.f32 %v2672, %v2677
    %v2679 = vlaneseq
    %v2680 = vshrl.u32 %v2679, 7
    %v2681 = vsub.s32 4, %v2680
    %v2682 = vrot.slane %v2211, %v2681
    %v2683 = vmul.f32 %v2203, %v2682
    %v2684 = vadd.f32 %v2678, %v2683
    %v2685 = vlaneseq
    %v2686 = vshrl.u32 %v2685, 7
    %v2687 = vsub.s32 5, %v2686
    %v2688 = vrot.slane %v2211, %v2687
    %v2689 = vmul.f32 %v2204, %v2688
    %v2690 = vadd.f32 %v2684, %v2689
    %v2691 = vlaneseq
    %v2692 = vshrl.u32 %v2691, 7
    %v2693 = vsub.s32 6, %v2692
    %v2694 = vrot.slane %v2211, %v2693
    %v2695 = vmul.f32 %v2205, %v2694
    %v2696 = vadd.f32 %v2690, %v2695
    %v2697 = vlaneseq
    %v2698 = vshrl.u32 %v2697, 7
    %v2699 = vsub.s32 7, %v2698
    %v2700 = vrot.slane %v2211, %v2699
    %v2701 = vmul.f32 %v2206, %v2700
    %v2702 = vadd.f32 %v2696, %v2701
    %v2703 = vadd.f32 %v2702, %v2284
    %v2704 = vpack.c.bf16 %v2703, %v2703
    %2705 = vmatprep.subr.bf16.mxu0 0
    %2706 = vmatpush1.bf16.msra.mxu0 %v2326
    %2707 = vmatprep.subr.bf16.mxu0 0
    %2708 = vmatpush1.bf16.msra.mxu0 %v2327
    %2709 = vmatprep.subr.bf16.mxu0 0
    %2710 = vmatpush1.bf16.msra.mxu0 %v2328
    %2711 = vmatprep.subr.bf16.mxu0 0
    %2712 = vmatpush1.bf16.msra.mxu0 %v2329
    %2713 = vmatprep.subr.bf16.mxu0 0
    %2714 = vmatpush1.bf16.msra.mxu0 %v2330
    %2715 = vmatprep.subr.bf16.mxu0 0
    %2716 = vmatpush1.bf16.msra.mxu0 %v2331
    %2717 = vmatprep.subr.bf16.mxu0 0
    %2718 = vmatpush1.bf16.msra.mxu0 %v2332
    %2719 = vmatprep.subr.bf16.mxu0 0
    %2720 = vmatpush1.bf16.msra.mxu0 %v2333
    %2721 = vmatprep.subr.bf16.mxu0 0
    %2722 = vmatpush1.bf16.msra.mxu0 0
    %2723 = vmatprep.subr.bf16.mxu0 0
    %2724 = vmatpush1.bf16.msra.mxu0 0
    %2725 = vmatprep.subr.bf16.mxu0 0
    %2726 = vmatpush1.bf16.msra.mxu0 0
    %2727 = vmatprep.subr.bf16.mxu0 0
    %2728 = vmatpush1.bf16.msra.mxu0 0
    %2729 = vmatprep.subr.bf16.mxu0 0
    %2730 = vmatpush1.bf16.msra.mxu0 0
    %2731 = vmatprep.subr.bf16.mxu0 0
    %2732 = vmatpush1.bf16.msra.mxu0 0
    %2733 = vmatprep.subr.bf16.mxu0 0
    %2734 = vmatpush1.bf16.msra.mxu0 0
    %2735 = vmatprep.subr.bf16.mxu0 0
    %2736 = vmatpush1.bf16.msra.mxu0 0
    %2737 = vmatprep.mubr.bf16.mxu0 0
    %2738 = vmatmul.mubr.bf16.gmra.mrb[0].mxu0 %v2704
    %v2739 = vpop.f32.mrb[0].mxu0
    %v2740 = vadd.f32 %v2292, %v2739
    %v2741 = vpop.f32.mrb[0].mxu0
    %v2742 = vpop.f32.mrb[0].mxu0
    %v2743 = vpop.f32.mrb[0].mxu0
    %2744 = vdwg.mxu0
    %v2745 = vmax.f32 %v2740, 0.0
    %v2746 = vmax.f32 %v2655, %v2745
    %v2747 = vlaneseq
    %v2748 = vshrl.u32 %v2747, 7
    %v2749 = vsub.s32 0, %v2748
    %v2750 = vrot.slane %v2212, %v2749
    %v2751 = vmul.f32 %v2199, %v2750
    %v2752 = vlaneseq
    %v2753 = vshrl.u32 %v2752, 7
    %v2754 = vsub.s32 1, %v2753
    %v2755 = vrot.slane %v2212, %v2754
    %v2756 = vmul.f32 %v2200, %v2755
    %v2757 = vadd.f32 %v2751, %v2756
    %v2758 = vlaneseq
    %v2759 = vshrl.u32 %v2758, 7
    %v2760 = vsub.s32 2, %v2759
    %v2761 = vrot.slane %v2212, %v2760
    %v2762 = vmul.f32 %v2201, %v2761
    %v2763 = vadd.f32 %v2757, %v2762
    %v2764 = vlaneseq
    %v2765 = vshrl.u32 %v2764, 7
    %v2766 = vsub.s32 3, %v2765
    %v2767 = vrot.slane %v2212, %v2766
    %v2768 = vmul.f32 %v2202, %v2767
    %v2769 = vadd.f32 %v2763, %v2768
    %v2770 = vlaneseq
    %v2771 = vshrl.u32 %v2770, 7
    %v2772 = vsub.s32 4, %v2771
    %v2773 = vrot.slane %v2212, %v2772
    %v2774 = vmul.f32 %v2203, %v2773
    %v2775 = vadd.f32 %v2769, %v2774
    %v2776 = vlaneseq
    %v2777 = vshrl.u32 %v2776, 7
    %v2778 = vsub.s32 5, %v2777
    %v2779 = vrot.slane %v2212, %v2778
    %v2780 = vmul.f32 %v2204, %v2779
    %v2781 = vadd.f32 %v2775, %v2780
    %v2782 = vlaneseq
    %v2783 = vshrl.u32 %v2782, 7
    %v2784 = vsub.s32 6, %v2783
    %v2785 = vrot.slane %v2212, %v2784
    %v2786 = vmul.f32 %v2205, %v2785
    %v2787 = vadd.f32 %v2781, %v2786
    %v2788 = vlaneseq
    %v2789 = vshrl.u32 %v2788, 7
    %v2790 = vsub.s32 7, %v2789
    %v2791 = vrot.slane %v2212, %v2790
    %v2792 = vmul.f32 %v2206, %v2791
    %v2793 = vadd.f32 %v2787, %v2792
    %v2794 = vadd.f32 %v2793, %v2284
    %v2795 = vpack.c.bf16 %v2794, %v2794
    %2796 = vmatprep.subr.bf16.mxu0 0
    %2797 = vmatpush1.bf16.msra.mxu0 %v2326
    %2798 = vmatprep.subr.bf16.mxu0 0
    %2799 = vmatpush1.bf16.msra.mxu0 %v2327
    %2800 = vmatprep.subr.bf16.mxu0 0
    %2801 = vmatpush1.bf16.msra.mxu0 %v2328
    %2802 = vmatprep.subr.bf16.mxu0 0
    %2803 = vmatpush1.bf16.msra.mxu0 %v2329
    %2804 = vmatprep.subr.bf16.mxu0 0
    %2805 = vmatpush1.bf16.msra.mxu0 %v2330
    %2806 = vmatprep.subr.bf16.mxu0 0
    %2807 = vmatpush1.bf16.msra.mxu0 %v2331
    %2808 = vmatprep.subr.bf16.mxu0 0
    %2809 = vmatpush1.bf16.msra.mxu0 %v2332
    %2810 = vmatprep.subr.bf16.mxu0 0
    %2811 = vmatpush1.bf16.msra.mxu0 %v2333
    %2812 = vmatprep.subr.bf16.mxu0 0
    %2813 = vmatpush1.bf16.msra.mxu0 0
    %2814 = vmatprep.subr.bf16.mxu0 0
    %2815 = vmatpush1.bf16.msra.mxu0 0
    %2816 = vmatprep.subr.bf16.mxu0 0
    %2817 = vmatpush1.bf16.msra.mxu0 0
    %2818 = vmatprep.subr.bf16.mxu0 0
    %2819 = vmatpush1.bf16.msra.mxu0 0
    %2820 = vmatprep.subr.bf16.mxu0 0
    %2821 = vmatpush1.bf16.msra.mxu0 0
    %2822 = vmatprep.subr.bf16.mxu0 0
    %2823 = vmatpush1.bf16.msra.mxu0 0
    %2824 = vmatprep.subr.bf16.mxu0 0
    %2825 = vmatpush1.bf16.msra.mxu0 0
    %2826 = vmatprep.subr.bf16.mxu0 0
    %2827 = vmatpush1.bf16.msra.mxu0 0
    %2828 = vmatprep.mubr.bf16.mxu0 0
    %2829 = vmatmul.mubr.bf16.gmra.mrb[0].mxu0 %v2795
    %v2830 = vpop.f32.mrb[0].mxu0
    %v2831 = vadd.f32 %v2292, %v2830
    %v2832 = vpop.f32.mrb[0].mxu0
    %v2833 = vpop.f32.mrb[0].mxu0
    %v2834 = vpop.f32.mrb[0].mxu0
    %2835 = vdwg.mxu0
    %v2836 = vmax.f32 %v2831, 0.0
    %v2837 = vmax.f32 %v2746, %v2836
    %v2838 = vlaneseq
    %v2839 = vshrl.u32 %v2838, 7
    %v2840 = vsub.s32 0, %v2839
    %v2841 = vrot.slane %v2213, %v2840
    %v2842 = vmul.f32 %v2199, %v2841
    %v2843 = vlaneseq
    %v2844 = vshrl.u32 %v2843, 7
    %v2845 = vsub.s32 1, %v2844
    %v2846 = vrot.slane %v2213, %v2845
    %v2847 = vmul.f32 %v2200, %v2846
    %v2848 = vadd.f32 %v2842, %v2847
    %v2849 = vlaneseq
    %v2850 = vshrl.u32 %v2849, 7
    %v2851 = vsub.s32 2, %v2850
    %v2852 = vrot.slane %v2213, %v2851
    %v2853 = vmul.f32 %v2201, %v2852
    %v2854 = vadd.f32 %v2848, %v2853
    %v2855 = vlaneseq
    %v2856 = vshrl.u32 %v2855, 7
    %v2857 = vsub.s32 3, %v2856
    %v2858 = vrot.slane %v2213, %v2857
    %v2859 = vmul.f32 %v2202, %v2858
    %v2860 = vadd.f32 %v2854, %v2859
    %v2861 = vlaneseq
    %v2862 = vshrl.u32 %v2861, 7
    %v2863 = vsub.s32 4, %v2862
    %v2864 = vrot.slane %v2213, %v2863
    %v2865 = vmul.f32 %v2203, %v2864
    %v2866 = vadd.f32 %v2860, %v2865
    %v2867 = vlaneseq
    %v2868 = vshrl.u32 %v2867, 7
    %v2869 = vsub.s32 5, %v2868
    %v2870 = vrot.slane %v2213, %v2869
    %v2871 = vmul.f32 %v2204, %v2870
    %v2872 = vadd.f32 %v2866, %v2871
    %v2873 = vlaneseq
    %v2874 = vshrl.u32 %v2873, 7
    %v2875 = vsub.s32 6, %v2874
    %v2876 = vrot.slane %v2213, %v2875
    %v2877 = vmul.f32 %v2205, %v2876
    %v2878 = vadd.f32 %v2872, %v2877
    %v2879 = vlaneseq
    %v2880 = vshrl.u32 %v2879, 7
    %v2881 = vsub.s32 7, %v2880
    %v2882 = vrot.slane %v2213, %v2881
    %v2883 = vmul.f32 %v2206, %v2882
    %v2884 = vadd.f32 %v2878, %v2883
    %v2885 = vadd.f32 %v2884, %v2284
    %v2886 = vpack.c.bf16 %v2885, %v2885
    %2887 = vmatprep.subr.bf16.mxu0 0
    %2888 = vmatpush1.bf16.msra.mxu0 %v2326
    %2889 = vmatprep.subr.bf16.mxu0 0
    %2890 = vmatpush1.bf16.msra.mxu0 %v2327
    %2891 = vmatprep.subr.bf16.mxu0 0
    %2892 = vmatpush1.bf16.msra.mxu0 %v2328
    %2893 = vmatprep.subr.bf16.mxu0 0
    %2894 = vmatpush1.bf16.msra.mxu0 %v2329
    %2895 = vmatprep.subr.bf16.mxu0 0
    %2896 = vmatpush1.bf16.msra.mxu0 %v2330
    %2897 = vmatprep.subr.bf16.mxu0 0
    %2898 = vmatpush1.bf16.msra.mxu0 %v2331
    %2899 = vmatprep.subr.bf16.mxu0 0
    %2900 = vmatpush1.bf16.msra.mxu0 %v2332
    %2901 = vmatprep.subr.bf16.mxu0 0
    %2902 = vmatpush1.bf16.msra.mxu0 %v2333
    %2903 = vmatprep.subr.bf16.mxu0 0
    %2904 = vmatpush1.bf16.msra.mxu0 0
    %2905 = vmatprep.subr.bf16.mxu0 0
    %2906 = vmatpush1.bf16.msra.mxu0 0
    %2907 = vmatprep.subr.bf16.mxu0 0
    %2908 = vmatpush1.bf16.msra.mxu0 0
    %2909 = vmatprep.subr.bf16.mxu0 0
    %2910 = vmatpush1.bf16.msra.mxu0 0
    %2911 = vmatprep.subr.bf16.mxu0 0
    %2912 = vmatpush1.bf16.msra.mxu0 0
    %2913 = vmatprep.subr.bf16.mxu0 0
    %2914 = vmatpush1.bf16.msra.mxu0 0
    %2915 = vmatprep.subr.bf16.mxu0 0
    %2916 = vmatpush1.bf16.msra.mxu0 0
    %2917 = vmatprep.subr.bf16.mxu0 0
    %2918 = vmatpush1.bf16.msra.mxu0 0
    %2919 = vmatprep.mubr.bf16.mxu0 0
    %2920 = vmatmul.mubr.bf16.gmra.mrb[0].mxu0 %v2886
    %v2921 = vpop.f32.mrb[0].mxu0
    %v2922 = vadd.f32 %v2292, %v2921
    %v2923 = vpop.f32.mrb[0].mxu0
    %v2924 = vpop.f32.mrb[0].mxu0
    %v2925 = vpop.f32.mrb[0].mxu0
    %2926 = vdwg.mxu0
    %v2927 = vmax.f32 %v2922, 0.0
    %v2928 = vmax.f32 %v2837, %v2927
    %v2929 = vlaneseq
    %v2930 = vshrl.u32 %v2929, 7
    %v2931 = vsub.s32 0, %v2930
    %v2932 = vrot.slane %v2214, %v2931
    %v2933 = vmul.f32 %v2199, %v2932
    %v2934 = vlaneseq
    %v2935 = vshrl.u32 %v2934, 7
    %v2936 = vsub.s32 1, %v2935
    %v2937 = vrot.slane %v2214, %v2936
    %v2938 = vmul.f32 %v2200, %v2937
    %v2939 = vadd.f32 %v2933, %v2938
    %v2940 = vlaneseq
    %v2941 = vshrl.u32 %v2940, 7
    %v2942 = vsub.s32 2, %v2941
    %v2943 = vrot.slane %v2214, %v2942
    %v2944 = vmul.f32 %v2201, %v2943
    %v2945 = vadd.f32 %v2939, %v2944
    %v2946 = vlaneseq
    %v2947 = vshrl.u32 %v2946, 7
    %v2948 = vsub.s32 3, %v2947
    %v2949 = vrot.slane %v2214, %v2948
    %v2950 = vmul.f32 %v2202, %v2949
    %v2951 = vadd.f32 %v2945, %v2950
    %v2952 = vlaneseq
    %v2953 = vshrl.u32 %v2952, 7
    %v2954 = vsub.s32 4, %v2953
    %v2955 = vrot.slane %v2214, %v2954
    %v2956 = vmul.f32 %v2203, %v2955
    %v2957 = vadd.f32 %v2951, %v2956
    %v2958 = vlaneseq
    %v2959 = vshrl.u32 %v2958, 7
    %v2960 = vsub.s32 5, %v2959
    %v2961 = vrot.slane %v2214, %v2960
    %v2962 = vmul.f32 %v2204, %v2961
    %v2963 = vadd.f32 %v2957, %v2962
    %v2964 = vlaneseq
    %v2965 = vshrl.u32 %v2964, 7
    %v2966 = vsub.s32 6, %v2965
    %v2967 = vrot.slane %v2214, %v2966
    %v2968 = vmul.f32 %v2205, %v2967
    %v2969 = vadd.f32 %v2963, %v2968
    %v2970 = vlaneseq
    %v2971 = vshrl.u32 %v2970, 7
    %v2972 = vsub.s32 7, %v2971
    %v2973 = vrot.slane %v2214, %v2972
    %v2974 = vmul.f32 %v2206, %v2973
    %v2975 = vadd.f32 %v2969, %v2974
    %v2976 = vadd.f32 %v2975, %v2284
    %v2977 = vpack.c.bf16 %v2976, %v2976
    %2978 = vmatprep.subr.bf16.mxu0 0
    %2979 = vmatpush1.bf16.msra.mxu0 %v2326
    %2980 = vmatprep.subr.bf16.mxu0 0
    %2981 = vmatpush1.bf16.msra.mxu0 %v2327
    %2982 = vmatprep.subr.bf16.mxu0 0
    %2983 = vmatpush1.bf16.msra.mxu0 %v2328
    %2984 = vmatprep.subr.bf16.mxu0 0
    %2985 = vmatpush1.bf16.msra.mxu0 %v2329
    %2986 = vmatprep.subr.bf16.mxu0 0
    %2987 = vmatpush1.bf16.msra.mxu0 %v2330
    %2988 = vmatprep.subr.bf16.mxu0 0
    %2989 = vmatpush1.bf16.msra.mxu0 %v2331
    %2990 = vmatprep.subr.bf16.mxu0 0
    %2991 = vmatpush1.bf16.msra.mxu0 %v2332
    %2992 = vmatprep.subr.bf16.mxu0 0
    %2993 = vmatpush1.bf16.msra.mxu0 %v2333
    %2994 = vmatprep.subr.bf16.mxu0 0
    %2995 = vmatpush1.bf16.msra.mxu0 0
    %2996 = vmatprep.subr.bf16.mxu0 0
    %2997 = vmatpush1.bf16.msra.mxu0 0
    %2998 = vmatprep.subr.bf16.mxu0 0
    %2999 = vmatpush1.bf16.msra.mxu0 0
    %3000 = vmatprep.subr.bf16.mxu0 0
    %3001 = vmatpush1.bf16.msra.mxu0 0
    %3002 = vmatprep.subr.bf16.mxu0 0
    %3003 = vmatpush1.bf16.msra.mxu0 0
    %3004 = vmatprep.subr.bf16.mxu0 0
    %3005 = vmatpush1.bf16.msra.mxu0 0
    %3006 = vmatprep.subr.bf16.mxu0 0
    %3007 = vmatpush1.bf16.msra.mxu0 0
    %3008 = vmatprep.subr.bf16.mxu0 0
    %3009 = vmatpush1.bf16.msra.mxu0 0
    %3010 = vmatprep.mubr.bf16.mxu0 0
    %3011 = vmatmul.mubr.bf16.gmra.mrb[0].mxu0 %v2977
    %v3012 = vpop.f32.mrb[0].mxu0
    %v3013 = vadd.f32 %v2292, %v3012
    %v3014 = vpop.f32.mrb[0].mxu0
    %v3015 = vpop.f32.mrb[0].mxu0
    %v3016 = vpop.f32.mrb[0].mxu0
    %3017 = vdwg.mxu0
    %v3018 = vmax.f32 %v3013, 0.0
    %v3019 = vmax.f32 %v2928, %v3018
    %v3020 = vpack.c.bf16 %v3019, %v3019
    %v3021 = vld [vmem:[#allocation10] sm:$0xf]
    %v3022 = vld [vmem:[#allocation10 + $0x4] sm:$0xf]
    %v3023 = vld [vmem:[#allocation10 + $0x8] sm:$0xf]
    %v3024 = vld [vmem:[#allocation10 + $0xc] sm:$0xf]
    %v3025 = vld [vmem:[#allocation10 + $0x10] sm:$0xf]
    %v3026 = vld [vmem:[#allocation10 + $0x14] sm:$0xf]
    %v3027 = vld [vmem:[#allocation10 + $0x18] sm:$0xf]
    %v3028 = vld [vmem:[#allocation10 + $0x1c] sm:$0xf]
    %v3029 = vld [vmem:[#allocation10 + $0x20] sm:$0xf]
    %v3030 = vld [vmem:[#allocation10 + $0x24] sm:$0xf]
    %v3031 = vld [vmem:[#allocation10 + $0x28] sm:$0xf]
    %v3032 = vld [vmem:[#allocation10 + $0x2c] sm:$0xf]
    %v3033 = vld [vmem:[#allocation10 + $0x30] sm:$0xf]
    %v3034 = vld [vmem:[#allocation10 + $0x34] sm:$0xf]
    %v3035 = vld [vmem:[#allocation10 + $0x38] sm:$0xf]
    %v3036 = vld [vmem:[#allocation10 + $0x3c] sm:$0xf]
    %v3037 = vld [vmem:[#allocation12] sm:$0x1]
    %v3039 = vlaneseq
    %v3040 = vshrl.u32 %v3039, 7
    %v3041 = vsub.s32 0, %v3040
    %v3042 = vrot.slane %v3037, %v3041
    %v3060 = vunpack.c.l.b16 %v3021
    %v3061 = vunpack.c.l.b16 %v3022
    %v3062 = vunpack.c.l.b16 %v3023
    %v3063 = vunpack.c.l.b16 %v3024
    %v3064 = vunpack.c.l.b16 %v3025
    %v3065 = vunpack.c.l.b16 %v3026
    %v3066 = vunpack.c.l.b16 %v3027
    %v3067 = vunpack.c.l.b16 %v3028
    %v3068 = vunpack.c.l.b16 %v3029
    %v3069 = vunpack.c.l.b16 %v3030
    %v3070 = vunpack.c.l.b16 %v3031
    %v3071 = vunpack.c.l.b16 %v3032
    %v3072 = vunpack.c.l.b16 %v3033
    %v3073 = vunpack.c.l.b16 %v3034
    %v3074 = vunpack.c.l.b16 %v3035
    %v3075 = vunpack.c.l.b16 %v3036
    %v3076 = vpack.c.b16 %v3061, %v3060
    %v3077 = vpack.c.b16 %v3063, %v3062
    %v3078 = vpack.c.b16 %v3065, %v3064
    %v3079 = vpack.c.b16 %v3067, %v3066
    %v3080 = vpack.c.b16 %v3069, %v3068
    %v3081 = vpack.c.b16 %v3071, %v3070
    %v3082 = vpack.c.b16 %v3073, %v3072
    %v3083 = vpack.c.b16 %v3075, %v3074
    %3092 = vmatprep.subr.bf16.mxu0 0
    %3093 = vmatpush1.bf16.msra.mxu0 %v3076
    %3094 = vmatprep.subr.bf16.mxu0 0
    %3095 = vmatpush1.bf16.msra.mxu0 %v3077
    %3096 = vmatprep.subr.bf16.mxu0 0
    %3097 = vmatpush1.bf16.msra.mxu0 %v3078
    %3098 = vmatprep.subr.bf16.mxu0 0
    %3099 = vmatpush1.bf16.msra.mxu0 %v3079
    %3100 = vmatprep.subr.bf16.mxu0 0
    %3101 = vmatpush1.bf16.msra.mxu0 %v3080
    %3102 = vmatprep.subr.bf16.mxu0 0
    %3103 = vmatpush1.bf16.msra.mxu0 %v3081
    %3104 = vmatprep.subr.bf16.mxu0 0
    %3105 = vmatpush1.bf16.msra.mxu0 %v3082
    %3106 = vmatprep.subr.bf16.mxu0 0
    %3107 = vmatpush1.bf16.msra.mxu0 %v3083
    %3108 = vmatprep.subr.bf16.mxu0 0
    %3109 = vmatpush1.bf16.msra.mxu0 0
    %3110 = vmatprep.subr.bf16.mxu0 0
    %3111 = vmatpush1.bf16.msra.mxu0 0
    %3112 = vmatprep.subr.bf16.mxu0 0
    %3113 = vmatpush1.bf16.msra.mxu0 0
    %3114 = vmatprep.subr.bf16.mxu0 0
    %3115 = vmatpush1.bf16.msra.mxu0 0
    %3116 = vmatprep.subr.bf16.mxu0 0
    %3117 = vmatpush1.bf16.msra.mxu0 0
    %3118 = vmatprep.subr.bf16.mxu0 0
    %3119 = vmatpush1.bf16.msra.mxu0 0
    %3120 = vmatprep.subr.bf16.mxu0 0
    %3121 = vmatpush1.bf16.msra.mxu0 0
    %3122 = vmatprep.subr.bf16.mxu0 0
    %3123 = vmatpush1.bf16.msra.mxu0 0
    %3124 = vmatprep.mubr.bf16.mxu0 0
    %3125 = vmatmul.mubr.bf16.gmra.mrb[0].mxu0 %v3020
    %v3126 = vpop.f32.mrb[0].mxu0
    %v3127 = vadd.f32 %v3042, %v3126
    %v3128 = vpop.f32.mrb[0].mxu0
    %v3129 = vpop.f32.mrb[0].mxu0
    %v3130 = vpop.f32.mrb[0].mxu0
    %3131 = vdwg.mxu0
    %3132 = vst [vmem:[%s11] sm:$0xff] %v3127
    // Predicated region
    $region74: #{forward.1} parent=1 // pred_check
      _
    $region75: #{forward.1} parent=1 // pred_check_branch
      %3134 = sbr.rel (0) target = $region77
    $region76: #{forward.1} parent=1 // pred_region
      _
    $region77: #{forward.1} parent=1 // pred_fallthru
      _
    // Predicated region
    $region78: #{forward.1} parent=1 // pred_check
      _
    $region79: #{forward.1} parent=1 // pred_check_branch
      %3136 = sbr.rel (0) target = $region81
    $region80: #{forward.1} parent=1 // pred_region
      _
    $region81: #{forward.1} parent=1 // pred_fallthru
      _
    %3137 = vsyncpa [#allocation3], 1
    %3138 = vsyncpa [#allocation5], 1
    %3139 = vsyncpa [#allocation8], 1
    %3140 = vsyncpa [#allocation11], 1

</llo_original>
